<compile_context>
chip_gen: v7x
topology: tpu7x:2x2x1
jax: 0.10.0
libtpu: 0.0.40
codegen_flags: <defaults>
</compile_context>

<pallas_src>
import functools
import math

import jax
import jax.numpy as jnp
from jax import lax
from jax.experimental import pallas as pl
from jax.experimental.pallas import tpu as pltpu

# ----------------------------- configuration (small synthetic sizes) -------------
EMBED_DIM = 32
N_HEADS = 4
HEAD_DIM = EMBED_DIM // N_HEADS
D_FFN = 64
N_LEVELS = 2
N_POINTS = 2
TOPK_SA = 16
SPATIAL_SHAPES_LIST = [(8, 8), (4, 4)]       # -> Nq = Nv = 80
LN_EPS = 1e-5

_F32 = jnp.float32
_BF = jnp.bfloat16


def _layer_norm(y, g, b):
    """Row-wise LayerNorm in f32 (stats and elementwise stay f32 — v5e-safe)."""
    mu = jnp.mean(y, axis=-1, keepdims=True)
    var = jnp.mean((y - mu) ** 2, axis=-1, keepdims=True)
    return (y - mu) * lax.rsqrt(var + LN_EPS) * g + b


# =================================================================================
# Kernel 1: fused selected-token MHA + residual + pre_norm (single grid step).
#
# Per-head attention without per-head slicing:
#   expand : (B*nH*K, B*K)  0/1   replicates each query row once per head
#   hmask  : (B*nH*K, D)    0/1   keeps only that head's channels
#   amask  : (B*nH*K, B*K)  additive mask (-1e9 across batches)
#   fold   : (B*K, B*nH*K)  0/1   sums the head-masked outputs back to (B*K, D)
# =================================================================================
def _mha_prenorm_kernel(tgt_ref, pos_ref, expand_ref, fold_ref, hmask_ref, amask_ref,
                        wq_ref, wk_ref, wv_ref, bq_ref, bk_ref, bv_ref,
                        wo_ref, bo_ref, g_ref, be_ref, o_ref, *, scale):
    x = tgt_ref[...]                                # (B*K, D) f32
    qk_in = x + pos_ref[...]
    qk_b = qk_in.astype(_BF)
    x_b = x.astype(_BF)

    q = jnp.dot(qk_b, wq_ref[...], preferred_element_type=_F32) + bq_ref[...]
    k = jnp.dot(qk_b, wk_ref[...], preferred_element_type=_F32) + bk_ref[...]
    v = jnp.dot(x_b, wv_ref[...], preferred_element_type=_F32) + bv_ref[...]

    # replicate query rows per (batch, head) and mask to that head's channels
    qh = jnp.dot(expand_ref[...], q.astype(_BF), preferred_element_type=_F32)
    qh = qh * hmask_ref[...]                         # (B*nH*K, D)

    # all-head scores in one NT matmul; cross-batch keys masked additively
    s = lax.dot_general(qh.astype(_BF), k.astype(_BF),
                        dimension_numbers=(((1,), (1,)), ((), ())),
                        preferred_element_type=_F32)          # (B*nH*K, B*K)
    s = s * scale + amask_ref[...]
    s = s - jnp.max(s, axis=-1, keepdims=True)
    p = jnp.exp(s)
    p = p * pl.reciprocal(jnp.sum(p, axis=-1, keepdims=True), approx=True)

    o = jnp.dot(p.astype(_BF), v.astype(_BF), preferred_element_type=_F32)
    o = o * hmask_ref[...]
    attn = jnp.dot(fold_ref[...], o.astype(_BF), preferred_element_type=_F32)   # (B*K, D)

    out = jnp.dot(attn.astype(_BF), wo_ref[...], preferred_element_type=_F32) + bo_ref[...]
    y = x + out                                      # residual (pre_dropout = id)
    o_ref[...] = _layer_norm(y, g_ref[...], be_ref[...]).astype(o_ref.dtype)


def mha_prenorm(select_tgt, select_pos, p, consts):
    B, K, D = select_tgt.shape
    BK = B * K
    BHK = B * N_HEADS * K
    tgt = select_tgt.reshape(BK, D)
    pos = select_pos.reshape(BK, D)

    def full(shape):
        return pl.BlockSpec(shape, lambda i: (0,) * len(shape))

    kern = functools.partial(_mha_prenorm_kernel, scale=1.0 / math.sqrt(HEAD_DIM))
    out = pl.pallas_call(
        kern,
        out_shape=jax.ShapeDtypeStruct((BK, D), _F32),
        grid=(1,),
        in_specs=[full((BK, D)), full((BK, D)),
                  full((BHK, BK)), full((BK, BHK)), full((BHK, D)), full((BHK, BK)),
                  full((D, D)), full((D, D)), full((D, D)),
                  full((1, D)), full((1, D)), full((1, D)),
                  full((D, D)), full((1, D)), full((1, D)), full((1, D))],
        out_specs=full((BK, D)),
        compiler_params=pltpu.CompilerParams(dimension_semantics=("arbitrary",)),
    )(tgt, pos, consts["expand"], consts["fold"], consts["hmask"], consts["amask"],
      p["pre_wq_t"], p["pre_wk_t"], p["pre_wv_t"],
      p["pre_bq"], p["pre_bk"], p["pre_bv"],
      p["pre_wo_t"], p["pre_out_bias"], p["pre_norm_g"], p["pre_norm_b"])
    return out.reshape(B, K, D)


# =================================================================================
# Kernel 2: one lane-dense fused projection.
# Rows = [value rows ; (query+pos) rows], W_all = [Wv | Woff | Waw | 0-pad] -> 128 cols.
# =================================================================================
def _proj_kernel(x_ref, w_ref, b_ref, o_ref):
    y = jnp.dot(x_ref[...], w_ref[...], preferred_element_type=_F32) + b_ref[...]
    o_ref[...] = y


def _row_tile(n_rows):
    # two parallel row tiles if they stay bf16-sublane aligned, else one block
    if n_rows % 2 == 0 and (n_rows // 2) % 16 == 0:
        return n_rows // 2
    return n_rows


def fused_projection(x_cat_bf16, w_all, b_all):
    R, D = x_cat_bf16.shape
    C = w_all.shape[1]
    tile = _row_tile(R)
    return pl.pallas_call(
        _proj_kernel,
        out_shape=jax.ShapeDtypeStruct((R, C), _F32),
        grid=(R // tile,),
        in_specs=[pl.BlockSpec((tile, D), lambda i: (i, 0)),
                  pl.BlockSpec((D, C), lambda i: (0, 0)),
                  pl.BlockSpec((1, C), lambda i: (0, 0))],
        out_specs=pl.BlockSpec((tile, C), lambda i: (i, 0)),
        compiler_params=pltpu.CompilerParams(dimension_semantics=("parallel",)),
    )(x_cat_bf16, w_all, b_all)


# =================================================================================
# Kernel 3: deformable-sampling matmuls + output_proj + residual+norm1 + FFN + norm2.
# =================================================================================
def _deform_ffn_kernel(q_ref, wb0_ref, vb0_ref, wb1_ref, vb1_ref,
                       wout_ref, bout_ref, g1_ref, be1_ref,
                       w1_ref, bf1_ref, w2_ref, bf2_ref, g2_ref, be2_ref, o_ref):
    qrow = q_ref[...]                                                   # (T, D) f32
    samp = jnp.dot(wb0_ref[...], vb0_ref[...], preferred_element_type=_F32)
    samp = samp + jnp.dot(wb1_ref[...], vb1_ref[...], preferred_element_type=_F32)
    src2 = jnp.dot(samp.astype(_BF), wout_ref[...],
                   preferred_element_type=_F32) + bout_ref[...]
    y = _layer_norm(qrow + src2, g1_ref[...], be1_ref[...])             # norm1
    h = jnp.maximum(jnp.dot(y.astype(_BF), w1_ref[...],
                            preferred_element_type=_F32) + bf1_ref[...], 0.0)
    z = jnp.dot(h.astype(_BF), w2_ref[...],
                preferred_element_type=_F32) + bf2_ref[...]
    o_ref[...] = _layer_norm(y + z, g2_ref[...], be2_ref[...]).astype(o_ref.dtype)


def deform_norm_ffn(query_flat, wbig0, vbig0, wbig1, vbig1, p):
    R, D = query_flat.shape
    C0 = wbig0.shape[1]
    C1 = wbig1.shape[1]
    F = p["w1_t"].shape[1]
    tile = _row_tile(R)
    return pl.pallas_call(
        _deform_ffn_kernel,
        out_shape=jax.ShapeDtypeStruct((R, D), _F32),
        grid=(R // tile,),
        in_specs=[pl.BlockSpec((tile, D), lambda i: (i, 0)),
                  pl.BlockSpec((tile, C0), lambda i: (i, 0)),
                  pl.BlockSpec((C0, D), lambda i: (0, 0)),
                  pl.BlockSpec((tile, C1), lambda i: (i, 0)),
                  pl.BlockSpec((C1, D), lambda i: (0, 0)),
                  pl.BlockSpec((D, D), lambda i: (0, 0)),
                  pl.BlockSpec((1, D), lambda i: (0, 0)),
                  pl.BlockSpec((1, D), lambda i: (0, 0)),
                  pl.BlockSpec((1, D), lambda i: (0, 0)),
                  pl.BlockSpec((D, F), lambda i: (0, 0)),
                  pl.BlockSpec((1, F), lambda i: (0, 0)),
                  pl.BlockSpec((F, D), lambda i: (0, 0)),
                  pl.BlockSpec((1, D), lambda i: (0, 0)),
                  pl.BlockSpec((1, D), lambda i: (0, 0)),
                  pl.BlockSpec((1, D), lambda i: (0, 0))],
        out_specs=pl.BlockSpec((tile, D), lambda i: (i, 0)),
        compiler_params=pltpu.CompilerParams(dimension_semantics=("parallel",)),
    )(query_flat, wbig0, vbig0, wbig1, vbig1,
      p["wout_t"], p["bout"], p["norm1_g"], p["norm1_b"],
      p["w1_t"], p["b1"], p["w2_t"], p["b2"], p["norm2_g"], p["norm2_b"])


# ----------------------------- deformable-attention glue (XLA, elementwise) ------
def _bilinear_weight_matrix(loc, aw_l, H, W):
    """loc: (B,Nq,nH,nP,2) normalized sampling locations; aw_l: (B,Nq,nH,nP).
    Returns combined interpolation+attention weights (B, Nq, nH*H*W) matching
    F.grid_sample(align_corners=False, padding_mode='zeros')."""
    gx = loc[..., 0] * W - 0.5
    gy = loc[..., 1] * H - 0.5
    x0 = jnp.floor(gx)
    y0 = jnp.floor(gy)
    wx1 = gx - x0
    wy1 = gy - y0
    wx0 = 1.0 - wx1
    wy0 = 1.0 - wy1
    xs = jnp.arange(W, dtype=_F32)
    ys = jnp.arange(H, dtype=_F32)

    def corner(xc, yc, w):
        ohx = (xs == xc[..., None]).astype(_F32)             # (B,Nq,nH,nP,W)
        ohy = (ys == yc[..., None]).astype(_F32)             # (B,Nq,nH,nP,H)
        return w[..., None, None] * ohy[..., :, None] * ohx[..., None, :]

    m = (corner(x0, y0, wx0 * wy0) + corner(x0 + 1.0, y0, wx1 * wy0)
         + corner(x0, y0 + 1.0, wx0 * wy1) + corner(x0 + 1.0, y0 + 1.0, wx1 * wy1))
    m = jnp.sum(aw_l[..., None, None] * m, axis=3)           # (B,Nq,nH,H,W)
    B, Nq, nH = m.shape[:3]
    return m.reshape(B, Nq, nH * H * W)


def _block_diag_rows(m):
    """(B, R, C) -> block-diagonal (B*R, B*C) so batches stay decoupled in one matmul."""
    B, R, C = m.shape
    eye = jnp.eye(B, dtype=m.dtype)
    return (eye[:, None, :, None] * m[:, :, None, :]).reshape(B * R, B * C)


def _build_vbig(v_lvl, headmask):
    """(B, HW, D) values + (nH, D) head mask -> (B*nH*HW, D) head-masked value slab."""
    B, HW, D = v_lvl.shape
    nH = headmask.shape[0]
    vb = v_lvl[:, None, :, :] * headmask[None, :, None, :]
    return vb.reshape(B * nH * HW, D)


def ms_deform_attn_build(query, query_pos, value, reference_points, p,
                         key_padding_mask=None):
    """Runs the fused projection kernel and builds the per-level sampling matrices.
    The heavy gather->weighted-sum is done later inside the Pallas K3 kernel as matmuls."""
    B, Nq, D = query.shape
    Nv = value.shape[1]
    nH, nL, nP = N_HEADS, N_LEVELS, N_POINTS

    qwp = query + query_pos
    x_cat = jnp.concatenate([value.reshape(B * Nv, D), qwp.reshape(B * Nq, D)], axis=0)
    proj = fused_projection(x_cat.astype(_BF), p["w_all"], p["b_all"])   # (B*(Nv+Nq), 128)

    v_proj = proj[:B * Nv, :D].reshape(B, Nv, D)
    if key_padding_mask is not None:
        v_proj = jnp.where(key_padding_mask[..., None], 0.0, v_proj)

    qcols = proj[B * Nv:]
    c_off = nH * nL * nP * 2
    offs = qcols[:, D:D + c_off].reshape(B, Nq, nH, nL, nP, 2)
    aw = qcols[:, D + c_off:D + c_off + nH * nL * nP]
    aw = jax.nn.softmax(aw.reshape(B, Nq, nH, nL * nP), axis=-1)
    aw = aw.reshape(B, Nq, nH, nL, nP)

    spatial = jnp.array(SPATIAL_SHAPES_LIST, dtype=_F32)                  # (nL, 2) = (H, W)
    offset_normalizer = jnp.stack([spatial[:, 1], spatial[:, 0]], axis=-1)  # (W, H)
    loc = (reference_points[:, :, None, :, None, :]
           + offs / offset_normalizer[None, None, None, :, None, :])     # (B,Nq,nH,nL,nP,2)

    headmask = (jnp.arange(D)[None, :] // HEAD_DIM
                == jnp.arange(nH)[:, None]).astype(_F32)                  # (nH, D)

    # TODO(synk): the interpolation-weight construction (pure elementwise iota compares)
    # stays in XLA; only the gather-as-matmul + weighting runs inside the Pallas kernel.
    wbigs, vbigs = [], []
    start = 0
    for lvl, (H, W) in enumerate(SPATIAL_SHAPES_LIST):
        HW = H * W
        m = _bilinear_weight_matrix(loc[:, :, :, lvl], aw[:, :, :, lvl], H, W)
        wbigs.append(_block_diag_rows(m).astype(_BF))                    # (B*Nq, B*nH*HW)
        vbigs.append(_build_vbig(v_proj[:, start:start + HW], headmask).astype(_BF))
        start += HW
    return wbigs, vbigs


# ----------------------------- full layer forward ---------------------------------
def salience_encoder_layer_forward(p, consts, query, query_pos, value, reference_points,
                                   spatial_shapes, level_start_index,
                                   query_key_padding_mask=None, score_tgt=None,
                                   foreground_pre_layer=None):
    B, Nq, D = query.shape

    # ---- salience-guided token selection --------------------------------------
    # TODO(synk): top-k + gather/scatter are data-dependent and stay in XLA; a
    # PrefetchScalarGridSpec gather + input_output_aliases write-back would remove them.
    mc_score = jnp.max(score_tgt, axis=-1) * foreground_pre_layer         # (B, Nq)
    _, sel_idx = lax.top_k(mc_score, TOPK_SA)                             # (B, K)
    batch_idx = jnp.arange(B)[:, None]
    select_tgt = query[batch_idx, sel_idx]                                # (B, K, D)
    select_pos = query_pos[batch_idx, sel_idx]                            # (B, K, D)

    # ---- K1: fused MHA + residual + pre_norm ----------------------------------
    select_tgt = mha_prenorm(select_tgt, select_pos, p, consts)

    # ---- scatter refined tokens back ------------------------------------------
    query = query.at[batch_idx, sel_idx].set(select_tgt)

    # ---- K2: fused deformable projections + XLA sampling-matrix build ---------
    wbigs, vbigs = ms_deform_attn_build(query, query_pos, value, reference_points, p,
                                        query_key_padding_mask)

    # ---- K3: sampling matmuls + output_proj + norm1 + FFN + norm2 -------------
    out_flat = deform_norm_ffn(query.reshape(B * Nq, D),
                               wbigs[0], vbigs[0], wbigs[1], vbigs[1], p)
    return out_flat.reshape(B, Nq, D)


# ----------------------------- constants & parameters ------------------------------
def make_mha_constants(B):
    K, nH, D, hd = TOPK_SA, N_HEADS, EMBED_DIM, HEAD_DIM
    rows = B * nH * K
    r = jnp.arange(rows)
    row_b = r // (nH * K)
    row_h = (r // K) % nH
    row_q = r % K
    c = jnp.arange(B * K)
    col_b = c // K
    col_q = c % K
    expand = ((row_b[:, None] == col_b[None, :])
              & (row_q[:, None] == col_q[None, :])).astype(_F32)          # (rows, B*K)
    fold = expand.T                                                       # (B*K, rows)
    hmask = (jnp.arange(D)[None, :] // hd == row_h[:, None]).astype(_F32)  # (rows, D)
    amask = jnp.where(row_b[:, None] == col_b[None, :], 0.0, -1e9).astype(_F32)
    return {"expand": expand.astype(_BF), "fold": fold.astype(_BF),
            "hmask": hmask, "amask": amask}


def make_params(key):
    D, F, nH, nL, nP = EMBED_DIM, D_FFN, N_HEADS, N_LEVELS, N_POINTS

    def xavier(k, shape):
        fan_in, fan_out = shape[0], shape[1]
        bound = math.sqrt(6.0 / (fan_in + fan_out))
        return jax.random.uniform(k, shape, _F32, -bound, bound)

    ks = jax.random.split(key, 16)
    return {
        "pre_wq_t": xavier(ks[0], (D, D)),
        "pre_wk_t": xavier(ks[1], (D, D)),
        "pre_wv_t": xavier(ks[2], (D, D)),
        "pre_in_bias": jnp.zeros((3 * D,), _F32),
        "pre_wo_t": xavier(ks[3], (D, D)),
        "pre_out_bias": jnp.zeros((D,), _F32),
        "pre_norm_g": jnp.ones((D,), _F32),
        "pre_norm_b": jnp.zeros((D,), _F32),
        "woff_t": 0.01 * jax.random.normal(ks[4], (D, nH * nL * nP * 2), _F32),
        "boff": 0.1 * jax.random.normal(ks[5], (nH * nL * nP * 2,), _F32),
        "waw_t": 0.01 * jax.random.normal(ks[6], (D, nH * nL * nP), _F32),
        "baw": jnp.zeros((nH * nL * nP,), _F32),
        "wv_t": xavier(ks[7], (D, D)),
        "bv": jnp.zeros((D,), _F32),
        "wout_t": xavier(ks[8], (D, D)),
        "bout": jnp.zeros((D,), _F32),
        "norm1_g": jnp.ones((D,), _F32),
        "norm1_b": jnp.zeros((D,), _F32),
        "w1_t": xavier(ks[9], (D, F)),
        "b1": jnp.zeros((F,), _F32),
        "w2_t": xavier(ks[10], (F, D)),
        "b2": jnp.zeros((D,), _F32),
        "norm2_g": jnp.ones((D,), _F32),
        "norm2_b": jnp.zeros((D,), _F32),
    }


def prepare_kernel_params(raw):
    """bf16 matmul weights, (1, C) row biases, and the lane-dense combined projection."""
    D = EMBED_DIM
    nH, nL, nP = N_HEADS, N_LEVELS, N_POINTS
    c_off = nH * nL * nP * 2
    c_aw = nH * nL * nP
    used = D + c_off + c_aw
    c_pad = (-used) % 128                                          # pad output to 128 lanes
    w_all = jnp.concatenate([raw["wv_t"], raw["woff_t"], raw["waw_t"],
                             jnp.zeros((D, c_pad), _F32)], axis=1).astype(_BF)
    b_all = jnp.concatenate([raw["bv"], raw["boff"], raw["baw"],
                             jnp.zeros((c_pad,), _F32)]).reshape(1, -1)

    row = lambda v: v.reshape(1, -1)
    return {
        "pre_wq_t": raw["pre_wq_t"].astype(_BF),
        "pre_wk_t": raw["pre_wk_t"].astype(_BF),
        "pre_wv_t": raw["pre_wv_t"].astype(_BF),
        "pre_bq": row(raw["pre_in_bias"][0:D]),
        "pre_bk": row(raw["pre_in_bias"][D:2 * D]),
        "pre_bv": row(raw["pre_in_bias"][2 * D:3 * D]),
        "pre_wo_t": raw["pre_wo_t"].astype(_BF),
        "pre_out_bias": row(raw["pre_out_bias"]),
        "pre_norm_g": row(raw["pre_norm_g"]),
        "pre_norm_b": row(raw["pre_norm_b"]),
        "w_all": w_all,
        "b_all": b_all,
        "wout_t": raw["wout_t"].astype(_BF),
        "bout": row(raw["bout"]),
        "norm1_g": row(raw["norm1_g"]),
        "norm1_b": row(raw["norm1_b"]),
        "w1_t": raw["w1_t"].astype(_BF),
        "b1": row(raw["b1"]),
        "w2_t": raw["w2_t"].astype(_BF),
        "b2": row(raw["b2"]),
        "norm2_g": row(raw["norm2_g"]),
        "norm2_b": row(raw["norm2_b"]),
    }


# ----------------------------- main ------------------------------------------------
if __name__ == "__main__":
    key = jax.random.PRNGKey(0)
    kp, kq, kpos, kv, kref, ksc, kfg = jax.random.split(key, 7)

    B = 2
    D = EMBED_DIM
    Nq = sum(h * w for h, w in SPATIAL_SHAPES_LIST)                       # 80
    num_classes = 3

    raw_params = make_params(kp)
    params = prepare_kernel_params(raw_params)
    consts = make_mha_constants(B)

    query = jax.random.normal(kq, (B, Nq, D), _F32)
    query_pos = jax.random.normal(kpos, (B, Nq, D), _F32)
    value = jax.random.normal(kv, (B, Nq, D), _F32)
    reference_points = jax.random.uniform(kref, (B, Nq, N_LEVELS, 2), _F32)
    spatial_shapes = jnp.array(SPATIAL_SHAPES_LIST, dtype=jnp.int32)      # (nL, 2) = (H, W)
    level_start_index = jnp.array(
        [0, SPATIAL_SHAPES_LIST[0][0] * SPATIAL_SHAPES_LIST[0][1]], jnp.int32)
    score_tgt = jax.random.normal(ksc, (B, Nq, num_classes), _F32)
    foreground_pre_layer = jax.nn.sigmoid(jax.random.normal(kfg, (B, Nq), _F32))

    fwd = jax.jit(salience_encoder_layer_forward)
    out = fwd(params, consts, query, query_pos, value, reference_points,
              spatial_shapes, level_start_index, None, score_tgt, foreground_pre_layer)
    out = jax.block_until_ready(out)

    assert out.shape == (B, Nq, D)
    assert bool(jnp.all(jnp.isfinite(out)))
    print("KERNEL_OK")
</pallas_src>

<mosaic_0001>
module attributes {stable_mosaic.version = 11 : i64} {
  func.func @_mha_prenorm_kernel(%arg0: i32, %arg1: memref<32x32xf32, #tpu.memory_space<vmem>>, %arg2: memref<32x32xf32, #tpu.memory_space<vmem>>, %arg3: memref<128x32xbf16, #tpu.memory_space<vmem>>, %arg4: memref<32x128xbf16, #tpu.memory_space<vmem>>, %arg5: memref<128x32xf32, #tpu.memory_space<vmem>>, %arg6: memref<128x32xf32, #tpu.memory_space<vmem>>, %arg7: memref<32x32xbf16, #tpu.memory_space<vmem>>, %arg8: memref<32x32xbf16, #tpu.memory_space<vmem>>, %arg9: memref<32x32xbf16, #tpu.memory_space<vmem>>, %arg10: memref<1x32xf32, #tpu.memory_space<vmem>>, %arg11: memref<1x32xf32, #tpu.memory_space<vmem>>, %arg12: memref<1x32xf32, #tpu.memory_space<vmem>>, %arg13: memref<32x32xbf16, #tpu.memory_space<vmem>>, %arg14: memref<1x32xf32, #tpu.memory_space<vmem>>, %arg15: memref<1x32xf32, #tpu.memory_space<vmem>>, %arg16: memref<1x32xf32, #tpu.memory_space<vmem>>, %arg17: memref<32x32xf32, #tpu.memory_space<vmem>>) attributes {dimension_semantics = [#tpu.dimension_semantics<arbitrary>], iteration_bounds = array<i64: 1>, scalar_prefetch = 0 : i64, scratch_operands = 0 : i64, tpu.core_type = #tpu.core_type<tc>, window_params = [{pipeline_mode = #tpu.pipeline_mode<synchronous>, transform_indices = @transform_0, window_bounds = array<i64: 32, 32>}, {pipeline_mode = #tpu.pipeline_mode<synchronous>, transform_indices = @transform_1, window_bounds = array<i64: 32, 32>}, {pipeline_mode = #tpu.pipeline_mode<synchronous>, transform_indices = @transform_2, window_bounds = array<i64: 128, 32>}, {pipeline_mode = #tpu.pipeline_mode<synchronous>, transform_indices = @transform_3, window_bounds = array<i64: 32, 128>}, {pipeline_mode = #tpu.pipeline_mode<synchronous>, transform_indices = @transform_4, window_bounds = array<i64: 128, 32>}, {pipeline_mode = #tpu.pipeline_mode<synchronous>, transform_indices = @transform_5, window_bounds = array<i64: 128, 32>}, {pipeline_mode = #tpu.pipeline_mode<synchronous>, transform_indices = @transform_6, window_bounds = array<i64: 32, 32>}, {pipeline_mode = #tpu.pipeline_mode<synchronous>, transform_indices = @transform_7, window_bounds = array<i64: 32, 32>}, {pipeline_mode = #tpu.pipeline_mode<synchronous>, transform_indices = @transform_8, window_bounds = array<i64: 32, 32>}, {pipeline_mode = #tpu.pipeline_mode<synchronous>, transform_indices = @transform_9, window_bounds = array<i64: 1, 32>}, {pipeline_mode = #tpu.pipeline_mode<synchronous>, transform_indices = @transform_10, window_bounds = array<i64: 1, 32>}, {pipeline_mode = #tpu.pipeline_mode<synchronous>, transform_indices = @transform_11, window_bounds = array<i64: 1, 32>}, {pipeline_mode = #tpu.pipeline_mode<synchronous>, transform_indices = @transform_12, window_bounds = array<i64: 32, 32>}, {pipeline_mode = #tpu.pipeline_mode<synchronous>, transform_indices = @transform_13, window_bounds = array<i64: 1, 32>}, {pipeline_mode = #tpu.pipeline_mode<synchronous>, transform_indices = @transform_14, window_bounds = array<i64: 1, 32>}, {pipeline_mode = #tpu.pipeline_mode<synchronous>, transform_indices = @transform_15, window_bounds = array<i64: 1, 32>}, {pipeline_mode = #tpu.pipeline_mode<synchronous>, transform_indices = @transform_16, window_bounds = array<i64: 32, 32>}]} {
    %c0 = arith.constant 0 : index
    %c0_0 = arith.constant 0 : index
    %0 = vector.load %arg1[%c0, %c0_0] : memref<32x32xf32, #tpu.memory_space<vmem>>, vector<32x32xf32>
    %c0_1 = arith.constant 0 : index
    %c0_2 = arith.constant 0 : index
    %1 = vector.load %arg2[%c0_1, %c0_2] : memref<32x32xf32, #tpu.memory_space<vmem>>, vector<32x32xf32>
    %2 = arith.addf %0, %1 : vector<32x32xf32>
    %3 = arith.truncf %2 : vector<32x32xf32> to vector<32x32xbf16>
    %4 = arith.truncf %0 : vector<32x32xf32> to vector<32x32xbf16>
    %c0_3 = arith.constant 0 : index
    %c0_4 = arith.constant 0 : index
    %5 = vector.load %arg7[%c0_3, %c0_4] : memref<32x32xbf16, #tpu.memory_space<vmem>>, vector<32x32xbf16>
    %cst = arith.constant dense<0.000000e+00> : vector<32x32xf32>
    %6 = tpu.matmul %3, %5, %cst {dimension_numbers = #tpu.dot_dimension_numbers<[1], [0], [0], [1], [0, 0, 1, 1], [], []>} : vector<32x32xbf16>, vector<32x32xbf16>, vector<32x32xf32> -> vector<32x32xf32>
    %c0_5 = arith.constant 0 : index
    %c0_6 = arith.constant 0 : index
    %7 = vector.load %arg10[%c0_5, %c0_6] : memref<1x32xf32, #tpu.memory_space<vmem>>, vector<1x32xf32>
    %8 = vector.broadcast %7 : vector<1x32xf32> to vector<32x32xf32>
    %9 = arith.addf %6, %8 : vector<32x32xf32>
    %c0_7 = arith.constant 0 : index
    %c0_8 = arith.constant 0 : index
    %10 = vector.load %arg8[%c0_7, %c0_8] : memref<32x32xbf16, #tpu.memory_space<vmem>>, vector<32x32xbf16>
    %cst_9 = arith.constant dense<0.000000e+00> : vector<32x32xf32>
    %11 = tpu.matmul %3, %10, %cst_9 {dimension_numbers = #tpu.dot_dimension_numbers<[1], [0], [0], [1], [0, 0, 1, 1], [], []>} : vector<32x32xbf16>, vector<32x32xbf16>, vector<32x32xf32> -> vector<32x32xf32>
    %c0_10 = arith.constant 0 : index
    %c0_11 = arith.constant 0 : index
    %12 = vector.load %arg11[%c0_10, %c0_11] : memref<1x32xf32, #tpu.memory_space<vmem>>, vector<1x32xf32>
    %13 = vector.broadcast %12 : vector<1x32xf32> to vector<32x32xf32>
    %14 = arith.addf %11, %13 : vector<32x32xf32>
    %c0_12 = arith.constant 0 : index
    %c0_13 = arith.constant 0 : index
    %15 = vector.load %arg9[%c0_12, %c0_13] : memref<32x32xbf16, #tpu.memory_space<vmem>>, vector<32x32xbf16>
    %cst_14 = arith.constant dense<0.000000e+00> : vector<32x32xf32>
    %16 = tpu.matmul %4, %15, %cst_14 {dimension_numbers = #tpu.dot_dimension_numbers<[1], [0], [0], [1], [0, 0, 1, 1], [], []>} : vector<32x32xbf16>, vector<32x32xbf16>, vector<32x32xf32> -> vector<32x32xf32>
    %c0_15 = arith.constant 0 : index
    %c0_16 = arith.constant 0 : index
    %17 = vector.load %arg12[%c0_15, %c0_16] : memref<1x32xf32, #tpu.memory_space<vmem>>, vector<1x32xf32>
    %18 = vector.broadcast %17 : vector<1x32xf32> to vector<32x32xf32>
    %19 = arith.addf %16, %18 : vector<32x32xf32>
    %c0_17 = arith.constant 0 : index
    %c0_18 = arith.constant 0 : index
    %20 = vector.load %arg3[%c0_17, %c0_18] : memref<128x32xbf16, #tpu.memory_space<vmem>>, vector<128x32xbf16>
    %21 = arith.truncf %9 : vector<32x32xf32> to vector<32x32xbf16>
    %cst_19 = arith.constant dense<0.000000e+00> : vector<128x32xf32>
    %22 = tpu.matmul %20, %21, %cst_19 {dimension_numbers = #tpu.dot_dimension_numbers<[1], [0], [0], [1], [0, 0, 1, 1], [], []>} : vector<128x32xbf16>, vector<32x32xbf16>, vector<128x32xf32> -> vector<128x32xf32>
    %c0_20 = arith.constant 0 : index
    %c0_21 = arith.constant 0 : index
    %23 = vector.load %arg5[%c0_20, %c0_21] : memref<128x32xf32, #tpu.memory_space<vmem>>, vector<128x32xf32>
    %24 = arith.mulf %22, %23 : vector<128x32xf32>
    %25 = arith.truncf %24 : vector<128x32xf32> to vector<128x32xbf16>
    %26 = arith.truncf %14 : vector<32x32xf32> to vector<32x32xbf16>
    %cst_22 = arith.constant dense<0.000000e+00> : vector<128x32xf32>
    %27 = tpu.matmul %25, %26, %cst_22 {dimension_numbers = #tpu.dot_dimension_numbers<[1], [1], [0], [0], [0, 0, 1, 0], [], []>} : vector<128x32xbf16>, vector<32x32xbf16>, vector<128x32xf32> -> vector<128x32xf32>
    %cst_23 = arith.constant 0.353553385 : f32
    %28 = vector.broadcast %cst_23 : f32 to vector<128x32xf32>
    %29 = arith.mulf %27, %28 : vector<128x32xf32>
    %c0_24 = arith.constant 0 : index
    %c0_25 = arith.constant 0 : index
    %30 = vector.load %arg6[%c0_24, %c0_25] : memref<128x32xf32, #tpu.memory_space<vmem>>, vector<128x32xf32>
    %31 = arith.addf %29, %30 : vector<128x32xf32>
    %cst_26 = arith.constant dense<0xFF800000> : vector<128xf32>
    %32 = vector.multi_reduction <maximumf>, %31, %cst_26 [1] : vector<128x32xf32> to vector<128xf32>
    %33 = vector.shape_cast %32 : vector<128xf32> to vector<128x1xf32>
    %34 = vector.broadcast %33 : vector<128x1xf32> to vector<128x32xf32>
    %35 = arith.subf %31, %34 : vector<128x32xf32>
    %36 = math.exp %35 : vector<128x32xf32>
    %cst_27 = arith.constant dense<0.000000e+00> : vector<128xf32>
    %37 = vector.multi_reduction <add>, %36, %cst_27 [1] : vector<128x32xf32> to vector<128xf32>
    %38 = vector.shape_cast %37 : vector<128xf32> to vector<128x1xf32>
    %39 = tpu.reciprocal %38 {approx = true} : vector<128x1xf32> -> vector<128x1xf32>
    %40 = vector.broadcast %39 : vector<128x1xf32> to vector<128x32xf32>
    %41 = arith.mulf %36, %40 : vector<128x32xf32>
    %42 = arith.truncf %41 : vector<128x32xf32> to vector<128x32xbf16>
    %43 = arith.truncf %19 : vector<32x32xf32> to vector<32x32xbf16>
    %cst_28 = arith.constant dense<0.000000e+00> : vector<128x32xf32>
    %44 = tpu.matmul %42, %43, %cst_28 {dimension_numbers = #tpu.dot_dimension_numbers<[1], [0], [0], [1], [0, 0, 1, 1], [], []>} : vector<128x32xbf16>, vector<32x32xbf16>, vector<128x32xf32> -> vector<128x32xf32>
    %c0_29 = arith.constant 0 : index
    %c0_30 = arith.constant 0 : index
    %45 = vector.load %arg5[%c0_29, %c0_30] : memref<128x32xf32, #tpu.memory_space<vmem>>, vector<128x32xf32>
    %46 = arith.mulf %44, %45 : vector<128x32xf32>
    %c0_31 = arith.constant 0 : index
    %c0_32 = arith.constant 0 : index
    %47 = vector.load %arg4[%c0_31, %c0_32] : memref<32x128xbf16, #tpu.memory_space<vmem>>, vector<32x128xbf16>
    %48 = arith.truncf %46 : vector<128x32xf32> to vector<128x32xbf16>
    %cst_33 = arith.constant dense<0.000000e+00> : vector<32x32xf32>
    %49 = tpu.matmul %47, %48, %cst_33 {dimension_numbers = #tpu.dot_dimension_numbers<[1], [0], [0], [1], [0, 0, 1, 1], [], []>} : vector<32x128xbf16>, vector<128x32xbf16>, vector<32x32xf32> -> vector<32x32xf32>
    %50 = arith.truncf %49 : vector<32x32xf32> to vector<32x32xbf16>
    %c0_34 = arith.constant 0 : index
    %c0_35 = arith.constant 0 : index
    %51 = vector.load %arg13[%c0_34, %c0_35] : memref<32x32xbf16, #tpu.memory_space<vmem>>, vector<32x32xbf16>
    %cst_36 = arith.constant dense<0.000000e+00> : vector<32x32xf32>
    %52 = tpu.matmul %50, %51, %cst_36 {dimension_numbers = #tpu.dot_dimension_numbers<[1], [0], [0], [1], [0, 0, 1, 1], [], []>} : vector<32x32xbf16>, vector<32x32xbf16>, vector<32x32xf32> -> vector<32x32xf32>
    %c0_37 = arith.constant 0 : index
    %c0_38 = arith.constant 0 : index
    %53 = vector.load %arg14[%c0_37, %c0_38] : memref<1x32xf32, #tpu.memory_space<vmem>>, vector<1x32xf32>
    %54 = vector.broadcast %53 : vector<1x32xf32> to vector<32x32xf32>
    %55 = arith.addf %52, %54 : vector<32x32xf32>
    %56 = arith.addf %0, %55 : vector<32x32xf32>
    %c0_39 = arith.constant 0 : index
    %c0_40 = arith.constant 0 : index
    %57 = vector.load %arg15[%c0_39, %c0_40] : memref<1x32xf32, #tpu.memory_space<vmem>>, vector<1x32xf32>
    %c0_41 = arith.constant 0 : index
    %c0_42 = arith.constant 0 : index
    %58 = vector.load %arg16[%c0_41, %c0_42] : memref<1x32xf32, #tpu.memory_space<vmem>>, vector<1x32xf32>
    %cst_43 = arith.constant dense<0.000000e+00> : vector<32xf32>
    %59 = vector.multi_reduction <add>, %56, %cst_43 [1] : vector<32x32xf32> to vector<32xf32>
    %60 = vector.shape_cast %59 : vector<32xf32> to vector<32x1xf32>
    %cst_44 = arith.constant 3.200000e+01 : f32
    %61 = vector.broadcast %cst_44 : f32 to vector<32x1xf32>
    %62 = arith.divf %60, %61 : vector<32x1xf32>
    %63 = vector.broadcast %62 : vector<32x1xf32> to vector<32x32xf32>
    %64 = arith.subf %56, %63 : vector<32x32xf32>
    %65 = arith.mulf %64, %64 : vector<32x32xf32>
    %cst_45 = arith.constant dense<0.000000e+00> : vector<32xf32>
    %66 = vector.multi_reduction <add>, %65, %cst_45 [1] : vector<32x32xf32> to vector<32xf32>
    %67 = vector.shape_cast %66 : vector<32xf32> to vector<32x1xf32>
    %cst_46 = arith.constant 3.200000e+01 : f32
    %68 = vector.broadcast %cst_46 : f32 to vector<32x1xf32>
    %69 = arith.divf %67, %68 : vector<32x1xf32>
    %70 = vector.broadcast %62 : vector<32x1xf32> to vector<32x32xf32>
    %71 = arith.subf %56, %70 : vector<32x32xf32>
    %cst_47 = arith.constant 9.99999974E-6 : f32
    %72 = vector.broadcast %cst_47 : f32 to vector<32x1xf32>
    %73 = arith.addf %69, %72 : vector<32x1xf32>
    %74 = math.rsqrt %73 : vector<32x1xf32>
    %75 = vector.broadcast %74 : vector<32x1xf32> to vector<32x32xf32>
    %76 = arith.mulf %71, %75 : vector<32x32xf32>
    %77 = vector.broadcast %57 : vector<1x32xf32> to vector<32x32xf32>
    %78 = arith.mulf %76, %77 : vector<32x32xf32>
    %79 = vector.broadcast %58 : vector<1x32xf32> to vector<32x32xf32>
    %80 = arith.addf %78, %79 : vector<32x32xf32>
    %c0_48 = arith.constant 0 : index
    %c0_49 = arith.constant 0 : index
    %81 = vector.load %arg17[%c0_48, %c0_49] : memref<32x32xf32, #tpu.memory_space<vmem>>, vector<32x32xf32>
    tpu.vector_store %arg17[%c0_48, %c0_49], %80 {strides = array<i32>} : memref<32x32xf32, #tpu.memory_space<vmem>>, vector<32x32xf32>,
    return
  }
  func.func @transform_0(%arg0: i32) -> (i32, i32) {
    %c0_i32 = arith.constant 0 : i32
    %c0_i32_0 = arith.constant 0 : i32
    %c0_i32_1 = arith.constant 0 : i32
    return %c0_i32, %c0_i32_0 : i32, i32
  }
  func.func @transform_1(%arg0: i32) -> (i32, i32) {
    %c0_i32 = arith.constant 0 : i32
    %c0_i32_0 = arith.constant 0 : i32
    %c0_i32_1 = arith.constant 0 : i32
    return %c0_i32, %c0_i32_0 : i32, i32
  }
  func.func @transform_2(%arg0: i32) -> (i32, i32) {
    %c0_i32 = arith.constant 0 : i32
    %c0_i32_0 = arith.constant 0 : i32
    %c0_i32_1 = arith.constant 0 : i32
    return %c0_i32, %c0_i32_0 : i32, i32
  }
  func.func @transform_3(%arg0: i32) -> (i32, i32) {
    %c0_i32 = arith.constant 0 : i32
    %c0_i32_0 = arith.constant 0 : i32
    %c0_i32_1 = arith.constant 0 : i32
    return %c0_i32, %c0_i32_0 : i32, i32
  }
  func.func @transform_4(%arg0: i32) -> (i32, i32) {
    %c0_i32 = arith.constant 0 : i32
    %c0_i32_0 = arith.constant 0 : i32
    %c0_i32_1 = arith.constant 0 : i32
    return %c0_i32, %c0_i32_0 : i32, i32
  }
  func.func @transform_5(%arg0: i32) -> (i32, i32) {
    %c0_i32 = arith.constant 0 : i32
    %c0_i32_0 = arith.constant 0 : i32
    %c0_i32_1 = arith.constant 0 : i32
    return %c0_i32, %c0_i32_0 : i32, i32
  }
  func.func @transform_6(%arg0: i32) -> (i32, i32) {
    %c0_i32 = arith.constant 0 : i32
    %c0_i32_0 = arith.constant 0 : i32
    %c0_i32_1 = arith.constant 0 : i32
    return %c0_i32, %c0_i32_0 : i32, i32
  }
  func.func @transform_7(%arg0: i32) -> (i32, i32) {
    %c0_i32 = arith.constant 0 : i32
    %c0_i32_0 = arith.constant 0 : i32
    %c0_i32_1 = arith.constant 0 : i32
    return %c0_i32, %c0_i32_0 : i32, i32
  }
  func.func @transform_8(%arg0: i32) -> (i32, i32) {
    %c0_i32 = arith.constant 0 : i32
    %c0_i32_0 = arith.constant 0 : i32
    %c0_i32_1 = arith.constant 0 : i32
    return %c0_i32, %c0_i32_0 : i32, i32
  }
  func.func @transform_9(%arg0: i32) -> (i32, i32) {
    %c0_i32 = arith.constant 0 : i32
    %c0_i32_0 = arith.constant 0 : i32
    %c0_i32_1 = arith.constant 0 : i32
    return %c0_i32, %c0_i32_0 : i32, i32
  }
  func.func @transform_10(%arg0: i32) -> (i32, i32) {
    %c0_i32 = arith.constant 0 : i32
    %c0_i32_0 = arith.constant 0 : i32
    %c0_i32_1 = arith.constant 0 : i32
    return %c0_i32, %c0_i32_0 : i32, i32
  }
  func.func @transform_11(%arg0: i32) -> (i32, i32) {
    %c0_i32 = arith.constant 0 : i32
    %c0_i32_0 = arith.constant 0 : i32
    %c0_i32_1 = arith.constant 0 : i32
    return %c0_i32, %c0_i32_0 : i32, i32
  }
  func.func @transform_12(%arg0: i32) -> (i32, i32) {
    %c0_i32 = arith.constant 0 : i32
    %c0_i32_0 = arith.constant 0 : i32
    %c0_i32_1 = arith.constant 0 : i32
    return %c0_i32, %c0_i32_0 : i32, i32
  }
  func.func @transform_13(%arg0: i32) -> (i32, i32) {
    %c0_i32 = arith.constant 0 : i32
    %c0_i32_0 = arith.constant 0 : i32
    %c0_i32_1 = arith.constant 0 : i32
    return %c0_i32, %c0_i32_0 : i32, i32
  }
  func.func @transform_14(%arg0: i32) -> (i32, i32) {
    %c0_i32 = arith.constant 0 : i32
    %c0_i32_0 = arith.constant 0 : i32
    %c0_i32_1 = arith.constant 0 : i32
    return %c0_i32, %c0_i32_0 : i32, i32
  }
  func.func @transform_15(%arg0: i32) -> (i32, i32) {
    %c0_i32 = arith.constant 0 : i32
    %c0_i32_0 = arith.constant 0 : i32
    %c0_i32_1 = arith.constant 0 : i32
    return %c0_i32, %c0_i32_0 : i32, i32
  }
  func.func @transform_16(%arg0: i32) -> (i32, i32) {
    %c0_i32 = arith.constant 0 : i32
    %c0_i32_0 = arith.constant 0 : i32
    %c0_i32_1 = arith.constant 0 : i32
    return %c0_i32, %c0_i32_0 : i32, i32
  }
}

module attributes {stable_mosaic.version = 11 : i64} {
  func.func @_proj_kernel(%arg0: i32, %arg1: memref<160x32xbf16, #tpu.memory_space<vmem>>, %arg2: memref<32x128xbf16, #tpu.memory_space<vmem>>, %arg3: memref<1x128xf32, #tpu.memory_space<vmem>>, %arg4: memref<160x128xf32, #tpu.memory_space<vmem>>) attributes {dimension_semantics = [#tpu.dimension_semantics<parallel>], iteration_bounds = array<i64: 2>, scalar_prefetch = 0 : i64, scratch_operands = 0 : i64, tpu.core_type = #tpu.core_type<tc>, window_params = [{transform_indices = @transform_0, window_bounds = array<i64: 160, 32>}, {pipeline_mode = #tpu.pipeline_mode<synchronous>, transform_indices = @transform_1, window_bounds = array<i64: 32, 128>}, {pipeline_mode = #tpu.pipeline_mode<synchronous>, transform_indices = @transform_2, window_bounds = array<i64: 1, 128>}, {transform_indices = @transform_3, window_bounds = array<i64: 160, 128>}]} {
    %c0 = arith.constant 0 : index
    %c0_0 = arith.constant 0 : index
    %0 = vector.load %arg1[%c0, %c0_0] : memref<160x32xbf16, #tpu.memory_space<vmem>>, vector<160x32xbf16>
    %c0_1 = arith.constant 0 : index
    %c0_2 = arith.constant 0 : index
    %1 = vector.load %arg2[%c0_1, %c0_2] : memref<32x128xbf16, #tpu.memory_space<vmem>>, vector<32x128xbf16>
    %cst = arith.constant dense<0.000000e+00> : vector<160x128xf32>
    %2 = tpu.matmul %0, %1, %cst {dimension_numbers = #tpu.dot_dimension_numbers<[1], [0], [0], [1], [0, 0, 1, 1], [], []>} : vector<160x32xbf16>, vector<32x128xbf16>, vector<160x128xf32> -> vector<160x128xf32>
    %c0_3 = arith.constant 0 : index
    %c0_4 = arith.constant 0 : index
    %3 = vector.load %arg3[%c0_3, %c0_4] : memref<1x128xf32, #tpu.memory_space<vmem>>, vector<1x128xf32>
    %4 = vector.broadcast %3 : vector<1x128xf32> to vector<160x128xf32>
    %5 = arith.addf %2, %4 : vector<160x128xf32>
    %c0_5 = arith.constant 0 : index
    %c0_6 = arith.constant 0 : index
    %6 = vector.load %arg4[%c0_5, %c0_6] : memref<160x128xf32, #tpu.memory_space<vmem>>, vector<160x128xf32>
    tpu.vector_store %arg4[%c0_5, %c0_6], %5 {strides = array<i32>} : memref<160x128xf32, #tpu.memory_space<vmem>>, vector<160x128xf32>,
    return
  }
  func.func @transform_0(%arg0: i32) -> (i32, i32) {
    %c0_i32 = arith.constant 0 : i32
    %c0_i32_0 = arith.constant 0 : i32
    return %arg0, %c0_i32 : i32, i32
  }
  func.func @transform_1(%arg0: i32) -> (i32, i32) {
    %c0_i32 = arith.constant 0 : i32
    %c0_i32_0 = arith.constant 0 : i32
    %c0_i32_1 = arith.constant 0 : i32
    return %c0_i32, %c0_i32_0 : i32, i32
  }
  func.func @transform_2(%arg0: i32) -> (i32, i32) {
    %c0_i32 = arith.constant 0 : i32
    %c0_i32_0 = arith.constant 0 : i32
    %c0_i32_1 = arith.constant 0 : i32
    return %c0_i32, %c0_i32_0 : i32, i32
  }
  func.func @transform_3(%arg0: i32) -> (i32, i32) {
    %c0_i32 = arith.constant 0 : i32
    %c0_i32_0 = arith.constant 0 : i32
    return %arg0, %c0_i32 : i32, i32
  }
}

module attributes {stable_mosaic.version = 11 : i64} {
  func.func @_deform_ffn_kernel(%arg0: i32, %arg1: memref<80x32xf32, #tpu.memory_space<vmem>>, %arg2: memref<80x512xbf16, #tpu.memory_space<vmem>>, %arg3: memref<512x32xbf16, #tpu.memory_space<vmem>>, %arg4: memref<80x128xbf16, #tpu.memory_space<vmem>>, %arg5: memref<128x32xbf16, #tpu.memory_space<vmem>>, %arg6: memref<32x32xbf16, #tpu.memory_space<vmem>>, %arg7: memref<1x32xf32, #tpu.memory_space<vmem>>, %arg8: memref<1x32xf32, #tpu.memory_space<vmem>>, %arg9: memref<1x32xf32, #tpu.memory_space<vmem>>, %arg10: memref<32x64xbf16, #tpu.memory_space<vmem>>, %arg11: memref<1x64xf32, #tpu.memory_space<vmem>>, %arg12: memref<64x32xbf16, #tpu.memory_space<vmem>>, %arg13: memref<1x32xf32, #tpu.memory_space<vmem>>, %arg14: memref<1x32xf32, #tpu.memory_space<vmem>>, %arg15: memref<1x32xf32, #tpu.memory_space<vmem>>, %arg16: memref<80x32xf32, #tpu.memory_space<vmem>>) attributes {dimension_semantics = [#tpu.dimension_semantics<parallel>], iteration_bounds = array<i64: 2>, scalar_prefetch = 0 : i64, scratch_operands = 0 : i64, tpu.core_type = #tpu.core_type<tc>, window_params = [{transform_indices = @transform_0, window_bounds = array<i64: 80, 32>}, {transform_indices = @transform_1, window_bounds = array<i64: 80, 512>}, {pipeline_mode = #tpu.pipeline_mode<synchronous>, transform_indices = @transform_2, window_bounds = array<i64: 512, 32>}, {transform_indices = @transform_3, window_bounds = array<i64: 80, 128>}, {pipeline_mode = #tpu.pipeline_mode<synchronous>, transform_indices = @transform_4, window_bounds = array<i64: 128, 32>}, {pipeline_mode = #tpu.pipeline_mode<synchronous>, transform_indices = @transform_5, window_bounds = array<i64: 32, 32>}, {pipeline_mode = #tpu.pipeline_mode<synchronous>, transform_indices = @transform_6, window_bounds = array<i64: 1, 32>}, {pipeline_mode = #tpu.pipeline_mode<synchronous>, transform_indices = @transform_7, window_bounds = array<i64: 1, 32>}, {pipeline_mode = #tpu.pipeline_mode<synchronous>, transform_indices = @transform_8, window_bounds = array<i64: 1, 32>}, {pipeline_mode = #tpu.pipeline_mode<synchronous>, transform_indices = @transform_9, window_bounds = array<i64: 32, 64>}, {pipeline_mode = #tpu.pipeline_mode<synchronous>, transform_indices = @transform_10, window_bounds = array<i64: 1, 64>}, {pipeline_mode = #tpu.pipeline_mode<synchronous>, transform_indices = @transform_11, window_bounds = array<i64: 64, 32>}, {pipeline_mode = #tpu.pipeline_mode<synchronous>, transform_indices = @transform_12, window_bounds = array<i64: 1, 32>}, {pipeline_mode = #tpu.pipeline_mode<synchronous>, transform_indices = @transform_13, window_bounds = array<i64: 1, 32>}, {pipeline_mode = #tpu.pipeline_mode<synchronous>, transform_indices = @transform_14, window_bounds = array<i64: 1, 32>}, {transform_indices = @transform_15, window_bounds = array<i64: 80, 32>}]} {
    %c0 = arith.constant 0 : index
    %c0_0 = arith.constant 0 : index
    %0 = vector.load %arg1[%c0, %c0_0] : memref<80x32xf32, #tpu.memory_space<vmem>>, vector<80x32xf32>
    %c0_1 = arith.constant 0 : index
    %c0_2 = arith.constant 0 : index
    %1 = vector.load %arg2[%c0_1, %c0_2] : memref<80x512xbf16, #tpu.memory_space<vmem>>, vector<80x512xbf16>
    %c0_3 = arith.constant 0 : index
    %c0_4 = arith.constant 0 : index
    %2 = vector.load %arg3[%c0_3, %c0_4] : memref<512x32xbf16, #tpu.memory_space<vmem>>, vector<512x32xbf16>
    %cst = arith.constant dense<0.000000e+00> : vector<80x32xf32>
    %3 = tpu.matmul %1, %2, %cst {dimension_numbers = #tpu.dot_dimension_numbers<[1], [0], [0], [1], [0, 0, 1, 1], [], []>} : vector<80x512xbf16>, vector<512x32xbf16>, vector<80x32xf32> -> vector<80x32xf32>
    %c0_5 = arith.constant 0 : index
    %c0_6 = arith.constant 0 : index
    %4 = vector.load %arg4[%c0_5, %c0_6] : memref<80x128xbf16, #tpu.memory_space<vmem>>, vector<80x128xbf16>
    %c0_7 = arith.constant 0 : index
    %c0_8 = arith.constant 0 : index
    %5 = vector.load %arg5[%c0_7, %c0_8] : memref<128x32xbf16, #tpu.memory_space<vmem>>, vector<128x32xbf16>
    %cst_9 = arith.constant dense<0.000000e+00> : vector<80x32xf32>
    %6 = tpu.matmul %4, %5, %cst_9 {dimension_numbers = #tpu.dot_dimension_numbers<[1], [0], [0], [1], [0, 0, 1, 1], [], []>} : vector<80x128xbf16>, vector<128x32xbf16>, vector<80x32xf32> -> vector<80x32xf32>
    %7 = arith.addf %3, %6 : vector<80x32xf32>
    %8 = arith.truncf %7 : vector<80x32xf32> to vector<80x32xbf16>
    %c0_10 = arith.constant 0 : index
    %c0_11 = arith.constant 0 : index
    %9 = vector.load %arg6[%c0_10, %c0_11] : memref<32x32xbf16, #tpu.memory_space<vmem>>, vector<32x32xbf16>
    %cst_12 = arith.constant dense<0.000000e+00> : vector<80x32xf32>
    %10 = tpu.matmul %8, %9, %cst_12 {dimension_numbers = #tpu.dot_dimension_numbers<[1], [0], [0], [1], [0, 0, 1, 1], [], []>} : vector<80x32xbf16>, vector<32x32xbf16>, vector<80x32xf32> -> vector<80x32xf32>
    %c0_13 = arith.constant 0 : index
    %c0_14 = arith.constant 0 : index
    %11 = vector.load %arg7[%c0_13, %c0_14] : memref<1x32xf32, #tpu.memory_space<vmem>>, vector<1x32xf32>
    %12 = vector.broadcast %11 : vector<1x32xf32> to vector<80x32xf32>
    %13 = arith.addf %10, %12 : vector<80x32xf32>
    %14 = arith.addf %0, %13 : vector<80x32xf32>
    %c0_15 = arith.constant 0 : index
    %c0_16 = arith.constant 0 : index
    %15 = vector.load %arg8[%c0_15, %c0_16] : memref<1x32xf32, #tpu.memory_space<vmem>>, vector<1x32xf32>
    %c0_17 = arith.constant 0 : index
    %c0_18 = arith.constant 0 : index
    %16 = vector.load %arg9[%c0_17, %c0_18] : memref<1x32xf32, #tpu.memory_space<vmem>>, vector<1x32xf32>
    %cst_19 = arith.constant dense<0.000000e+00> : vector<80xf32>
    %17 = vector.multi_reduction <add>, %14, %cst_19 [1] : vector<80x32xf32> to vector<80xf32>
    %18 = vector.shape_cast %17 : vector<80xf32> to vector<80x1xf32>
    %cst_20 = arith.constant 3.200000e+01 : f32
    %19 = vector.broadcast %cst_20 : f32 to vector<80x1xf32>
    %20 = arith.divf %18, %19 : vector<80x1xf32>
    %21 = vector.broadcast %20 : vector<80x1xf32> to vector<80x32xf32>
    %22 = arith.subf %14, %21 : vector<80x32xf32>
    %23 = arith.mulf %22, %22 : vector<80x32xf32>
    %cst_21 = arith.constant dense<0.000000e+00> : vector<80xf32>
    %24 = vector.multi_reduction <add>, %23, %cst_21 [1] : vector<80x32xf32> to vector<80xf32>
    %25 = vector.shape_cast %24 : vector<80xf32> to vector<80x1xf32>
    %cst_22 = arith.constant 3.200000e+01 : f32
    %26 = vector.broadcast %cst_22 : f32 to vector<80x1xf32>
    %27 = arith.divf %25, %26 : vector<80x1xf32>
    %28 = vector.broadcast %20 : vector<80x1xf32> to vector<80x32xf32>
    %29 = arith.subf %14, %28 : vector<80x32xf32>
    %cst_23 = arith.constant 9.99999974E-6 : f32
    %30 = vector.broadcast %cst_23 : f32 to vector<80x1xf32>
    %31 = arith.addf %27, %30 : vector<80x1xf32>
    %32 = math.rsqrt %31 : vector<80x1xf32>
    %33 = vector.broadcast %32 : vector<80x1xf32> to vector<80x32xf32>
    %34 = arith.mulf %29, %33 : vector<80x32xf32>
    %35 = vector.broadcast %15 : vector<1x32xf32> to vector<80x32xf32>
    %36 = arith.mulf %34, %35 : vector<80x32xf32>
    %37 = vector.broadcast %16 : vector<1x32xf32> to vector<80x32xf32>
    %38 = arith.addf %36, %37 : vector<80x32xf32>
    %39 = arith.truncf %38 : vector<80x32xf32> to vector<80x32xbf16>
    %c0_24 = arith.constant 0 : index
    %c0_25 = arith.constant 0 : index
    %40 = vector.load %arg10[%c0_24, %c0_25] : memref<32x64xbf16, #tpu.memory_space<vmem>>, vector<32x64xbf16>
    %cst_26 = arith.constant dense<0.000000e+00> : vector<80x64xf32>
    %41 = tpu.matmul %39, %40, %cst_26 {dimension_numbers = #tpu.dot_dimension_numbers<[1], [0], [0], [1], [0, 0, 1, 1], [], []>} : vector<80x32xbf16>, vector<32x64xbf16>, vector<80x64xf32> -> vector<80x64xf32>
    %c0_27 = arith.constant 0 : index
    %c0_28 = arith.constant 0 : index
    %42 = vector.load %arg11[%c0_27, %c0_28] : memref<1x64xf32, #tpu.memory_space<vmem>>, vector<1x64xf32>
    %43 = vector.broadcast %42 : vector<1x64xf32> to vector<80x64xf32>
    %44 = arith.addf %41, %43 : vector<80x64xf32>
    %cst_29 = arith.constant 0.000000e+00 : f32
    %45 = vector.broadcast %cst_29 : f32 to vector<80x64xf32>
    %46 = arith.maximumf %44, %45 : vector<80x64xf32>
    %47 = arith.truncf %46 : vector<80x64xf32> to vector<80x64xbf16>
    %c0_30 = arith.constant 0 : index
    %c0_31 = arith.constant 0 : index
    %48 = vector.load %arg12[%c0_30, %c0_31] : memref<64x32xbf16, #tpu.memory_space<vmem>>, vector<64x32xbf16>
    %cst_32 = arith.constant dense<0.000000e+00> : vector<80x32xf32>
    %49 = tpu.matmul %47, %48, %cst_32 {dimension_numbers = #tpu.dot_dimension_numbers<[1], [0], [0], [1], [0, 0, 1, 1], [], []>} : vector<80x64xbf16>, vector<64x32xbf16>, vector<80x32xf32> -> vector<80x32xf32>
    %c0_33 = arith.constant 0 : index
    %c0_34 = arith.constant 0 : index
    %50 = vector.load %arg13[%c0_33, %c0_34] : memref<1x32xf32, #tpu.memory_space<vmem>>, vector<1x32xf32>
    %51 = vector.broadcast %50 : vector<1x32xf32> to vector<80x32xf32>
    %52 = arith.addf %49, %51 : vector<80x32xf32>
    %53 = arith.addf %38, %52 : vector<80x32xf32>
    %c0_35 = arith.constant 0 : index
    %c0_36 = arith.constant 0 : index
    %54 = vector.load %arg14[%c0_35, %c0_36] : memref<1x32xf32, #tpu.memory_space<vmem>>, vector<1x32xf32>
    %c0_37 = arith.constant 0 : index
    %c0_38 = arith.constant 0 : index
    %55 = vector.load %arg15[%c0_37, %c0_38] : memref<1x32xf32, #tpu.memory_space<vmem>>, vector<1x32xf32>
    %cst_39 = arith.constant dense<0.000000e+00> : vector<80xf32>
    %56 = vector.multi_reduction <add>, %53, %cst_39 [1] : vector<80x32xf32> to vector<80xf32>
    %57 = vector.shape_cast %56 : vector<80xf32> to vector<80x1xf32>
    %cst_40 = arith.constant 3.200000e+01 : f32
    %58 = vector.broadcast %cst_40 : f32 to vector<80x1xf32>
    %59 = arith.divf %57, %58 : vector<80x1xf32>
    %60 = vector.broadcast %59 : vector<80x1xf32> to vector<80x32xf32>
    %61 = arith.subf %53, %60 : vector<80x32xf32>
    %62 = arith.mulf %61, %61 : vector<80x32xf32>
    %cst_41 = arith.constant dense<0.000000e+00> : vector<80xf32>
    %63 = vector.multi_reduction <add>, %62, %cst_41 [1] : vector<80x32xf32> to vector<80xf32>
    %64 = vector.shape_cast %63 : vector<80xf32> to vector<80x1xf32>
    %cst_42 = arith.constant 3.200000e+01 : f32
    %65 = vector.broadcast %cst_42 : f32 to vector<80x1xf32>
    %66 = arith.divf %64, %65 : vector<80x1xf32>
    %67 = vector.broadcast %59 : vector<80x1xf32> to vector<80x32xf32>
    %68 = arith.subf %53, %67 : vector<80x32xf32>
    %cst_43 = arith.constant 9.99999974E-6 : f32
    %69 = vector.broadcast %cst_43 : f32 to vector<80x1xf32>
    %70 = arith.addf %66, %69 : vector<80x1xf32>
    %71 = math.rsqrt %70 : vector<80x1xf32>
    %72 = vector.broadcast %71 : vector<80x1xf32> to vector<80x32xf32>
    %73 = arith.mulf %68, %72 : vector<80x32xf32>
    %74 = vector.broadcast %54 : vector<1x32xf32> to vector<80x32xf32>
    %75 = arith.mulf %73, %74 : vector<80x32xf32>
    %76 = vector.broadcast %55 : vector<1x32xf32> to vector<80x32xf32>
    %77 = arith.addf %75, %76 : vector<80x32xf32>
    %c0_44 = arith.constant 0 : index
    %c0_45 = arith.constant 0 : index
    %78 = vector.load %arg16[%c0_44, %c0_45] : memref<80x32xf32, #tpu.memory_space<vmem>>, vector<80x32xf32>
    tpu.vector_store %arg16[%c0_44, %c0_45], %77 {strides = array<i32>} : memref<80x32xf32, #tpu.memory_space<vmem>>, vector<80x32xf32>,
    return
  }
  func.func @transform_0(%arg0: i32) -> (i32, i32) {
    %c0_i32 = arith.constant 0 : i32
    %c0_i32_0 = arith.constant 0 : i32
    return %arg0, %c0_i32 : i32, i32
  }
  func.func @transform_1(%arg0: i32) -> (i32, i32) {
    %c0_i32 = arith.constant 0 : i32
    %c0_i32_0 = arith.constant 0 : i32
    return %arg0, %c0_i32 : i32, i32
  }
  func.func @transform_2(%arg0: i32) -> (i32, i32) {
    %c0_i32 = arith.constant 0 : i32
    %c0_i32_0 = arith.constant 0 : i32
    %c0_i32_1 = arith.constant 0 : i32
    return %c0_i32, %c0_i32_0 : i32, i32
  }
  func.func @transform_3(%arg0: i32) -> (i32, i32) {
    %c0_i32 = arith.constant 0 : i32
    %c0_i32_0 = arith.constant 0 : i32
    return %arg0, %c0_i32 : i32, i32
  }
  func.func @transform_4(%arg0: i32) -> (i32, i32) {
    %c0_i32 = arith.constant 0 : i32
    %c0_i32_0 = arith.constant 0 : i32
    %c0_i32_1 = arith.constant 0 : i32
    return %c0_i32, %c0_i32_0 : i32, i32
  }
  func.func @transform_5(%arg0: i32) -> (i32, i32) {
    %c0_i32 = arith.constant 0 : i32
    %c0_i32_0 = arith.constant 0 : i32
    %c0_i32_1 = arith.constant 0 : i32
    return %c0_i32, %c0_i32_0 : i32, i32
  }
  func.func @transform_6(%arg0: i32) -> (i32, i32) {
    %c0_i32 = arith.constant 0 : i32
    %c0_i32_0 = arith.constant 0 : i32
    %c0_i32_1 = arith.constant 0 : i32
    return %c0_i32, %c0_i32_0 : i32, i32
  }
  func.func @transform_7(%arg0: i32) -> (i32, i32) {
    %c0_i32 = arith.constant 0 : i32
    %c0_i32_0 = arith.constant 0 : i32
    %c0_i32_1 = arith.constant 0 : i32
    return %c0_i32, %c0_i32_0 : i32, i32
  }
  func.func @transform_8(%arg0: i32) -> (i32, i32) {
    %c0_i32 = arith.constant 0 : i32
    %c0_i32_0 = arith.constant 0 : i32
    %c0_i32_1 = arith.constant 0 : i32
    return %c0_i32, %c0_i32_0 : i32, i32
  }
  func.func @transform_9(%arg0: i32) -> (i32, i32) {
    %c0_i32 = arith.constant 0 : i32
    %c0_i32_0 = arith.constant 0 : i32
    %c0_i32_1 = arith.constant 0 : i32
    return %c0_i32, %c0_i32_0 : i32, i32
  }
  func.func @transform_10(%arg0: i32) -> (i32, i32) {
    %c0_i32 = arith.constant 0 : i32
    %c0_i32_0 = arith.constant 0 : i32
    %c0_i32_1 = arith.constant 0 : i32
    return %c0_i32, %c0_i32_0 : i32, i32
  }
  func.func @transform_11(%arg0: i32) -> (i32, i32) {
    %c0_i32 = arith.constant 0 : i32
    %c0_i32_0 = arith.constant 0 : i32
    %c0_i32_1 = arith.constant 0 : i32
    return %c0_i32, %c0_i32_0 : i32, i32
  }
  func.func @transform_12(%arg0: i32) -> (i32, i32) {
    %c0_i32 = arith.constant 0 : i32
    %c0_i32_0 = arith.constant 0 : i32
    %c0_i32_1 = arith.constant 0 : i32
    return %c0_i32, %c0_i32_0 : i32, i32
  }
  func.func @transform_13(%arg0: i32) -> (i32, i32) {
    %c0_i32 = arith.constant 0 : i32
    %c0_i32_0 = arith.constant 0 : i32
    %c0_i32_1 = arith.constant 0 : i32
    return %c0_i32, %c0_i32_0 : i32, i32
  }
  func.func @transform_14(%arg0: i32) -> (i32, i32) {
    %c0_i32 = arith.constant 0 : i32
    %c0_i32_0 = arith.constant 0 : i32
    %c0_i32_1 = arith.constant 0 : i32
    return %c0_i32, %c0_i32_0 : i32, i32
  }
  func.func @transform_15(%arg0: i32) -> (i32, i32) {
    %c0_i32 = arith.constant 0 : i32
    %c0_i32_0 = arith.constant 0 : i32
    return %arg0, %c0_i32 : i32, i32
  }
}

</mosaic_0001>

<llo_original>
// kernel: mul.137
$region0: #{mul.137}
  #allocation0 [shape = 's32[1]{0}', space=sflag, size = 0x4, scoped, tag = 'scoped memory for mul.137']
  %s0 = inlined_call_operand.vmem [shape: f32[2,80], index: 0, kind: input, shape index: {}]
  %s1 = inlined_call_operand.vmem [shape: f32[2,80], index: 1, kind: input, shape index: {}]
  %s2 = inlined_call_operand.vmem [shape: f32[2,80], index: 2, kind: output, shape index: {}]
  %v3 = vld [vmem:[%s0] sm:$0x3]
  %v4 = vld [vmem:[%s1] sm:$0x3]
  %5 = xla_tuple %v3, %v4
  %6 = xla_tuple %5
  %v7 = vmul.f32 %v3, %v4
  %8 = xla_tuple %v7
  %9 = vst [vmem:[%s2] sm:$0x3] %v7

// kernel: salience_encoder_layer_forward.4
$region0: #{salience_encoder_layer_forward.4}
  #allocation0 [shape = 'u32[]', space=smem, size = 0x4, offset = 0x4, fixed_abs, tag = 'smem constant byte address 0x4 - core index']
  #allocation1 [shape = 'u32[144,128]{1,0:T(1,128)}', space=vmem, size = 0x12000, scoped, tag = 'internal scratch']
  %s0 = inlined_call_operand.vmem [shape: bf16[320,32], index: 0, kind: input, shape index: {}]
  %s1 = inlined_call_operand.vmem [shape: bf16[32,128], index: 1, kind: input, shape index: {}]
  %s2 = inlined_call_operand.vmem [shape: f32[1,128], index: 2, kind: input, shape index: {}]
  %s3 = inlined_call_operand.vmem [shape: f32[320,128], index: 3, kind: output, shape index: {}]
  %s4 = sld [smem:[#allocation0]]
  $region45: #{salience_encoder_layer_forward.4} parent=0
    _
  %s6 = ssub.s32 1, %s4
  %s7 = scalar_select 0, %s6, %s4
  loop: start=0, step=1, limit=4
  $region2: #{salience_encoder_layer_forward.4} parent=0 // loop_pre_header
    _
  $region3: #{salience_encoder_layer_forward.4} parent=0 // loop_header
    %s9 = sphi 0, %s13
    %p10 = scmp.ge.s32.totalorder %s9, 4
    %s19 = sphi 0, %s21
    %s22 = sphi 0, %s19
    %s23 = sphi 0, %s22
    %s39 = sphi 0, %s23
    %s43 = sphi 0, %s43
    %s45 = sphi 0, %s43
    %s46 = sphi 0, %s45
    %s60 = sphi 0, %s46
    %s64 = sphi 0, %s64
    %s66 = sphi 0, %s64
    %s67 = sphi 0, %s66
    %s81 = sphi 0, %s67
    %s87 = sphi 0, %s89
    %s90 = sphi 0, %s87
    %s91 = sphi 0, %s90
    %s107 = sphi 0, %s91
  $region4: #{salience_encoder_layer_forward.4} parent=0 // loop_header_branch
    %12 = sbr.rel (%p10) target = $region8
  $region5: #{salience_encoder_layer_forward.4} parent=0 // loop_body
    %s14 = ssub.s32 %s9, 1
    %s15 = ssub.s32 %s9, 2
    %s16 = sadd.s32 %s9, 1
    %s17 = ssub.s32 %s9, %s16
    %p18 = scmp.eq.s32.totalorder %s17, 0
    %s20 = sadd.s32 %s19, 1
    %s21 = scalar_select %p18, %s19, %s20
    %p24 = pneg %p18
    %p25 = scmp.eq.s32.totalorder %s9, 1
    %p26 = por %p24, %p25
    %p27 = scmp.ne.s32.totalorder %s19, %s22
    %p28 = scmp.eq.s32.totalorder %s9, 0
    %p29 = por %p27, %p28
    %p30 = scmp.ne.s32.totalorder %s19, %s22
    %p31 = scmp.eq.s32.totalorder %s14, 1
    %p32 = por %p30, %p31
    %p33 = scmp.ne.s32.totalorder %s22, %s23
    %p34 = scmp.eq.s32.totalorder %s14, 0
    %p35 = por %p33, %p34
    %p36 = scmp.ne.s32.totalorder %s22, %s23
    %p37 = scmp.eq.s32.totalorder %s15, 1
    %p38 = por %p36, %p37
    %p40 = scmp.ne.s32.totalorder %s23, %s39
    %p41 = scmp.eq.s32.totalorder %s15, 0
    %p42 = por %p40, %p41
    %s44 = sadd.s32 %s43, 1
    %p47 = scmp.eq.s32.totalorder %s9, 1
    %p48 = scmp.ne.s32.totalorder %s43, %s45
    %p49 = scmp.eq.s32.totalorder %s9, 0
    %p50 = por %p48, %p49
    %p51 = scmp.ne.s32.totalorder %s43, %s45
    %p52 = scmp.eq.s32.totalorder %s14, 1
    %p53 = por %p51, %p52
    %p54 = scmp.ne.s32.totalorder %s45, %s46
    %p55 = scmp.eq.s32.totalorder %s14, 0
    %p56 = por %p54, %p55
    %p57 = scmp.ne.s32.totalorder %s45, %s46
    %p58 = scmp.eq.s32.totalorder %s15, 1
    %p59 = por %p57, %p58
    %p61 = scmp.ne.s32.totalorder %s46, %s60
    %p62 = scmp.eq.s32.totalorder %s15, 0
    %p63 = por %p61, %p62
    %s65 = sadd.s32 %s64, 1
    %p68 = scmp.eq.s32.totalorder %s9, 1
    %p69 = scmp.ne.s32.totalorder %s64, %s66
    %p70 = scmp.eq.s32.totalorder %s9, 0
    %p71 = por %p69, %p70
    %p72 = scmp.ne.s32.totalorder %s64, %s66
    %p73 = scmp.eq.s32.totalorder %s14, 1
    %p74 = por %p72, %p73
    %p75 = scmp.ne.s32.totalorder %s66, %s67
    %p76 = scmp.eq.s32.totalorder %s14, 0
    %p77 = por %p75, %p76
    %p78 = scmp.ne.s32.totalorder %s66, %s67
    %p79 = scmp.eq.s32.totalorder %s15, 1
    %p80 = por %p78, %p79
    %p82 = scmp.ne.s32.totalorder %s67, %s81
    %p83 = scmp.eq.s32.totalorder %s15, 0
    %p84 = por %p82, %p83
    %s85 = ssub.s32 %s9, %s16
    %p86 = scmp.eq.s32.totalorder %s85, 0
    %s88 = sadd.s32 %s87, 1
    %s89 = scalar_select %p86, %s87, %s88
    %p92 = pneg %p86
    %p93 = scmp.eq.s32.totalorder %s9, 1
    %p94 = por %p92, %p93
    %p95 = scmp.ne.s32.totalorder %s87, %s90
    %p96 = scmp.eq.s32.totalorder %s9, 0
    %p97 = por %p95, %p96
    %p98 = scmp.ne.s32.totalorder %s87, %s90
    %p99 = scmp.eq.s32.totalorder %s14, 1
    %p100 = por %p98, %p99
    %p101 = scmp.ne.s32.totalorder %s90, %s91
    %p102 = scmp.eq.s32.totalorder %s14, 0
    %p103 = por %p101, %p102
    %p104 = scmp.ne.s32.totalorder %s90, %s91
    %p105 = scmp.eq.s32.totalorder %s15, 1
    %p106 = por %p104, %p105
    %p108 = scmp.ne.s32.totalorder %s91, %s107
    %p109 = scmp.eq.s32.totalorder %s15, 0
    %p110 = por %p108, %p109
    %p111 = scmp.le.s32.totalorder 1, %s9
    %p112 = scmp.lt.s32.totalorder %s9, 3
    %p113 = pnand %p111, %p112
    %p114 = pneg %p113
    // Predicated region
    $region9: #{salience_encoder_layer_forward.4} parent=5 // pred_check
      _
    $region10: #{salience_encoder_layer_forward.4} parent=5 // pred_check_branch
      %116 = sbr.rel (%p113) target = $region12
    $region11: #{salience_encoder_layer_forward.4} parent=5 // pred_region
      %s117 = ssub.s32 %s9, 1
      // Predicated region
      $region13: #{salience_encoder_layer_forward.4} parent=11 // pred_check
        %p118 = pneg %p56
      $region14: #{salience_encoder_layer_forward.4} parent=11 // pred_check_branch
        %120 = sbr.rel (%p118) target = $region16
      $region15: #{salience_encoder_layer_forward.4} parent=11 // pred_region
        _
      $region16: #{salience_encoder_layer_forward.4} parent=11 // pred_fallthru
        _
      // Predicated region
      $region17: #{salience_encoder_layer_forward.4} parent=11 // pred_check
        %p121 = pneg %p77
      $region18: #{salience_encoder_layer_forward.4} parent=11 // pred_check_branch
        %123 = sbr.rel (%p121) target = $region20
      $region19: #{salience_encoder_layer_forward.4} parent=11 // pred_region
        _
      $region20: #{salience_encoder_layer_forward.4} parent=11 // pred_fallthru
        _
    $region12: #{salience_encoder_layer_forward.4} parent=5 // pred_fallthru
      _
    %p124 = scmp.lt.s32.totalorder %s9, 2
    // Predicated region
    $region21: #{salience_encoder_layer_forward.4} parent=5 // pred_check
      %p125 = pneg %p124
    $region22: #{salience_encoder_layer_forward.4} parent=5 // pred_check_branch
      %127 = sbr.rel (%p125) target = $region24
    $region23: #{salience_encoder_layer_forward.4} parent=5 // pred_region
      // Predicated region
      $region25: #{salience_encoder_layer_forward.4} parent=23 // pred_check
        %p128 = pneg %p29
      $region26: #{salience_encoder_layer_forward.4} parent=23 // pred_check_branch
        %130 = sbr.rel (%p128) target = $region28
      $region27: #{salience_encoder_layer_forward.4} parent=23 // pred_region
        %s131 = smul.u32 20, %s9
        %p132 = scmp.lt.s32.totalorder %s131, 39
        %s133 = scalar_select %p132, %s131, 39
        %s134 = smul.addr %s133, 4
        %s135 = scalar_lea.vmem %s0, %s134
        %s136 = smul.u32 20, %s9
      $region28: #{salience_encoder_layer_forward.4} parent=23 // pred_fallthru
        _
    $region24: #{salience_encoder_layer_forward.4} parent=5 // pred_fallthru
      _
    %p137 = scmp.le.s32.totalorder 1, %s9
    %p138 = scmp.lt.s32.totalorder %s9, 3
    %p139 = pnand %p137, %p138
    %p140 = pneg %p139
    // Predicated region
    $region29: #{salience_encoder_layer_forward.4} parent=5 // pred_check
      _
    $region30: #{salience_encoder_layer_forward.4} parent=5 // pred_check_branch
      %142 = sbr.rel (%p139) target = $region32
    $region31: #{salience_encoder_layer_forward.4} parent=5 // pred_region
      %s143 = ssub.s32 %s9, 1
      %s144 = smul.u32 20, %s14
      %p145 = scmp.lt.s32.totalorder %s144, 39
      %s146 = scalar_select %p145, %s144, 39
      %s147 = smul.addr %s146, 4
      %s148 = scalar_lea.vmem %s0, %s147
      %p149 = pneg %p35
      %p150 = pneg %p32
      %p151 = pneg %p56
      %p152 = pneg %p53
      %p153 = pneg %p77
      %p154 = pneg %p74
      %p155 = pneg %p103
      %p156 = pneg %p100
      %s157 = smul.u32 20, %s14
      %p158 = scmp.lt.s32.totalorder %s157, 39
      %s159 = scalar_select %p158, %s157, 39
      %s160 = smul.addr %s159, 8
      %s161 = scalar_lea.vmem %s3, %s160
      %s162 = smul.u32 20, %s14
      %p163 = scmp.lt.s32.totalorder %s162, 39
      %s164 = scalar_select %p163, %s162, 39
      %s165 = smul.addr %s164, 4
      %s166 = scalar_lea.vmem %s0, %s165
      %s167 = smul.u32 20, %s14
      %s168 = smul.u32 20, %s14
      %p169 = scmp.lt.s32.totalorder %s168, 39
      %s170 = scalar_select %p169, %s168, 39
      %s171 = smul.addr %s170, 8
      %s172 = scalar_lea.vmem %s3, %s171
      %s173 = smul.u32 20, %s14
      %v175 = vld [vmem:[%s166] sm:$0xf]
      %v176 = vld [vmem:[%s166 + $0x4] sm:$0xf]
      %v177 = vld [vmem:[%s166 + $0x8] sm:$0xf]
      %v178 = vld [vmem:[%s166 + $0xc] sm:$0xf]
      %v179 = vld [vmem:[%s166 + $0x10] sm:$0xf]
      %v180 = vld [vmem:[%s166 + $0x14] sm:$0xf]
      %v181 = vld [vmem:[%s166 + $0x18] sm:$0xf]
      %v182 = vld [vmem:[%s166 + $0x1c] sm:$0xf]
      %v183 = vld [vmem:[%s166 + $0x20] sm:$0xf]
      %v184 = vld [vmem:[%s166 + $0x24] sm:$0xf]
      %v185 = vld [vmem:[%s166 + $0x28] sm:$0xf]
      %v186 = vld [vmem:[%s166 + $0x2c] sm:$0xf]
      %v187 = vld [vmem:[%s166 + $0x30] sm:$0xf]
      %v188 = vld [vmem:[%s166 + $0x34] sm:$0xf]
      %v189 = vld [vmem:[%s166 + $0x38] sm:$0xf]
      %v190 = vld [vmem:[%s166 + $0x3c] sm:$0xf]
      %v191 = vld [vmem:[%s166 + $0x40] sm:$0xf]
      %v192 = vld [vmem:[%s166 + $0x44] sm:$0xf]
      %v193 = vld [vmem:[%s166 + $0x48] sm:$0xf]
      %v194 = vld [vmem:[%s166 + $0x4c] sm:$0xf]
      %v195 = vld [vmem:[%s1] sm:$0xf]
      %v196 = vld [vmem:[%s1 + $0x4] sm:$0xf]
      %v197 = vld [vmem:[%s1 + $0x8] sm:$0xf]
      %v198 = vld [vmem:[%s1 + $0xc] sm:$0xf]
      %v199 = vld [vmem:[%s2] sm:$0x1]
      %v201 = vlaneseq
      %v202 = vshrl.u32 %v201, 7
      %v203 = vsub.s32 0, %v202
      %v204 = vrot.slane %v199, %v203
      %v226 = vunpack.c.l.b16 %v175
      %v227 = vunpack.c.l.b16 %v176
      %v228 = vunpack.c.l.b16 %v177
      %v229 = vunpack.c.l.b16 %v178
      %v230 = vunpack.c.l.b16 %v179
      %v231 = vunpack.c.l.b16 %v180
      %v232 = vunpack.c.l.b16 %v181
      %v233 = vunpack.c.l.b16 %v182
      %v234 = vunpack.c.l.b16 %v183
      %v235 = vunpack.c.l.b16 %v184
      %v236 = vunpack.c.l.b16 %v185
      %v237 = vunpack.c.l.b16 %v186
      %v238 = vunpack.c.l.b16 %v187
      %v239 = vunpack.c.l.b16 %v188
      %v240 = vunpack.c.l.b16 %v189
      %v241 = vunpack.c.l.b16 %v190
      %v242 = vunpack.c.l.b16 %v191
      %v243 = vunpack.c.l.b16 %v192
      %v244 = vunpack.c.l.b16 %v193
      %v245 = vunpack.c.l.b16 %v194
      %v246 = vpack.c.b16 %v227, %v226
      %v247 = vpack.c.b16 %v229, %v228
      %v248 = vpack.c.b16 %v231, %v230
      %v249 = vpack.c.b16 %v233, %v232
      %v250 = vpack.c.b16 %v235, %v234
      %v251 = vpack.c.b16 %v237, %v236
      %v252 = vpack.c.b16 %v239, %v238
      %v253 = vpack.c.b16 %v241, %v240
      %v254 = vpack.c.b16 %v243, %v242
      %v255 = vpack.c.b16 %v245, %v244
      %v260 = vunpack.c.l.b16 %v195
      %v261 = vunpack.c.l.b16 %v196
      %v262 = vunpack.c.l.b16 %v197
      %v263 = vunpack.c.l.b16 %v198
      %v264 = vpack.c.b16 %v261, %v260
      %v265 = vpack.c.b16 %v263, %v262
      %vm268 = vcmask 261120
      %v270 = vsel %vm268, %v246, 0
      %v273 = vsel %vm268, %v247, 0
      %v276 = vsel %vm268, %v248, 0
      %v279 = vsel %vm268, %v249, 0
      %v282 = vsel %vm268, %v250, 0
      %v285 = vsel %vm268, %v251, 0
      %v288 = vsel %vm268, %v252, 0
      %v291 = vsel %vm268, %v253, 0
      %v294 = vsel %vm268, %v254, 0
      %v297 = vsel %vm268, %v255, 0
      %299 = vmatprep.subr.bf16.mxu0 0
      %300 = vmatpush1.bf16.msra.mxu0 %v264
      %301 = vmatprep.subr.bf16.mxu0 0
      %302 = vmatpush1.bf16.msra.mxu0 %v265
      %303 = vmatprep.subr.bf16.mxu0 0
      %304 = vmatpush1.bf16.msra.mxu0 0
      %305 = vmatprep.subr.bf16.mxu0 0
      %306 = vmatpush1.bf16.msra.mxu0 0
      %307 = vmatprep.subr.bf16.mxu0 0
      %308 = vmatpush1.bf16.msra.mxu0 0
      %309 = vmatprep.subr.bf16.mxu0 0
      %310 = vmatpush1.bf16.msra.mxu0 0
      %311 = vmatprep.subr.bf16.mxu0 0
      %312 = vmatpush1.bf16.msra.mxu0 0
      %313 = vmatprep.subr.bf16.mxu0 0
      %314 = vmatpush1.bf16.msra.mxu0 0
      %315 = vmatprep.subr.bf16.mxu0 0
      %316 = vmatpush1.bf16.msra.mxu0 0
      %317 = vmatprep.subr.bf16.mxu0 0
      %318 = vmatpush1.bf16.msra.mxu0 0
      %319 = vmatprep.subr.bf16.mxu0 0
      %320 = vmatpush1.bf16.msra.mxu0 0
      %321 = vmatprep.subr.bf16.mxu0 0
      %322 = vmatpush1.bf16.msra.mxu0 0
      %323 = vmatprep.subr.bf16.mxu0 0
      %324 = vmatpush1.bf16.msra.mxu0 0
      %325 = vmatprep.subr.bf16.mxu0 0
      %326 = vmatpush1.bf16.msra.mxu0 0
      %327 = vmatprep.subr.bf16.mxu0 0
      %328 = vmatpush1.bf16.msra.mxu0 0
      %329 = vmatprep.subr.bf16.mxu0 0
      %330 = vmatpush1.bf16.msra.mxu0 0
      %331 = vmatprep.mubr.bf16.mxu0 0
      %332 = vmatmul.mubr.bf16.gmra.mrb[0].mxu0 %v270
      %v333 = vpop.f32.mrb[0].mxu0
      %v334 = vadd.f32 %v204, %v333
      %v335 = vpop.f32.mrb[0].mxu0
      %v336 = vpop.f32.mrb[0].mxu0
      %v337 = vadd.f32 %v204, %v336
      %v338 = vpop.f32.mrb[0].mxu0
      %339 = vmatprep.mubr.bf16.mxu0 0
      %340 = vmatmul.mubr.bf16.gmra.mrb[0].mxu0 %v273
      %v341 = vpop.f32.mrb[0].mxu0
      %v342 = vadd.f32 %v204, %v341
      %v343 = vpop.f32.mrb[0].mxu0
      %v344 = vpop.f32.mrb[0].mxu0
      %v345 = vadd.f32 %v204, %v344
      %v346 = vpop.f32.mrb[0].mxu0
      %347 = vmatprep.mubr.bf16.mxu0 0
      %348 = vmatmul.mubr.bf16.gmra.mrb[0].mxu0 %v276
      %v349 = vpop.f32.mrb[0].mxu0
      %v350 = vadd.f32 %v204, %v349
      %v351 = vpop.f32.mrb[0].mxu0
      %v352 = vpop.f32.mrb[0].mxu0
      %v353 = vadd.f32 %v204, %v352
      %v354 = vpop.f32.mrb[0].mxu0
      %355 = vmatprep.mubr.bf16.mxu0 0
      %356 = vmatmul.mubr.bf16.gmra.mrb[0].mxu0 %v279
      %v357 = vpop.f32.mrb[0].mxu0
      %v358 = vadd.f32 %v204, %v357
      %v359 = vpop.f32.mrb[0].mxu0
      %v360 = vpop.f32.mrb[0].mxu0
      %v361 = vadd.f32 %v204, %v360
      %v362 = vpop.f32.mrb[0].mxu0
      %363 = vmatprep.mubr.bf16.mxu0 0
      %364 = vmatmul.mubr.bf16.gmra.mrb[0].mxu0 %v282
      %v365 = vpop.f32.mrb[0].mxu0
      %v366 = vadd.f32 %v204, %v365
      %v367 = vpop.f32.mrb[0].mxu0
      %v368 = vpop.f32.mrb[0].mxu0
      %v369 = vadd.f32 %v204, %v368
      %v370 = vpop.f32.mrb[0].mxu0
      %371 = vmatprep.mubr.bf16.mxu0 0
      %372 = vmatmul.mubr.bf16.gmra.mrb[0].mxu0 %v285
      %v373 = vpop.f32.mrb[0].mxu0
      %v374 = vadd.f32 %v204, %v373
      %v375 = vpop.f32.mrb[0].mxu0
      %v376 = vpop.f32.mrb[0].mxu0
      %v377 = vadd.f32 %v204, %v376
      %v378 = vpop.f32.mrb[0].mxu0
      %379 = vmatprep.mubr.bf16.mxu0 0
      %380 = vmatmul.mubr.bf16.gmra.mrb[0].mxu0 %v288
      %v381 = vpop.f32.mrb[0].mxu0
      %v382 = vadd.f32 %v204, %v381
      %v383 = vpop.f32.mrb[0].mxu0
      %v384 = vpop.f32.mrb[0].mxu0
      %v385 = vadd.f32 %v204, %v384
      %v386 = vpop.f32.mrb[0].mxu0
      %387 = vmatprep.mubr.bf16.mxu0 0
      %388 = vmatmul.mubr.bf16.gmra.mrb[0].mxu0 %v291
      %v389 = vpop.f32.mrb[0].mxu0
      %v390 = vadd.f32 %v204, %v389
      %v391 = vpop.f32.mrb[0].mxu0
      %v392 = vpop.f32.mrb[0].mxu0
      %v393 = vadd.f32 %v204, %v392
      %v394 = vpop.f32.mrb[0].mxu0
      %395 = vmatprep.mubr.bf16.mxu0 0
      %396 = vmatmul.mubr.bf16.gmra.mrb[0].mxu0 %v294
      %v397 = vpop.f32.mrb[0].mxu0
      %v398 = vadd.f32 %v204, %v397
      %v399 = vpop.f32.mrb[0].mxu0
      %v400 = vpop.f32.mrb[0].mxu0
      %v401 = vadd.f32 %v204, %v400
      %v402 = vpop.f32.mrb[0].mxu0
      %403 = vmatprep.mubr.bf16.mxu0 0
      %404 = vmatmul.mubr.bf16.gmra.mrb[0].mxu0 %v297
      %v405 = vpop.f32.mrb[0].mxu0
      %v406 = vadd.f32 %v204, %v405
      %v407 = vpop.f32.mrb[0].mxu0
      %v408 = vpop.f32.mrb[0].mxu0
      %v409 = vadd.f32 %v204, %v408
      %v410 = vpop.f32.mrb[0].mxu0
      %411 = vdwg.mxu0
      %412 = vst [vmem:[%s172] sm:$0xff] %v334
      %413 = vst [vmem:[%s172 + $0x8] sm:$0xff] %v337
      %414 = vst [vmem:[%s172 + $0x10] sm:$0xff] %v342
      %415 = vst [vmem:[%s172 + $0x18] sm:$0xff] %v345
      %416 = vst [vmem:[%s172 + $0x20] sm:$0xff] %v350
      %417 = vst [vmem:[%s172 + $0x28] sm:$0xff] %v353
      %418 = vst [vmem:[%s172 + $0x30] sm:$0xff] %v358
      %419 = vst [vmem:[%s172 + $0x38] sm:$0xff] %v361
      %420 = vst [vmem:[%s172 + $0x40] sm:$0xff] %v366
      %421 = vst [vmem:[%s172 + $0x48] sm:$0xff] %v369
      %422 = vst [vmem:[%s172 + $0x50] sm:$0xff] %v374
      %423 = vst [vmem:[%s172 + $0x58] sm:$0xff] %v377
      %424 = vst [vmem:[%s172 + $0x60] sm:$0xff] %v382
      %425 = vst [vmem:[%s172 + $0x68] sm:$0xff] %v385
      %426 = vst [vmem:[%s172 + $0x70] sm:$0xff] %v390
      %427 = vst [vmem:[%s172 + $0x78] sm:$0xff] %v393
      %428 = vst [vmem:[%s172 + $0x80] sm:$0xff] %v398
      %429 = vst [vmem:[%s172 + $0x88] sm:$0xff] %v401
      %430 = vst [vmem:[%s172 + $0x90] sm:$0xff] %v406
      %431 = vst [vmem:[%s172 + $0x98] sm:$0xff] %v409
      %s432 = smul.u32 20, %s14
      %p433 = scmp.lt.s32.totalorder %s432, 39
      %s434 = scalar_select %p433, %s432, 39
      %s435 = smul.addr %s434, 8
      %s436 = scalar_lea.vmem %s3, %s435
      // Predicated region
      $region33: #{salience_encoder_layer_forward.4} parent=31 // pred_check
        %p437 = pneg %p100
      $region34: #{salience_encoder_layer_forward.4} parent=31 // pred_check_branch
        %439 = sbr.rel (%p437) target = $region36
      $region35: #{salience_encoder_layer_forward.4} parent=31 // pred_region
        %s440 = smul.u32 20, %s14
      $region36: #{salience_encoder_layer_forward.4} parent=31 // pred_fallthru
        _
    $region32: #{salience_encoder_layer_forward.4} parent=5 // pred_fallthru
      _
    %p441 = scmp.le.s32.totalorder 2, %s9
    // Predicated region
    $region37: #{salience_encoder_layer_forward.4} parent=5 // pred_check
      %p442 = pneg %p441
    $region38: #{salience_encoder_layer_forward.4} parent=5 // pred_check_branch
      %444 = sbr.rel (%p442) target = $region40
    $region39: #{salience_encoder_layer_forward.4} parent=5 // pred_region
      %s445 = ssub.s32 %s9, 2
      // Predicated region
      $region41: #{salience_encoder_layer_forward.4} parent=39 // pred_check
        %p446 = pneg %p106
      $region42: #{salience_encoder_layer_forward.4} parent=39 // pred_check_branch
        %448 = sbr.rel (%p446) target = $region44
      $region43: #{salience_encoder_layer_forward.4} parent=39 // pred_region
        %s449 = smul.u32 20, %s15
        %p450 = scmp.lt.s32.totalorder %s449, 39
        %s451 = scalar_select %p450, %s449, 39
        %s452 = smul.addr %s451, 8
        %s453 = scalar_lea.vmem %s3, %s452
      $region44: #{salience_encoder_layer_forward.4} parent=39 // pred_fallthru
        _
    $region40: #{salience_encoder_layer_forward.4} parent=5 // pred_fallthru
      _
  $region6: #{salience_encoder_layer_forward.4} parent=0 // loop_footer
    %s13 = sadd.s32 1, %s9
  $region7: #{salience_encoder_layer_forward.4} parent=0 // loop_footer_branch
    %8 = sbr.rel target = $region3
  $region8: #{salience_encoder_layer_forward.4} parent=0 // loop_exit
    _

// kernel: salience_encoder_layer_forward.3
$region0: #{salience_encoder_layer_forward.3}
  #allocation0 [shape = 'u32[]', space=smem, size = 0x4, offset = 0x4, fixed_abs, tag = 'smem constant byte address 0x4 - core index']
  #allocation1 [shape = 'u32[144,128]{1,0:T(1,128)}', space=vmem, size = 0x12000, scoped, tag = 'internal scratch']
  %s0 = inlined_call_operand.vmem [shape: f32[32,32], index: 0, kind: input, shape index: {}]
  %s1 = inlined_call_operand.vmem [shape: f32[32,32], index: 1, kind: input, shape index: {}]
  %s2 = inlined_call_operand.vmem [shape: bf16[128,32], index: 2, kind: input, shape index: {}]
  %s3 = inlined_call_operand.vmem [shape: bf16[32,128], index: 3, kind: input, shape index: {}]
  %s4 = inlined_call_operand.vmem [shape: f32[128,32], index: 4, kind: input, shape index: {}]
  %s5 = inlined_call_operand.vmem [shape: f32[128,32], index: 5, kind: input, shape index: {}]
  %s6 = inlined_call_operand.vmem [shape: bf16[32,32], index: 6, kind: input, shape index: {}]
  %s7 = inlined_call_operand.vmem [shape: bf16[32,32], index: 7, kind: input, shape index: {}]
  %s8 = inlined_call_operand.vmem [shape: bf16[32,32], index: 8, kind: input, shape index: {}]
  %s9 = inlined_call_operand.vmem [shape: f32[1,32], index: 9, kind: input, shape index: {}]
  %s10 = inlined_call_operand.vmem [shape: f32[1,32], index: 10, kind: input, shape index: {}]
  %s11 = inlined_call_operand.vmem [shape: f32[1,32], index: 11, kind: input, shape index: {}]
  %s12 = inlined_call_operand.vmem [shape: bf16[32,32], index: 12, kind: input, shape index: {}]
  %s13 = inlined_call_operand.vmem [shape: f32[1,32], index: 13, kind: input, shape index: {}]
  %s14 = inlined_call_operand.vmem [shape: f32[1,32], index: 14, kind: input, shape index: {}]
  %s15 = inlined_call_operand.vmem [shape: f32[1,32], index: 15, kind: input, shape index: {}]
  %s16 = inlined_call_operand.vmem [shape: f32[32,32], index: 16, kind: output, shape index: {}]
  %s17 = sld [smem:[#allocation0]]
  $region74: #{salience_encoder_layer_forward.3} parent=0
    _
  %s19 = ssub.s32 1, %s17
  %s20 = scalar_select 0, %s19, %s17
  // Predicated region
  $region2: #{salience_encoder_layer_forward.3} parent=0 // pred_check
    _
  $region3: #{salience_encoder_layer_forward.3} parent=0 // pred_check_branch
    %22 = sbr.rel (0) target = $region5
  $region4: #{salience_encoder_layer_forward.3} parent=0 // pred_region
    _
  $region5: #{salience_encoder_layer_forward.3} parent=0 // pred_fallthru
    _
  // Predicated region
  $region6: #{salience_encoder_layer_forward.3} parent=0 // pred_check
    _
  $region7: #{salience_encoder_layer_forward.3} parent=0 // pred_check_branch
    %24 = sbr.rel (0) target = $region9
  $region8: #{salience_encoder_layer_forward.3} parent=0 // pred_region
    _
  $region9: #{salience_encoder_layer_forward.3} parent=0 // pred_fallthru
    _
  // Predicated region
  $region10: #{salience_encoder_layer_forward.3} parent=0 // pred_check
    _
  $region11: #{salience_encoder_layer_forward.3} parent=0 // pred_check_branch
    %26 = sbr.rel (0) target = $region13
  $region12: #{salience_encoder_layer_forward.3} parent=0 // pred_region
    _
  $region13: #{salience_encoder_layer_forward.3} parent=0 // pred_fallthru
    _
  // Predicated region
  $region14: #{salience_encoder_layer_forward.3} parent=0 // pred_check
    _
  $region15: #{salience_encoder_layer_forward.3} parent=0 // pred_check_branch
    %28 = sbr.rel (0) target = $region17
  $region16: #{salience_encoder_layer_forward.3} parent=0 // pred_region
    _
  $region17: #{salience_encoder_layer_forward.3} parent=0 // pred_fallthru
    _
  // Predicated region
  $region18: #{salience_encoder_layer_forward.3} parent=0 // pred_check
    _
  $region19: #{salience_encoder_layer_forward.3} parent=0 // pred_check_branch
    %30 = sbr.rel (0) target = $region21
  $region20: #{salience_encoder_layer_forward.3} parent=0 // pred_region
    _
  $region21: #{salience_encoder_layer_forward.3} parent=0 // pred_fallthru
    _
  // Predicated region
  $region22: #{salience_encoder_layer_forward.3} parent=0 // pred_check
    _
  $region23: #{salience_encoder_layer_forward.3} parent=0 // pred_check_branch
    %32 = sbr.rel (0) target = $region25
  $region24: #{salience_encoder_layer_forward.3} parent=0 // pred_region
    _
  $region25: #{salience_encoder_layer_forward.3} parent=0 // pred_fallthru
    _
  // Predicated region
  $region26: #{salience_encoder_layer_forward.3} parent=0 // pred_check
    _
  $region27: #{salience_encoder_layer_forward.3} parent=0 // pred_check_branch
    %34 = sbr.rel (0) target = $region29
  $region28: #{salience_encoder_layer_forward.3} parent=0 // pred_region
    _
  $region29: #{salience_encoder_layer_forward.3} parent=0 // pred_fallthru
    _
  // Predicated region
  $region30: #{salience_encoder_layer_forward.3} parent=0 // pred_check
    _
  $region31: #{salience_encoder_layer_forward.3} parent=0 // pred_check_branch
    %36 = sbr.rel (0) target = $region33
  $region32: #{salience_encoder_layer_forward.3} parent=0 // pred_region
    _
  $region33: #{salience_encoder_layer_forward.3} parent=0 // pred_fallthru
    _
  // Predicated region
  $region34: #{salience_encoder_layer_forward.3} parent=0 // pred_check
    _
  $region35: #{salience_encoder_layer_forward.3} parent=0 // pred_check_branch
    %38 = sbr.rel (0) target = $region37
  $region36: #{salience_encoder_layer_forward.3} parent=0 // pred_region
    _
  $region37: #{salience_encoder_layer_forward.3} parent=0 // pred_fallthru
    _
  // Predicated region
  $region38: #{salience_encoder_layer_forward.3} parent=0 // pred_check
    _
  $region39: #{salience_encoder_layer_forward.3} parent=0 // pred_check_branch
    %40 = sbr.rel (0) target = $region41
  $region40: #{salience_encoder_layer_forward.3} parent=0 // pred_region
    _
  $region41: #{salience_encoder_layer_forward.3} parent=0 // pred_fallthru
    _
  // Predicated region
  $region42: #{salience_encoder_layer_forward.3} parent=0 // pred_check
    _
  $region43: #{salience_encoder_layer_forward.3} parent=0 // pred_check_branch
    %42 = sbr.rel (0) target = $region45
  $region44: #{salience_encoder_layer_forward.3} parent=0 // pred_region
    _
  $region45: #{salience_encoder_layer_forward.3} parent=0 // pred_fallthru
    _
  // Predicated region
  $region46: #{salience_encoder_layer_forward.3} parent=0 // pred_check
    _
  $region47: #{salience_encoder_layer_forward.3} parent=0 // pred_check_branch
    %44 = sbr.rel (0) target = $region49
  $region48: #{salience_encoder_layer_forward.3} parent=0 // pred_region
    _
  $region49: #{salience_encoder_layer_forward.3} parent=0 // pred_fallthru
    _
  // Predicated region
  $region50: #{salience_encoder_layer_forward.3} parent=0 // pred_check
    _
  $region51: #{salience_encoder_layer_forward.3} parent=0 // pred_check_branch
    %46 = sbr.rel (0) target = $region53
  $region52: #{salience_encoder_layer_forward.3} parent=0 // pred_region
    _
  $region53: #{salience_encoder_layer_forward.3} parent=0 // pred_fallthru
    _
  // Predicated region
  $region54: #{salience_encoder_layer_forward.3} parent=0 // pred_check
    _
  $region55: #{salience_encoder_layer_forward.3} parent=0 // pred_check_branch
    %48 = sbr.rel (0) target = $region57
  $region56: #{salience_encoder_layer_forward.3} parent=0 // pred_region
    _
  $region57: #{salience_encoder_layer_forward.3} parent=0 // pred_fallthru
    _
  // Predicated region
  $region58: #{salience_encoder_layer_forward.3} parent=0 // pred_check
    _
  $region59: #{salience_encoder_layer_forward.3} parent=0 // pred_check_branch
    %50 = sbr.rel (0) target = $region61
  $region60: #{salience_encoder_layer_forward.3} parent=0 // pred_region
    _
  $region61: #{salience_encoder_layer_forward.3} parent=0 // pred_fallthru
    _
  // Predicated region
  $region62: #{salience_encoder_layer_forward.3} parent=0 // pred_check
    _
  $region63: #{salience_encoder_layer_forward.3} parent=0 // pred_check_branch
    %52 = sbr.rel (0) target = $region65
  $region64: #{salience_encoder_layer_forward.3} parent=0 // pred_region
    _
  $region65: #{salience_encoder_layer_forward.3} parent=0 // pred_fallthru
    _
  %v54 = vld [vmem:[%s0] sm:$0xff]
  %v55 = vld [vmem:[%s0 + $0x8] sm:$0xff]
  %v56 = vld [vmem:[%s0 + $0x10] sm:$0xff]
  %v57 = vld [vmem:[%s0 + $0x18] sm:$0xff]
  %v58 = vld [vmem:[%s1] sm:$0xff]
  %v59 = vld [vmem:[%s1 + $0x8] sm:$0xff]
  %v60 = vld [vmem:[%s1 + $0x10] sm:$0xff]
  %v61 = vld [vmem:[%s1 + $0x18] sm:$0xff]
  %v62 = vadd.f32 %v54, %v58
  %v63 = vadd.f32 %v55, %v59
  %v64 = vadd.f32 %v56, %v60
  %v65 = vadd.f32 %v57, %v61
  %v66 = vpack.c.bf16 %v63, %v62
  %v67 = vpack.c.bf16 %v65, %v64
  %v68 = vpack.c.bf16 %v55, %v54
  %v69 = vpack.c.bf16 %v57, %v56
  %v70 = vld [vmem:[%s6] sm:$0xf]
  %v71 = vld [vmem:[%s6 + $0x4] sm:$0xf]
  %v72 = vld [vmem:[%s6 + $0x8] sm:$0xf]
  %v73 = vld [vmem:[%s6 + $0xc] sm:$0xf]
  %v74 = vld [vmem:[%s9] sm:$0x1]
  %v76 = vlaneseq
  %v77 = vshrl.u32 %v76, 7
  %v78 = vsub.s32 0, %v77
  %v79 = vrot.slane %v74, %v78
  %v85 = vunpack.c.l.b16 %v70
  %v86 = vunpack.c.l.b16 %v71
  %v87 = vunpack.c.l.b16 %v72
  %v88 = vunpack.c.l.b16 %v73
  %v89 = vpack.c.b16 %v86, %v85
  %v90 = vpack.c.b16 %v88, %v87
  %vm93 = vcmask 261120
  %v95 = vsel %vm93, %v66, 0
  %v98 = vsel %vm93, %v67, 0
  %100 = vmatprep.subr.bf16.mxu0 0
  %101 = vmatpush1.bf16.msra.mxu0 %v89
  %102 = vmatprep.subr.bf16.mxu0 0
  %103 = vmatpush1.bf16.msra.mxu0 %v90
  %104 = vmatprep.subr.bf16.mxu0 0
  %105 = vmatpush1.bf16.msra.mxu0 0
  %106 = vmatprep.subr.bf16.mxu0 0
  %107 = vmatpush1.bf16.msra.mxu0 0
  %108 = vmatprep.subr.bf16.mxu0 0
  %109 = vmatpush1.bf16.msra.mxu0 0
  %110 = vmatprep.subr.bf16.mxu0 0
  %111 = vmatpush1.bf16.msra.mxu0 0
  %112 = vmatprep.subr.bf16.mxu0 0
  %113 = vmatpush1.bf16.msra.mxu0 0
  %114 = vmatprep.subr.bf16.mxu0 0
  %115 = vmatpush1.bf16.msra.mxu0 0
  %116 = vmatprep.subr.bf16.mxu0 0
  %117 = vmatpush1.bf16.msra.mxu0 0
  %118 = vmatprep.subr.bf16.mxu0 0
  %119 = vmatpush1.bf16.msra.mxu0 0
  %120 = vmatprep.subr.bf16.mxu0 0
  %121 = vmatpush1.bf16.msra.mxu0 0
  %122 = vmatprep.subr.bf16.mxu0 0
  %123 = vmatpush1.bf16.msra.mxu0 0
  %124 = vmatprep.subr.bf16.mxu0 0
  %125 = vmatpush1.bf16.msra.mxu0 0
  %126 = vmatprep.subr.bf16.mxu0 0
  %127 = vmatpush1.bf16.msra.mxu0 0
  %128 = vmatprep.subr.bf16.mxu0 0
  %129 = vmatpush1.bf16.msra.mxu0 0
  %130 = vmatprep.subr.bf16.mxu0 0
  %131 = vmatpush1.bf16.msra.mxu0 0
  %132 = vmatprep.mubr.bf16.mxu0 0
  %133 = vmatmul.mubr.bf16.gmra.mrb[0].mxu0 %v95
  %v134 = vpop.f32.mrb[0].mxu0
  %v135 = vadd.f32 %v79, %v134
  %v136 = vpop.f32.mrb[0].mxu0
  %v137 = vpop.f32.mrb[0].mxu0
  %v138 = vadd.f32 %v79, %v137
  %v139 = vpop.f32.mrb[0].mxu0
  %140 = vmatprep.mubr.bf16.mxu0 0
  %141 = vmatmul.mubr.bf16.gmra.mrb[0].mxu0 %v98
  %v142 = vpop.f32.mrb[0].mxu0
  %v143 = vadd.f32 %v79, %v142
  %v144 = vpop.f32.mrb[0].mxu0
  %v145 = vpop.f32.mrb[0].mxu0
  %v146 = vadd.f32 %v79, %v145
  %v147 = vpop.f32.mrb[0].mxu0
  %148 = vdwg.mxu0
  %v149 = vld [vmem:[%s7] sm:$0xf]
  %v150 = vld [vmem:[%s7 + $0x4] sm:$0xf]
  %v151 = vld [vmem:[%s7 + $0x8] sm:$0xf]
  %v152 = vld [vmem:[%s7 + $0xc] sm:$0xf]
  %v153 = vld [vmem:[%s10] sm:$0x1]
  %v155 = vlaneseq
  %v156 = vshrl.u32 %v155, 7
  %v157 = vsub.s32 0, %v156
  %v158 = vrot.slane %v153, %v157
  %v164 = vunpack.c.l.b16 %v149
  %v165 = vunpack.c.l.b16 %v150
  %v166 = vunpack.c.l.b16 %v151
  %v167 = vunpack.c.l.b16 %v152
  %v168 = vpack.c.b16 %v165, %v164
  %v169 = vpack.c.b16 %v167, %v166
  %172 = vmatprep.subr.bf16.mxu0 0
  %173 = vmatpush1.bf16.msra.mxu0 %v168
  %174 = vmatprep.subr.bf16.mxu0 0
  %175 = vmatpush1.bf16.msra.mxu0 %v169
  %176 = vmatprep.subr.bf16.mxu0 0
  %177 = vmatpush1.bf16.msra.mxu0 0
  %178 = vmatprep.subr.bf16.mxu0 0
  %179 = vmatpush1.bf16.msra.mxu0 0
  %180 = vmatprep.subr.bf16.mxu0 0
  %181 = vmatpush1.bf16.msra.mxu0 0
  %182 = vmatprep.subr.bf16.mxu0 0
  %183 = vmatpush1.bf16.msra.mxu0 0
  %184 = vmatprep.subr.bf16.mxu0 0
  %185 = vmatpush1.bf16.msra.mxu0 0
  %186 = vmatprep.subr.bf16.mxu0 0
  %187 = vmatpush1.bf16.msra.mxu0 0
  %188 = vmatprep.subr.bf16.mxu0 0
  %189 = vmatpush1.bf16.msra.mxu0 0
  %190 = vmatprep.subr.bf16.mxu0 0
  %191 = vmatpush1.bf16.msra.mxu0 0
  %192 = vmatprep.subr.bf16.mxu0 0
  %193 = vmatpush1.bf16.msra.mxu0 0
  %194 = vmatprep.subr.bf16.mxu0 0
  %195 = vmatpush1.bf16.msra.mxu0 0
  %196 = vmatprep.subr.bf16.mxu0 0
  %197 = vmatpush1.bf16.msra.mxu0 0
  %198 = vmatprep.subr.bf16.mxu0 0
  %199 = vmatpush1.bf16.msra.mxu0 0
  %200 = vmatprep.subr.bf16.mxu0 0
  %201 = vmatpush1.bf16.msra.mxu0 0
  %202 = vmatprep.subr.bf16.mxu0 0
  %203 = vmatpush1.bf16.msra.mxu0 0
  %204 = vmatprep.mubr.bf16.mxu0 0
  %205 = vmatmul.mubr.bf16.gmra.mrb[0].mxu0 %v95
  %v206 = vpop.f32.mrb[0].mxu0
  %v207 = vadd.f32 %v158, %v206
  %v208 = vpop.f32.mrb[0].mxu0
  %v209 = vpop.f32.mrb[0].mxu0
  %v210 = vadd.f32 %v158, %v209
  %v211 = vpop.f32.mrb[0].mxu0
  %212 = vmatprep.mubr.bf16.mxu0 0
  %213 = vmatmul.mubr.bf16.gmra.mrb[0].mxu0 %v98
  %v214 = vpop.f32.mrb[0].mxu0
  %v215 = vadd.f32 %v158, %v214
  %v216 = vpop.f32.mrb[0].mxu0
  %v217 = vpop.f32.mrb[0].mxu0
  %v218 = vadd.f32 %v158, %v217
  %v219 = vpop.f32.mrb[0].mxu0
  %220 = vdwg.mxu0
  %v221 = vld [vmem:[%s8] sm:$0xf]
  %v222 = vld [vmem:[%s8 + $0x4] sm:$0xf]
  %v223 = vld [vmem:[%s8 + $0x8] sm:$0xf]
  %v224 = vld [vmem:[%s8 + $0xc] sm:$0xf]
  %v225 = vld [vmem:[%s11] sm:$0x1]
  %v227 = vlaneseq
  %v228 = vshrl.u32 %v227, 7
  %v229 = vsub.s32 0, %v228
  %v230 = vrot.slane %v225, %v229
  %v236 = vunpack.c.l.b16 %v221
  %v237 = vunpack.c.l.b16 %v222
  %v238 = vunpack.c.l.b16 %v223
  %v239 = vunpack.c.l.b16 %v224
  %v240 = vpack.c.b16 %v237, %v236
  %v241 = vpack.c.b16 %v239, %v238
  %v245 = vsel %vm93, %v68, 0
  %v248 = vsel %vm93, %v69, 0
  %250 = vmatprep.subr.bf16.mxu0 0
  %251 = vmatpush1.bf16.msra.mxu0 %v240
  %252 = vmatprep.subr.bf16.mxu0 0
  %253 = vmatpush1.bf16.msra.mxu0 %v241
  %254 = vmatprep.subr.bf16.mxu0 0
  %255 = vmatpush1.bf16.msra.mxu0 0
  %256 = vmatprep.subr.bf16.mxu0 0
  %257 = vmatpush1.bf16.msra.mxu0 0
  %258 = vmatprep.subr.bf16.mxu0 0
  %259 = vmatpush1.bf16.msra.mxu0 0
  %260 = vmatprep.subr.bf16.mxu0 0
  %261 = vmatpush1.bf16.msra.mxu0 0
  %262 = vmatprep.subr.bf16.mxu0 0
  %263 = vmatpush1.bf16.msra.mxu0 0
  %264 = vmatprep.subr.bf16.mxu0 0
  %265 = vmatpush1.bf16.msra.mxu0 0
  %266 = vmatprep.subr.bf16.mxu0 0
  %267 = vmatpush1.bf16.msra.mxu0 0
  %268 = vmatprep.subr.bf16.mxu0 0
  %269 = vmatpush1.bf16.msra.mxu0 0
  %270 = vmatprep.subr.bf16.mxu0 0
  %271 = vmatpush1.bf16.msra.mxu0 0
  %272 = vmatprep.subr.bf16.mxu0 0
  %273 = vmatpush1.bf16.msra.mxu0 0
  %274 = vmatprep.subr.bf16.mxu0 0
  %275 = vmatpush1.bf16.msra.mxu0 0
  %276 = vmatprep.subr.bf16.mxu0 0
  %277 = vmatpush1.bf16.msra.mxu0 0
  %278 = vmatprep.subr.bf16.mxu0 0
  %279 = vmatpush1.bf16.msra.mxu0 0
  %280 = vmatprep.subr.bf16.mxu0 0
  %281 = vmatpush1.bf16.msra.mxu0 0
  %282 = vmatprep.mubr.bf16.mxu0 0
  %283 = vmatmul.mubr.bf16.gmra.mrb[0].mxu0 %v245
  %v284 = vpop.f32.mrb[0].mxu0
  %v285 = vadd.f32 %v230, %v284
  %v286 = vpop.f32.mrb[0].mxu0
  %v287 = vpop.f32.mrb[0].mxu0
  %v288 = vadd.f32 %v230, %v287
  %v289 = vpop.f32.mrb[0].mxu0
  %290 = vmatprep.mubr.bf16.mxu0 0
  %291 = vmatmul.mubr.bf16.gmra.mrb[0].mxu0 %v248
  %v292 = vpop.f32.mrb[0].mxu0
  %v293 = vadd.f32 %v230, %v292
  %v294 = vpop.f32.mrb[0].mxu0
  %v295 = vpop.f32.mrb[0].mxu0
  %v296 = vadd.f32 %v230, %v295
  %v297 = vpop.f32.mrb[0].mxu0
  %298 = vdwg.mxu0
  %v299 = vld [vmem:[%s2] sm:$0xf]
  %v300 = vld [vmem:[%s2 + $0x4] sm:$0xf]
  %v301 = vld [vmem:[%s2 + $0x8] sm:$0xf]
  %v302 = vld [vmem:[%s2 + $0xc] sm:$0xf]
  %v303 = vld [vmem:[%s2 + $0x10] sm:$0xf]
  %v304 = vld [vmem:[%s2 + $0x14] sm:$0xf]
  %v305 = vld [vmem:[%s2 + $0x18] sm:$0xf]
  %v306 = vld [vmem:[%s2 + $0x1c] sm:$0xf]
  %v307 = vld [vmem:[%s2 + $0x20] sm:$0xf]
  %v308 = vld [vmem:[%s2 + $0x24] sm:$0xf]
  %v309 = vld [vmem:[%s2 + $0x28] sm:$0xf]
  %v310 = vld [vmem:[%s2 + $0x2c] sm:$0xf]
  %v311 = vld [vmem:[%s2 + $0x30] sm:$0xf]
  %v312 = vld [vmem:[%s2 + $0x34] sm:$0xf]
  %v313 = vld [vmem:[%s2 + $0x38] sm:$0xf]
  %v314 = vld [vmem:[%s2 + $0x3c] sm:$0xf]
  %v315 = vpack.c.bf16 %v138, %v135
  %v316 = vpack.c.bf16 %v146, %v143
  %v333 = vunpack.c.l.b16 %v299
  %v334 = vunpack.c.l.b16 %v300
  %v335 = vunpack.c.l.b16 %v301
  %v336 = vunpack.c.l.b16 %v302
  %v337 = vunpack.c.l.b16 %v303
  %v338 = vunpack.c.l.b16 %v304
  %v339 = vunpack.c.l.b16 %v305
  %v340 = vunpack.c.l.b16 %v306
  %v341 = vunpack.c.l.b16 %v307
  %v342 = vunpack.c.l.b16 %v308
  %v343 = vunpack.c.l.b16 %v309
  %v344 = vunpack.c.l.b16 %v310
  %v345 = vunpack.c.l.b16 %v311
  %v346 = vunpack.c.l.b16 %v312
  %v347 = vunpack.c.l.b16 %v313
  %v348 = vunpack.c.l.b16 %v314
  %v349 = vpack.c.b16 %v334, %v333
  %v350 = vpack.c.b16 %v336, %v335
  %v351 = vpack.c.b16 %v338, %v337
  %v352 = vpack.c.b16 %v340, %v339
  %v353 = vpack.c.b16 %v342, %v341
  %v354 = vpack.c.b16 %v344, %v343
  %v355 = vpack.c.b16 %v346, %v345
  %v356 = vpack.c.b16 %v348, %v347
  %v358 = vsel %vm93, %v349, 0
  %v361 = vsel %vm93, %v350, 0
  %v364 = vsel %vm93, %v351, 0
  %v367 = vsel %vm93, %v352, 0
  %v370 = vsel %vm93, %v353, 0
  %v373 = vsel %vm93, %v354, 0
  %v376 = vsel %vm93, %v355, 0
  %v379 = vsel %vm93, %v356, 0
  %381 = vmatprep.subr.bf16.mxu0 0
  %382 = vmatpush1.bf16.msra.mxu0 %v315
  %383 = vmatprep.subr.bf16.mxu0 0
  %384 = vmatpush1.bf16.msra.mxu0 %v316
  %385 = vmatprep.subr.bf16.mxu0 0
  %386 = vmatpush1.bf16.msra.mxu0 0
  %387 = vmatprep.subr.bf16.mxu0 0
  %388 = vmatpush1.bf16.msra.mxu0 0
  %389 = vmatprep.subr.bf16.mxu0 0
  %390 = vmatpush1.bf16.msra.mxu0 0
  %391 = vmatprep.subr.bf16.mxu0 0
  %392 = vmatpush1.bf16.msra.mxu0 0
  %393 = vmatprep.subr.bf16.mxu0 0
  %394 = vmatpush1.bf16.msra.mxu0 0
  %395 = vmatprep.subr.bf16.mxu0 0
  %396 = vmatpush1.bf16.msra.mxu0 0
  %397 = vmatprep.subr.bf16.mxu0 0
  %398 = vmatpush1.bf16.msra.mxu0 0
  %399 = vmatprep.subr.bf16.mxu0 0
  %400 = vmatpush1.bf16.msra.mxu0 0
  %401 = vmatprep.subr.bf16.mxu0 0
  %402 = vmatpush1.bf16.msra.mxu0 0
  %403 = vmatprep.subr.bf16.mxu0 0
  %404 = vmatpush1.bf16.msra.mxu0 0
  %405 = vmatprep.subr.bf16.mxu0 0
  %406 = vmatpush1.bf16.msra.mxu0 0
  %407 = vmatprep.subr.bf16.mxu0 0
  %408 = vmatpush1.bf16.msra.mxu0 0
  %409 = vmatprep.subr.bf16.mxu0 0
  %410 = vmatpush1.bf16.msra.mxu0 0
  %411 = vmatprep.subr.bf16.mxu0 0
  %412 = vmatpush1.bf16.msra.mxu0 0
  %413 = vmatprep.mubr.bf16.mxu0 0
  %414 = vmatmul.mubr.bf16.gmra.mrb[0].mxu0 %v358
  %v415 = vpop.f32.mrb[0].mxu0
  %v416 = vadd.f32 0.0, %v415
  %v417 = vpop.f32.mrb[0].mxu0
  %v418 = vpop.f32.mrb[0].mxu0
  %v419 = vadd.f32 0.0, %v418
  %v420 = vpop.f32.mrb[0].mxu0
  %421 = vmatprep.mubr.bf16.mxu0 0
  %422 = vmatmul.mubr.bf16.gmra.mrb[0].mxu0 %v361
  %v423 = vpop.f32.mrb[0].mxu0
  %v424 = vadd.f32 0.0, %v423
  %v425 = vpop.f32.mrb[0].mxu0
  %v426 = vpop.f32.mrb[0].mxu0
  %v427 = vadd.f32 0.0, %v426
  %v428 = vpop.f32.mrb[0].mxu0
  %429 = vmatprep.mubr.bf16.mxu0 0
  %430 = vmatmul.mubr.bf16.gmra.mrb[0].mxu0 %v364
  %v431 = vpop.f32.mrb[0].mxu0
  %v432 = vadd.f32 0.0, %v431
  %v433 = vpop.f32.mrb[0].mxu0
  %v434 = vpop.f32.mrb[0].mxu0
  %v435 = vadd.f32 0.0, %v434
  %v436 = vpop.f32.mrb[0].mxu0
  %437 = vmatprep.mubr.bf16.mxu0 0
  %438 = vmatmul.mubr.bf16.gmra.mrb[0].mxu0 %v367
  %v439 = vpop.f32.mrb[0].mxu0
  %v440 = vadd.f32 0.0, %v439
  %v441 = vpop.f32.mrb[0].mxu0
  %v442 = vpop.f32.mrb[0].mxu0
  %v443 = vadd.f32 0.0, %v442
  %v444 = vpop.f32.mrb[0].mxu0
  %445 = vmatprep.mubr.bf16.mxu0 0
  %446 = vmatmul.mubr.bf16.gmra.mrb[0].mxu0 %v370
  %v447 = vpop.f32.mrb[0].mxu0
  %v448 = vadd.f32 0.0, %v447
  %v449 = vpop.f32.mrb[0].mxu0
  %v450 = vpop.f32.mrb[0].mxu0
  %v451 = vadd.f32 0.0, %v450
  %v452 = vpop.f32.mrb[0].mxu0
  %453 = vmatprep.mubr.bf16.mxu0 0
  %454 = vmatmul.mubr.bf16.gmra.mrb[0].mxu0 %v373
  %v455 = vpop.f32.mrb[0].mxu0
  %v456 = vadd.f32 0.0, %v455
  %v457 = vpop.f32.mrb[0].mxu0
  %v458 = vpop.f32.mrb[0].mxu0
  %v459 = vadd.f32 0.0, %v458
  %v460 = vpop.f32.mrb[0].mxu0
  %461 = vmatprep.mubr.bf16.mxu0 0
  %462 = vmatmul.mubr.bf16.gmra.mrb[0].mxu0 %v376
  %v463 = vpop.f32.mrb[0].mxu0
  %v464 = vadd.f32 0.0, %v463
  %v465 = vpop.f32.mrb[0].mxu0
  %v466 = vpop.f32.mrb[0].mxu0
  %v467 = vadd.f32 0.0, %v466
  %v468 = vpop.f32.mrb[0].mxu0
  %469 = vmatprep.mubr.bf16.mxu0 0
  %470 = vmatmul.mubr.bf16.gmra.mrb[0].mxu0 %v379
  %v471 = vpop.f32.mrb[0].mxu0
  %v472 = vadd.f32 0.0, %v471
  %v473 = vpop.f32.mrb[0].mxu0
  %v474 = vpop.f32.mrb[0].mxu0
  %v475 = vadd.f32 0.0, %v474
  %v476 = vpop.f32.mrb[0].mxu0
  %477 = vdwg.mxu0
  %v478 = vld [vmem:[%s4] sm:$0xff]
  %v479 = vld [vmem:[%s4 + $0x8] sm:$0xff]
  %v480 = vld [vmem:[%s4 + $0x10] sm:$0xff]
  %v481 = vld [vmem:[%s4 + $0x18] sm:$0xff]
  %v482 = vld [vmem:[%s4 + $0x20] sm:$0xff]
  %v483 = vld [vmem:[%s4 + $0x28] sm:$0xff]
  %v484 = vld [vmem:[%s4 + $0x30] sm:$0xff]
  %v485 = vld [vmem:[%s4 + $0x38] sm:$0xff]
  %v486 = vld [vmem:[%s4 + $0x40] sm:$0xff]
  %v487 = vld [vmem:[%s4 + $0x48] sm:$0xff]
  %v488 = vld [vmem:[%s4 + $0x50] sm:$0xff]
  %v489 = vld [vmem:[%s4 + $0x58] sm:$0xff]
  %v490 = vld [vmem:[%s4 + $0x60] sm:$0xff]
  %v491 = vld [vmem:[%s4 + $0x68] sm:$0xff]
  %v492 = vld [vmem:[%s4 + $0x70] sm:$0xff]
  %v493 = vld [vmem:[%s4 + $0x78] sm:$0xff]
  %v494 = vmul.f32 %v416, %v478
  %v495 = vmul.f32 %v419, %v479
  %v496 = vmul.f32 %v424, %v480
  %v497 = vmul.f32 %v427, %v481
  %v498 = vmul.f32 %v432, %v482
  %v499 = vmul.f32 %v435, %v483
  %v500 = vmul.f32 %v440, %v484
  %v501 = vmul.f32 %v443, %v485
  %v502 = vmul.f32 %v448, %v486
  %v503 = vmul.f32 %v451, %v487
  %v504 = vmul.f32 %v456, %v488
  %v505 = vmul.f32 %v459, %v489
  %v506 = vmul.f32 %v464, %v490
  %v507 = vmul.f32 %v467, %v491
  %v508 = vmul.f32 %v472, %v492
  %v509 = vmul.f32 %v475, %v493
  %v510 = vpack.c.bf16 %v495, %v494
  %v511 = vpack.c.bf16 %v497, %v496
  %v512 = vpack.c.bf16 %v499, %v498
  %v513 = vpack.c.bf16 %v501, %v500
  %v514 = vpack.c.bf16 %v503, %v502
  %v515 = vpack.c.bf16 %v505, %v504
  %v516 = vpack.c.bf16 %v507, %v506
  %v517 = vpack.c.bf16 %v509, %v508
  %v518 = vpack.c.bf16 %v210, %v207
  %v519 = vpack.c.bf16 %v218, %v215
  %v521 = vsel %vm93, %v510, 0
  %v524 = vsel %vm93, %v511, 0
  %v527 = vsel %vm93, %v512, 0
  %v530 = vsel %vm93, %v513, 0
  %v533 = vsel %vm93, %v514, 0
  %v536 = vsel %vm93, %v515, 0
  %v539 = vsel %vm93, %v516, 0
  %v542 = vsel %vm93, %v517, 0
  %v545 = vsel %vm93, %v518, 0
  %v548 = vsel %vm93, %v519, 0
  %550 = vmatprep.subr.bf16.mxu0 0
  %551 = vmatpush1.bf16.xpose.msra.mxu0 %v545
  %552 = vmatprep.subr.bf16.mxu0 0
  %553 = vmatpush1.bf16.xpose.msra.mxu0 %v548
  %554 = vmatprep.subr.bf16.mxu0 0
  %555 = vmatpush1.bf16.xpose.msra.mxu0 0
  %556 = vmatprep.subr.bf16.mxu0 0
  %557 = vmatpush1.bf16.xpose.msra.mxu0 0
  %558 = vmatprep.subr.bf16.mxu0 0
  %559 = vmatpush1.bf16.xpose.msra.mxu0 0
  %560 = vmatprep.subr.bf16.mxu0 0
  %561 = vmatpush1.bf16.xpose.msra.mxu0 0
  %562 = vmatprep.subr.bf16.mxu0 0
  %563 = vmatpush1.bf16.xpose.msra.mxu0 0
  %564 = vmatprep.subr.bf16.mxu0 0
  %565 = vmatpush1.bf16.xpose.msra.mxu0 0
  %566 = vmatprep.subr.bf16.mxu0 0
  %567 = vmatpush1.bf16.xpose.msra.mxu0 0
  %568 = vmatprep.subr.bf16.mxu0 0
  %569 = vmatpush1.bf16.xpose.msra.mxu0 0
  %570 = vmatprep.subr.bf16.mxu0 0
  %571 = vmatpush1.bf16.xpose.msra.mxu0 0
  %572 = vmatprep.subr.bf16.mxu0 0
  %573 = vmatpush1.bf16.xpose.msra.mxu0 0
  %574 = vmatprep.subr.bf16.mxu0 0
  %575 = vmatpush1.bf16.xpose.msra.mxu0 0
  %576 = vmatprep.subr.bf16.mxu0 0
  %577 = vmatpush1.bf16.xpose.msra.mxu0 0
  %578 = vmatprep.subr.bf16.mxu0 0
  %579 = vmatpush1.bf16.xpose.msra.mxu0 0
  %580 = vmatprep.subr.bf16.mxu0 0
  %581 = vmatpush1.bf16.xpose.msra.mxu0 0
  %582 = vmatprep.mubr.bf16.mxu0 0
  %583 = vmatmul.mubr.bf16.gmra.mrb[0].mxu0 %v521
  %v584 = vpop.f32.mrb[0].mxu0
  %v585 = vadd.f32 0.0, %v584
  %v586 = vpop.f32.mrb[0].mxu0
  %v587 = vpop.f32.mrb[0].mxu0
  %v588 = vadd.f32 0.0, %v587
  %v589 = vpop.f32.mrb[0].mxu0
  %590 = vmatprep.mubr.bf16.mxu0 0
  %591 = vmatmul.mubr.bf16.gmra.mrb[0].mxu0 %v524
  %v592 = vpop.f32.mrb[0].mxu0
  %v593 = vadd.f32 0.0, %v592
  %v594 = vpop.f32.mrb[0].mxu0
  %v595 = vpop.f32.mrb[0].mxu0
  %v596 = vadd.f32 0.0, %v595
  %v597 = vpop.f32.mrb[0].mxu0
  %598 = vmatprep.mubr.bf16.mxu0 0
  %599 = vmatmul.mubr.bf16.gmra.mrb[0].mxu0 %v527
  %v600 = vpop.f32.mrb[0].mxu0
  %v601 = vadd.f32 0.0, %v600
  %v602 = vpop.f32.mrb[0].mxu0
  %v603 = vpop.f32.mrb[0].mxu0
  %v604 = vadd.f32 0.0, %v603
  %v605 = vpop.f32.mrb[0].mxu0
  %606 = vmatprep.mubr.bf16.mxu0 0
  %607 = vmatmul.mubr.bf16.gmra.mrb[0].mxu0 %v530
  %v608 = vpop.f32.mrb[0].mxu0
  %v609 = vadd.f32 0.0, %v608
  %v610 = vpop.f32.mrb[0].mxu0
  %v611 = vpop.f32.mrb[0].mxu0
  %v612 = vadd.f32 0.0, %v611
  %v613 = vpop.f32.mrb[0].mxu0
  %614 = vmatprep.mubr.bf16.mxu0 0
  %615 = vmatmul.mubr.bf16.gmra.mrb[0].mxu0 %v533
  %v616 = vpop.f32.mrb[0].mxu0
  %v617 = vadd.f32 0.0, %v616
  %v618 = vpop.f32.mrb[0].mxu0
  %v619 = vpop.f32.mrb[0].mxu0
  %v620 = vadd.f32 0.0, %v619
  %v621 = vpop.f32.mrb[0].mxu0
  %622 = vmatprep.mubr.bf16.mxu0 0
  %623 = vmatmul.mubr.bf16.gmra.mrb[0].mxu0 %v536
  %v624 = vpop.f32.mrb[0].mxu0
  %v625 = vadd.f32 0.0, %v624
  %v626 = vpop.f32.mrb[0].mxu0
  %v627 = vpop.f32.mrb[0].mxu0
  %v628 = vadd.f32 0.0, %v627
  %v629 = vpop.f32.mrb[0].mxu0
  %630 = vmatprep.mubr.bf16.mxu0 0
  %631 = vmatmul.mubr.bf16.gmra.mrb[0].mxu0 %v539
  %v632 = vpop.f32.mrb[0].mxu0
  %v633 = vadd.f32 0.0, %v632
  %v634 = vpop.f32.mrb[0].mxu0
  %v635 = vpop.f32.mrb[0].mxu0
  %v636 = vadd.f32 0.0, %v635
  %v637 = vpop.f32.mrb[0].mxu0
  %638 = vmatprep.mubr.bf16.mxu0 0
  %639 = vmatmul.mubr.bf16.gmra.mrb[0].mxu0 %v542
  %v640 = vpop.f32.mrb[0].mxu0
  %v641 = vadd.f32 0.0, %v640
  %v642 = vpop.f32.mrb[0].mxu0
  %v643 = vpop.f32.mrb[0].mxu0
  %v644 = vadd.f32 0.0, %v643
  %v645 = vpop.f32.mrb[0].mxu0
  %646 = vdwg.mxu0
  %v647 = vmul.f32 %v585, 0.35355338
  %v648 = vmul.f32 %v588, 0.35355338
  %v649 = vmul.f32 %v593, 0.35355338
  %v650 = vmul.f32 %v596, 0.35355338
  %v651 = vmul.f32 %v601, 0.35355338
  %v652 = vmul.f32 %v604, 0.35355338
  %v653 = vmul.f32 %v609, 0.35355338
  %v654 = vmul.f32 %v612, 0.35355338
  %v655 = vmul.f32 %v617, 0.35355338
  %v656 = vmul.f32 %v620, 0.35355338
  %v657 = vmul.f32 %v625, 0.35355338
  %v658 = vmul.f32 %v628, 0.35355338
  %v659 = vmul.f32 %v633, 0.35355338
  %v660 = vmul.f32 %v636, 0.35355338
  %v661 = vmul.f32 %v641, 0.35355338
  %v662 = vmul.f32 %v644, 0.35355338
  %v663 = vld [vmem:[%s5] sm:$0xff]
  %v664 = vld [vmem:[%s5 + $0x8] sm:$0xff]
  %v665 = vld [vmem:[%s5 + $0x10] sm:$0xff]
  %v666 = vld [vmem:[%s5 + $0x18] sm:$0xff]
  %v667 = vld [vmem:[%s5 + $0x20] sm:$0xff]
  %v668 = vld [vmem:[%s5 + $0x28] sm:$0xff]
  %v669 = vld [vmem:[%s5 + $0x30] sm:$0xff]
  %v670 = vld [vmem:[%s5 + $0x38] sm:$0xff]
  %v671 = vld [vmem:[%s5 + $0x40] sm:$0xff]
  %v672 = vld [vmem:[%s5 + $0x48] sm:$0xff]
  %v673 = vld [vmem:[%s5 + $0x50] sm:$0xff]
  %v674 = vld [vmem:[%s5 + $0x58] sm:$0xff]
  %v675 = vld [vmem:[%s5 + $0x60] sm:$0xff]
  %v676 = vld [vmem:[%s5 + $0x68] sm:$0xff]
  %v677 = vld [vmem:[%s5 + $0x70] sm:$0xff]
  %v678 = vld [vmem:[%s5 + $0x78] sm:$0xff]
  %v679 = vadd.f32 %v647, %v663
  %v680 = vadd.f32 %v648, %v664
  %v681 = vadd.f32 %v649, %v665
  %v682 = vadd.f32 %v650, %v666
  %v683 = vadd.f32 %v651, %v667
  %v684 = vadd.f32 %v652, %v668
  %v685 = vadd.f32 %v653, %v669
  %v686 = vadd.f32 %v654, %v670
  %v687 = vadd.f32 %v655, %v671
  %v688 = vadd.f32 %v656, %v672
  %v689 = vadd.f32 %v657, %v673
  %v690 = vadd.f32 %v658, %v674
  %v691 = vadd.f32 %v659, %v675
  %v692 = vadd.f32 %v660, %v676
  %v693 = vadd.f32 %v661, %v677
  %v694 = vadd.f32 %v662, %v678
  %v695 = vsel %vm93, %v679, -inf
  %696 = vmax.xlane.f32.xlu0 %v695
  %v697 = vpop.xlane.xlu0 %696
  %v698 = vsel %vm93, %v680, -inf
  %699 = vmax.xlane.f32.xlu0 %v698
  %v700 = vpop.xlane.xlu0 %699
  %v701 = vsel %vm93, %v681, -inf
  %702 = vmax.xlane.f32.xlu0 %v701
  %v703 = vpop.xlane.xlu0 %702
  %v704 = vsel %vm93, %v682, -inf
  %705 = vmax.xlane.f32.xlu0 %v704
  %v706 = vpop.xlane.xlu0 %705
  %v707 = vsel %vm93, %v683, -inf
  %708 = vmax.xlane.f32.xlu0 %v707
  %v709 = vpop.xlane.xlu0 %708
  %v710 = vsel %vm93, %v684, -inf
  %711 = vmax.xlane.f32.xlu0 %v710
  %v712 = vpop.xlane.xlu0 %711
  %v713 = vsel %vm93, %v685, -inf
  %714 = vmax.xlane.f32.xlu0 %v713
  %v715 = vpop.xlane.xlu0 %714
  %v716 = vsel %vm93, %v686, -inf
  %717 = vmax.xlane.f32.xlu0 %v716
  %v718 = vpop.xlane.xlu0 %717
  %v719 = vsel %vm93, %v687, -inf
  %720 = vmax.xlane.f32.xlu0 %v719
  %v721 = vpop.xlane.xlu0 %720
  %v722 = vsel %vm93, %v688, -inf
  %723 = vmax.xlane.f32.xlu0 %v722
  %v724 = vpop.xlane.xlu0 %723
  %v725 = vsel %vm93, %v689, -inf
  %726 = vmax.xlane.f32.xlu0 %v725
  %v727 = vpop.xlane.xlu0 %726
  %v728 = vsel %vm93, %v690, -inf
  %729 = vmax.xlane.f32.xlu0 %v728
  %v730 = vpop.xlane.xlu0 %729
  %v731 = vsel %vm93, %v691, -inf
  %732 = vmax.xlane.f32.xlu0 %v731
  %v733 = vpop.xlane.xlu0 %732
  %v734 = vsel %vm93, %v692, -inf
  %735 = vmax.xlane.f32.xlu0 %v734
  %v736 = vpop.xlane.xlu0 %735
  %v737 = vsel %vm93, %v693, -inf
  %738 = vmax.xlane.f32.xlu0 %v737
  %v739 = vpop.xlane.xlu0 %738
  %v740 = vsel %vm93, %v694, -inf
  %741 = vmax.xlane.f32.xlu0 %v740
  %v742 = vpop.xlane.xlu0 %741
  %v743 = vsub.f32 %v679, %v697
  %v744 = vsub.f32 %v680, %v700
  %v745 = vsub.f32 %v681, %v703
  %v746 = vsub.f32 %v682, %v706
  %v747 = vsub.f32 %v683, %v709
  %v748 = vsub.f32 %v684, %v712
  %v749 = vsub.f32 %v685, %v715
  %v750 = vsub.f32 %v686, %v718
  %v751 = vsub.f32 %v687, %v721
  %v752 = vsub.f32 %v688, %v724
  %v753 = vsub.f32 %v689, %v727
  %v754 = vsub.f32 %v690, %v730
  %v755 = vsub.f32 %v691, %v733
  %v756 = vsub.f32 %v692, %v736
  %v757 = vsub.f32 %v693, %v739
  %v758 = vsub.f32 %v694, %v742
  %v759 = vmul.f32 %v743, 1.442695
  %v760 = vpow.pop %v759
  %v761 = vmul.f32 %v744, 1.442695
  %v762 = vpow.pop %v761
  %v763 = vmul.f32 %v745, 1.442695
  %v764 = vpow.pop %v763
  %v765 = vmul.f32 %v746, 1.442695
  %v766 = vpow.pop %v765
  %v767 = vmul.f32 %v747, 1.442695
  %v768 = vpow.pop %v767
  %v769 = vmul.f32 %v748, 1.442695
  %v770 = vpow.pop %v769
  %v771 = vmul.f32 %v749, 1.442695
  %v772 = vpow.pop %v771
  %v773 = vmul.f32 %v750, 1.442695
  %v774 = vpow.pop %v773
  %v775 = vmul.f32 %v751, 1.442695
  %v776 = vpow.pop %v775
  %v777 = vmul.f32 %v752, 1.442695
  %v778 = vpow.pop %v777
  %v779 = vmul.f32 %v753, 1.442695
  %v780 = vpow.pop %v779
  %v781 = vmul.f32 %v754, 1.442695
  %v782 = vpow.pop %v781
  %v783 = vmul.f32 %v755, 1.442695
  %v784 = vpow.pop %v783
  %v785 = vmul.f32 %v756, 1.442695
  %v786 = vpow.pop %v785
  %v787 = vmul.f32 %v757, 1.442695
  %v788 = vpow.pop %v787
  %v789 = vmul.f32 %v758, 1.442695
  %v790 = vpow.pop %v789
  %v791 = vsel %vm93, %v760, 0.0
  %792 = vadd.xlane.f32.xlu0 %v791
  %v793 = vpop.xlane.xlu0 %792
  %v794 = vsel %vm93, %v762, 0.0
  %795 = vadd.xlane.f32.xlu0 %v794
  %v796 = vpop.xlane.xlu0 %795
  %v797 = vsel %vm93, %v764, 0.0
  %798 = vadd.xlane.f32.xlu0 %v797
  %v799 = vpop.xlane.xlu0 %798
  %v800 = vsel %vm93, %v766, 0.0
  %801 = vadd.xlane.f32.xlu0 %v800
  %v802 = vpop.xlane.xlu0 %801
  %v803 = vsel %vm93, %v768, 0.0
  %804 = vadd.xlane.f32.xlu0 %v803
  %v805 = vpop.xlane.xlu0 %804
  %v806 = vsel %vm93, %v770, 0.0
  %807 = vadd.xlane.f32.xlu0 %v806
  %v808 = vpop.xlane.xlu0 %807
  %v809 = vsel %vm93, %v772, 0.0
  %810 = vadd.xlane.f32.xlu0 %v809
  %v811 = vpop.xlane.xlu0 %810
  %v812 = vsel %vm93, %v774, 0.0
  %813 = vadd.xlane.f32.xlu0 %v812
  %v814 = vpop.xlane.xlu0 %813
  %v815 = vsel %vm93, %v776, 0.0
  %816 = vadd.xlane.f32.xlu0 %v815
  %v817 = vpop.xlane.xlu0 %816
  %v818 = vsel %vm93, %v778, 0.0
  %819 = vadd.xlane.f32.xlu0 %v818
  %v820 = vpop.xlane.xlu0 %819
  %v821 = vsel %vm93, %v780, 0.0
  %822 = vadd.xlane.f32.xlu0 %v821
  %v823 = vpop.xlane.xlu0 %822
  %v824 = vsel %vm93, %v782, 0.0
  %825 = vadd.xlane.f32.xlu0 %v824
  %v826 = vpop.xlane.xlu0 %825
  %v827 = vsel %vm93, %v784, 0.0
  %828 = vadd.xlane.f32.xlu0 %v827
  %v829 = vpop.xlane.xlu0 %828
  %v830 = vsel %vm93, %v786, 0.0
  %831 = vadd.xlane.f32.xlu0 %v830
  %v832 = vpop.xlane.xlu0 %831
  %v833 = vsel %vm93, %v788, 0.0
  %834 = vadd.xlane.f32.xlu0 %v833
  %v835 = vpop.xlane.xlu0 %834
  %v836 = vsel %vm93, %v790, 0.0
  %837 = vadd.xlane.f32.xlu0 %v836
  %v838 = vpop.xlane.xlu0 %837
  %v839 = vrcp.pop %v793
  %v840 = vrcp.pop %v796
  %v841 = vrcp.pop %v799
  %v842 = vrcp.pop %v802
  %v843 = vrcp.pop %v805
  %v844 = vrcp.pop %v808
  %v845 = vrcp.pop %v811
  %v846 = vrcp.pop %v814
  %v847 = vrcp.pop %v817
  %v848 = vrcp.pop %v820
  %v849 = vrcp.pop %v823
  %v850 = vrcp.pop %v826
  %v851 = vrcp.pop %v829
  %v852 = vrcp.pop %v832
  %v853 = vrcp.pop %v835
  %v854 = vrcp.pop %v838
  %v855 = vmul.f32 %v760, %v839
  %v856 = vmul.f32 %v762, %v840
  %v857 = vmul.f32 %v764, %v841
  %v858 = vmul.f32 %v766, %v842
  %v859 = vmul.f32 %v768, %v843
  %v860 = vmul.f32 %v770, %v844
  %v861 = vmul.f32 %v772, %v845
  %v862 = vmul.f32 %v774, %v846
  %v863 = vmul.f32 %v776, %v847
  %v864 = vmul.f32 %v778, %v848
  %v865 = vmul.f32 %v780, %v849
  %v866 = vmul.f32 %v782, %v850
  %v867 = vmul.f32 %v784, %v851
  %v868 = vmul.f32 %v786, %v852
  %v869 = vmul.f32 %v788, %v853
  %v870 = vmul.f32 %v790, %v854
  %v871 = vpack.c.bf16 %v856, %v855
  %v872 = vpack.c.bf16 %v858, %v857
  %v873 = vpack.c.bf16 %v860, %v859
  %v874 = vpack.c.bf16 %v862, %v861
  %v875 = vpack.c.bf16 %v864, %v863
  %v876 = vpack.c.bf16 %v866, %v865
  %v877 = vpack.c.bf16 %v868, %v867
  %v878 = vpack.c.bf16 %v870, %v869
  %v879 = vpack.c.bf16 %v288, %v285
  %v880 = vpack.c.bf16 %v296, %v293
  %v882 = vsel %vm93, %v871, 0
  %v885 = vsel %vm93, %v872, 0
  %v888 = vsel %vm93, %v873, 0
  %v891 = vsel %vm93, %v874, 0
  %v894 = vsel %vm93, %v875, 0
  %v897 = vsel %vm93, %v876, 0
  %v900 = vsel %vm93, %v877, 0
  %v903 = vsel %vm93, %v878, 0
  %905 = vmatprep.subr.bf16.mxu0 0
  %906 = vmatpush1.bf16.msra.mxu0 %v879
  %907 = vmatprep.subr.bf16.mxu0 0
  %908 = vmatpush1.bf16.msra.mxu0 %v880
  %909 = vmatprep.subr.bf16.mxu0 0
  %910 = vmatpush1.bf16.msra.mxu0 0
  %911 = vmatprep.subr.bf16.mxu0 0
  %912 = vmatpush1.bf16.msra.mxu0 0
  %913 = vmatprep.subr.bf16.mxu0 0
  %914 = vmatpush1.bf16.msra.mxu0 0
  %915 = vmatprep.subr.bf16.mxu0 0
  %916 = vmatpush1.bf16.msra.mxu0 0
  %917 = vmatprep.subr.bf16.mxu0 0
  %918 = vmatpush1.bf16.msra.mxu0 0
  %919 = vmatprep.subr.bf16.mxu0 0
  %920 = vmatpush1.bf16.msra.mxu0 0
  %921 = vmatprep.subr.bf16.mxu0 0
  %922 = vmatpush1.bf16.msra.mxu0 0
  %923 = vmatprep.subr.bf16.mxu0 0
  %924 = vmatpush1.bf16.msra.mxu0 0
  %925 = vmatprep.subr.bf16.mxu0 0
  %926 = vmatpush1.bf16.msra.mxu0 0
  %927 = vmatprep.subr.bf16.mxu0 0
  %928 = vmatpush1.bf16.msra.mxu0 0
  %929 = vmatprep.subr.bf16.mxu0 0
  %930 = vmatpush1.bf16.msra.mxu0 0
  %931 = vmatprep.subr.bf16.mxu0 0
  %932 = vmatpush1.bf16.msra.mxu0 0
  %933 = vmatprep.subr.bf16.mxu0 0
  %934 = vmatpush1.bf16.msra.mxu0 0
  %935 = vmatprep.subr.bf16.mxu0 0
  %936 = vmatpush1.bf16.msra.mxu0 0
  %937 = vmatprep.mubr.bf16.mxu0 0
  %938 = vmatmul.mubr.bf16.gmra.mrb[0].mxu0 %v882
  %v939 = vpop.f32.mrb[0].mxu0
  %v940 = vadd.f32 0.0, %v939
  %v941 = vpop.f32.mrb[0].mxu0
  %v942 = vpop.f32.mrb[0].mxu0
  %v943 = vadd.f32 0.0, %v942
  %v944 = vpop.f32.mrb[0].mxu0
  %945 = vmatprep.mubr.bf16.mxu0 0
  %946 = vmatmul.mubr.bf16.gmra.mrb[0].mxu0 %v885
  %v947 = vpop.f32.mrb[0].mxu0
  %v948 = vadd.f32 0.0, %v947
  %v949 = vpop.f32.mrb[0].mxu0
  %v950 = vpop.f32.mrb[0].mxu0
  %v951 = vadd.f32 0.0, %v950
  %v952 = vpop.f32.mrb[0].mxu0
  %953 = vmatprep.mubr.bf16.mxu0 0
  %954 = vmatmul.mubr.bf16.gmra.mrb[0].mxu0 %v888
  %v955 = vpop.f32.mrb[0].mxu0
  %v956 = vadd.f32 0.0, %v955
  %v957 = vpop.f32.mrb[0].mxu0
  %v958 = vpop.f32.mrb[0].mxu0
  %v959 = vadd.f32 0.0, %v958
  %v960 = vpop.f32.mrb[0].mxu0
  %961 = vmatprep.mubr.bf16.mxu0 0
  %962 = vmatmul.mubr.bf16.gmra.mrb[0].mxu0 %v891
  %v963 = vpop.f32.mrb[0].mxu0
  %v964 = vadd.f32 0.0, %v963
  %v965 = vpop.f32.mrb[0].mxu0
  %v966 = vpop.f32.mrb[0].mxu0
  %v967 = vadd.f32 0.0, %v966
  %v968 = vpop.f32.mrb[0].mxu0
  %969 = vmatprep.mubr.bf16.mxu0 0
  %970 = vmatmul.mubr.bf16.gmra.mrb[0].mxu0 %v894
  %v971 = vpop.f32.mrb[0].mxu0
  %v972 = vadd.f32 0.0, %v971
  %v973 = vpop.f32.mrb[0].mxu0
  %v974 = vpop.f32.mrb[0].mxu0
  %v975 = vadd.f32 0.0, %v974
  %v976 = vpop.f32.mrb[0].mxu0
  %977 = vmatprep.mubr.bf16.mxu0 0
  %978 = vmatmul.mubr.bf16.gmra.mrb[0].mxu0 %v897
  %v979 = vpop.f32.mrb[0].mxu0
  %v980 = vadd.f32 0.0, %v979
  %v981 = vpop.f32.mrb[0].mxu0
  %v982 = vpop.f32.mrb[0].mxu0
  %v983 = vadd.f32 0.0, %v982
  %v984 = vpop.f32.mrb[0].mxu0
  %985 = vmatprep.mubr.bf16.mxu0 0
  %986 = vmatmul.mubr.bf16.gmra.mrb[0].mxu0 %v900
  %v987 = vpop.f32.mrb[0].mxu0
  %v988 = vadd.f32 0.0, %v987
  %v989 = vpop.f32.mrb[0].mxu0
  %v990 = vpop.f32.mrb[0].mxu0
  %v991 = vadd.f32 0.0, %v990
  %v992 = vpop.f32.mrb[0].mxu0
  %993 = vmatprep.mubr.bf16.mxu0 0
  %994 = vmatmul.mubr.bf16.gmra.mrb[0].mxu0 %v903
  %v995 = vpop.f32.mrb[0].mxu0
  %v996 = vadd.f32 0.0, %v995
  %v997 = vpop.f32.mrb[0].mxu0
  %v998 = vpop.f32.mrb[0].mxu0
  %v999 = vadd.f32 0.0, %v998
  %v1000 = vpop.f32.mrb[0].mxu0
  %1001 = vdwg.mxu0
  %v1002 = vmul.f32 %v940, %v478
  %v1003 = vmul.f32 %v943, %v479
  %v1004 = vmul.f32 %v948, %v480
  %v1005 = vmul.f32 %v951, %v481
  %v1006 = vmul.f32 %v956, %v482
  %v1007 = vmul.f32 %v959, %v483
  %v1008 = vmul.f32 %v964, %v484
  %v1009 = vmul.f32 %v967, %v485
  %v1010 = vmul.f32 %v972, %v486
  %v1011 = vmul.f32 %v975, %v487
  %v1012 = vmul.f32 %v980, %v488
  %v1013 = vmul.f32 %v983, %v489
  %v1014 = vmul.f32 %v988, %v490
  %v1015 = vmul.f32 %v991, %v491
  %v1016 = vmul.f32 %v996, %v492
  %v1017 = vmul.f32 %v999, %v493
  %v1018 = vld [vmem:[%s3] sm:$0xf]
  %v1019 = vld [vmem:[%s3 + $0x4] sm:$0xf]
  %v1020 = vld [vmem:[%s3 + $0x8] sm:$0xf]
  %v1021 = vld [vmem:[%s3 + $0xc] sm:$0xf]
  %v1022 = vpack.c.bf16 %v1003, %v1002
  %v1023 = vpack.c.bf16 %v1005, %v1004
  %v1024 = vpack.c.bf16 %v1007, %v1006
  %v1025 = vpack.c.bf16 %v1009, %v1008
  %v1026 = vpack.c.bf16 %v1011, %v1010
  %v1027 = vpack.c.bf16 %v1013, %v1012
  %v1028 = vpack.c.bf16 %v1015, %v1014
  %v1029 = vpack.c.bf16 %v1017, %v1016
  %v1034 = vunpack.c.l.b16 %v1018
  %v1035 = vunpack.c.l.b16 %v1019
  %v1036 = vunpack.c.l.b16 %v1020
  %v1037 = vunpack.c.l.b16 %v1021
  %v1038 = vpack.c.b16 %v1035, %v1034
  %v1039 = vpack.c.b16 %v1037, %v1036
  %1042 = vmatprep.subr.bf16.mxu0 0
  %1043 = vmatpush1.bf16.msra.mxu0 %v1022
  %1044 = vmatprep.subr.bf16.mxu0 0
  %1045 = vmatpush1.bf16.msra.mxu0 %v1023
  %1046 = vmatprep.subr.bf16.mxu0 0
  %1047 = vmatpush1.bf16.msra.mxu0 %v1024
  %1048 = vmatprep.subr.bf16.mxu0 0
  %1049 = vmatpush1.bf16.msra.mxu0 %v1025
  %1050 = vmatprep.subr.bf16.mxu0 0
  %1051 = vmatpush1.bf16.msra.mxu0 %v1026
  %1052 = vmatprep.subr.bf16.mxu0 0
  %1053 = vmatpush1.bf16.msra.mxu0 %v1027
  %1054 = vmatprep.subr.bf16.mxu0 0
  %1055 = vmatpush1.bf16.msra.mxu0 %v1028
  %1056 = vmatprep.subr.bf16.mxu0 0
  %1057 = vmatpush1.bf16.msra.mxu0 %v1029
  %1058 = vmatprep.subr.bf16.mxu0 0
  %1059 = vmatpush1.bf16.msra.mxu0 0
  %1060 = vmatprep.subr.bf16.mxu0 0
  %1061 = vmatpush1.bf16.msra.mxu0 0
  %1062 = vmatprep.subr.bf16.mxu0 0
  %1063 = vmatpush1.bf16.msra.mxu0 0
  %1064 = vmatprep.subr.bf16.mxu0 0
  %1065 = vmatpush1.bf16.msra.mxu0 0
  %1066 = vmatprep.subr.bf16.mxu0 0
  %1067 = vmatpush1.bf16.msra.mxu0 0
  %1068 = vmatprep.subr.bf16.mxu0 0
  %1069 = vmatpush1.bf16.msra.mxu0 0
  %1070 = vmatprep.subr.bf16.mxu0 0
  %1071 = vmatpush1.bf16.msra.mxu0 0
  %1072 = vmatprep.subr.bf16.mxu0 0
  %1073 = vmatpush1.bf16.msra.mxu0 0
  %1074 = vmatprep.mubr.bf16.mxu0 0
  %1075 = vmatmul.mubr.bf16.gmra.mrb[0].mxu0 %v1038
  %v1076 = vpop.f32.mrb[0].mxu0
  %v1077 = vadd.f32 0.0, %v1076
  %v1078 = vpop.f32.mrb[0].mxu0
  %v1079 = vpop.f32.mrb[0].mxu0
  %v1080 = vadd.f32 0.0, %v1079
  %v1081 = vpop.f32.mrb[0].mxu0
  %1082 = vmatprep.mubr.bf16.mxu0 0
  %1083 = vmatmul.mubr.bf16.gmra.mrb[0].mxu0 %v1039
  %v1084 = vpop.f32.mrb[0].mxu0
  %v1085 = vadd.f32 0.0, %v1084
  %v1086 = vpop.f32.mrb[0].mxu0
  %v1087 = vpop.f32.mrb[0].mxu0
  %v1088 = vadd.f32 0.0, %v1087
  %v1089 = vpop.f32.mrb[0].mxu0
  %1090 = vdwg.mxu0
  %v1091 = vpack.c.bf16 %v1080, %v1077
  %v1092 = vpack.c.bf16 %v1088, %v1085
  %v1093 = vld [vmem:[%s12] sm:$0xf]
  %v1094 = vld [vmem:[%s12 + $0x4] sm:$0xf]
  %v1095 = vld [vmem:[%s12 + $0x8] sm:$0xf]
  %v1096 = vld [vmem:[%s12 + $0xc] sm:$0xf]
  %v1097 = vld [vmem:[%s13] sm:$0x1]
  %v1099 = vlaneseq
  %v1100 = vshrl.u32 %v1099, 7
  %v1101 = vsub.s32 0, %v1100
  %v1102 = vrot.slane %v1097, %v1101
  %v1108 = vunpack.c.l.b16 %v1093
  %v1109 = vunpack.c.l.b16 %v1094
  %v1110 = vunpack.c.l.b16 %v1095
  %v1111 = vunpack.c.l.b16 %v1096
  %v1112 = vpack.c.b16 %v1109, %v1108
  %v1113 = vpack.c.b16 %v1111, %v1110
  %v1117 = vsel %vm93, %v1091, 0
  %v1120 = vsel %vm93, %v1092, 0
  %1122 = vmatprep.subr.bf16.mxu0 0
  %1123 = vmatpush1.bf16.msra.mxu0 %v1112
  %1124 = vmatprep.subr.bf16.mxu0 0
  %1125 = vmatpush1.bf16.msra.mxu0 %v1113
  %1126 = vmatprep.subr.bf16.mxu0 0
  %1127 = vmatpush1.bf16.msra.mxu0 0
  %1128 = vmatprep.subr.bf16.mxu0 0
  %1129 = vmatpush1.bf16.msra.mxu0 0
  %1130 = vmatprep.subr.bf16.mxu0 0
  %1131 = vmatpush1.bf16.msra.mxu0 0
  %1132 = vmatprep.subr.bf16.mxu0 0
  %1133 = vmatpush1.bf16.msra.mxu0 0
  %1134 = vmatprep.subr.bf16.mxu0 0
  %1135 = vmatpush1.bf16.msra.mxu0 0
  %1136 = vmatprep.subr.bf16.mxu0 0
  %1137 = vmatpush1.bf16.msra.mxu0 0
  %1138 = vmatprep.subr.bf16.mxu0 0
  %1139 = vmatpush1.bf16.msra.mxu0 0
  %1140 = vmatprep.subr.bf16.mxu0 0
  %1141 = vmatpush1.bf16.msra.mxu0 0
  %1142 = vmatprep.subr.bf16.mxu0 0
  %1143 = vmatpush1.bf16.msra.mxu0 0
  %1144 = vmatprep.subr.bf16.mxu0 0
  %1145 = vmatpush1.bf16.msra.mxu0 0
  %1146 = vmatprep.subr.bf16.mxu0 0
  %1147 = vmatpush1.bf16.msra.mxu0 0
  %1148 = vmatprep.subr.bf16.mxu0 0
  %1149 = vmatpush1.bf16.msra.mxu0 0
  %1150 = vmatprep.subr.bf16.mxu0 0
  %1151 = vmatpush1.bf16.msra.mxu0 0
  %1152 = vmatprep.subr.bf16.mxu0 0
  %1153 = vmatpush1.bf16.msra.mxu0 0
  %1154 = vmatprep.mubr.bf16.mxu0 0
  %1155 = vmatmul.mubr.bf16.gmra.mrb[0].mxu0 %v1117
  %v1156 = vpop.f32.mrb[0].mxu0
  %v1157 = vadd.f32 %v1102, %v1156
  %v1158 = vpop.f32.mrb[0].mxu0
  %v1159 = vpop.f32.mrb[0].mxu0
  %v1160 = vadd.f32 %v1102, %v1159
  %v1161 = vpop.f32.mrb[0].mxu0
  %1162 = vmatprep.mubr.bf16.mxu0 0
  %1163 = vmatmul.mubr.bf16.gmra.mrb[0].mxu0 %v1120
  %v1164 = vpop.f32.mrb[0].mxu0
  %v1165 = vadd.f32 %v1102, %v1164
  %v1166 = vpop.f32.mrb[0].mxu0
  %v1167 = vpop.f32.mrb[0].mxu0
  %v1168 = vadd.f32 %v1102, %v1167
  %v1169 = vpop.f32.mrb[0].mxu0
  %1170 = vdwg.mxu0
  %v1171 = vadd.f32 %v54, %v1157
  %v1172 = vadd.f32 %v55, %v1160
  %v1173 = vadd.f32 %v56, %v1165
  %v1174 = vadd.f32 %v57, %v1168
  %v1175 = vld [vmem:[%s14] sm:$0x1]
  %v1176 = vld [vmem:[%s15] sm:$0x1]
  %v1177 = vsel %vm93, %v1171, 0.0
  %1178 = vadd.xlane.f32.xlu0 %v1177
  %v1179 = vpop.xlane.xlu0 %1178
  %v1180 = vsel %vm93, %v1172, 0.0
  %1181 = vadd.xlane.f32.xlu0 %v1180
  %v1182 = vpop.xlane.xlu0 %1181
  %v1183 = vsel %vm93, %v1173, 0.0
  %1184 = vadd.xlane.f32.xlu0 %v1183
  %v1185 = vpop.xlane.xlu0 %1184
  %v1186 = vsel %vm93, %v1174, 0.0
  %1187 = vadd.xlane.f32.xlu0 %v1186
  %v1188 = vpop.xlane.xlu0 %1187
  %v1189 = vrcp.pop 32.0
  %v1190 = vmul.f32 %v1179, %v1189
  %v1191 = vmul.f32 %v1182, %v1189
  %v1192 = vmul.f32 %v1185, %v1189
  %v1193 = vmul.f32 %v1188, %v1189
  %v1194 = vsub.f32 %v1171, %v1190
  %v1195 = vsub.f32 %v1172, %v1191
  %v1196 = vsub.f32 %v1173, %v1192
  %v1197 = vsub.f32 %v1174, %v1193
  %v1198 = vmul.f32 %v1194, %v1194
  %v1199 = vmul.f32 %v1195, %v1195
  %v1200 = vmul.f32 %v1196, %v1196
  %v1201 = vmul.f32 %v1197, %v1197
  %v1202 = vsel %vm93, %v1198, 0.0
  %1203 = vadd.xlane.f32.xlu0 %v1202
  %v1204 = vpop.xlane.xlu0 %1203
  %v1205 = vsel %vm93, %v1199, 0.0
  %1206 = vadd.xlane.f32.xlu0 %v1205
  %v1207 = vpop.xlane.xlu0 %1206
  %v1208 = vsel %vm93, %v1200, 0.0
  %1209 = vadd.xlane.f32.xlu0 %v1208
  %v1210 = vpop.xlane.xlu0 %1209
  %v1211 = vsel %vm93, %v1201, 0.0
  %1212 = vadd.xlane.f32.xlu0 %v1211
  %v1213 = vpop.xlane.xlu0 %1212
  %v1214 = vmul.f32 %v1204, %v1189
  %v1215 = vmul.f32 %v1207, %v1189
  %v1216 = vmul.f32 %v1210, %v1189
  %v1217 = vmul.f32 %v1213, %v1189
  %v1218 = vadd.f32 %v1214, 1e-05
  %v1219 = vadd.f32 %v1215, 1e-05
  %v1220 = vadd.f32 %v1216, 1e-05
  %v1221 = vadd.f32 %v1217, 1e-05
  %v1222 = vrsqrt.pop %v1218
  %v1223 = vrsqrt.pop %v1219
  %v1224 = vrsqrt.pop %v1220
  %v1225 = vrsqrt.pop %v1221
  %v1226 = vmul.f32 %v1194, %v1222
  %v1227 = vmul.f32 %v1195, %v1223
  %v1228 = vmul.f32 %v1196, %v1224
  %v1229 = vmul.f32 %v1197, %v1225
  %v1231 = vlaneseq
  %v1232 = vshrl.u32 %v1231, 7
  %v1233 = vsub.s32 0, %v1232
  %v1234 = vrot.slane %v1175, %v1233
  %v1236 = vmul.f32 %v1226, %v1234
  %v1237 = vmul.f32 %v1227, %v1234
  %v1238 = vmul.f32 %v1228, %v1234
  %v1239 = vmul.f32 %v1229, %v1234
  %v1241 = vlaneseq
  %v1242 = vshrl.u32 %v1241, 7
  %v1243 = vsub.s32 0, %v1242
  %v1244 = vrot.slane %v1176, %v1243
  %v1246 = vadd.f32 %v1236, %v1244
  %v1247 = vadd.f32 %v1237, %v1244
  %v1248 = vadd.f32 %v1238, %v1244
  %v1249 = vadd.f32 %v1239, %v1244
  %1250 = vst.msk [vmem:[%s16] sm:$0xff] %vm93, %v1246
  %1251 = vst.msk [vmem:[%s16 + $0x8] sm:$0xff] %vm93, %v1247
  %1252 = vst.msk [vmem:[%s16 + $0x10] sm:$0xff] %vm93, %v1248
  %1253 = vst.msk [vmem:[%s16 + $0x18] sm:$0xff] %vm93, %v1249
  // Predicated region
  $region66: #{salience_encoder_layer_forward.3} parent=0 // pred_check
    _
  $region67: #{salience_encoder_layer_forward.3} parent=0 // pred_check_branch
    %1255 = sbr.rel (0) target = $region69
  $region68: #{salience_encoder_layer_forward.3} parent=0 // pred_region
    _
  $region69: #{salience_encoder_layer_forward.3} parent=0 // pred_fallthru
    _
  // Predicated region
  $region70: #{salience_encoder_layer_forward.3} parent=0 // pred_check
    _
  $region71: #{salience_encoder_layer_forward.3} parent=0 // pred_check_branch
    %1257 = sbr.rel (0) target = $region73
  $region72: #{salience_encoder_layer_forward.3} parent=0 // pred_region
    _
  $region73: #{salience_encoder_layer_forward.3} parent=0 // pred_fallthru
    _

// kernel: salience_encoder_layer_forward.5
$region0: #{salience_encoder_layer_forward.5}
  #allocation0 [shape = 'u32[]', space=smem, size = 0x4, offset = 0x4, fixed_abs, tag = 'smem constant byte address 0x4 - core index']
  #allocation1 [shape = 'u32[144,128]{1,0:T(1,128)}', space=vmem, size = 0x12000, scoped, tag = 'internal scratch']
  %s0 = inlined_call_operand.vmem [shape: f32[160,32], index: 0, kind: input, shape index: {}]
  %s1 = inlined_call_operand.vmem [shape: bf16[160,512], index: 1, kind: input, shape index: {}]
  %s2 = inlined_call_operand.vmem [shape: bf16[512,32], index: 2, kind: input, shape index: {}]
  %s3 = inlined_call_operand.vmem [shape: bf16[160,128], index: 3, kind: input, shape index: {}]
  %s4 = inlined_call_operand.vmem [shape: bf16[128,32], index: 4, kind: input, shape index: {}]
  %s5 = inlined_call_operand.vmem [shape: bf16[32,32], index: 5, kind: input, shape index: {}]
  %s6 = inlined_call_operand.vmem [shape: f32[1,32], index: 6, kind: input, shape index: {}]
  %s7 = inlined_call_operand.vmem [shape: f32[1,32], index: 7, kind: input, shape index: {}]
  %s8 = inlined_call_operand.vmem [shape: f32[1,32], index: 8, kind: input, shape index: {}]
  %s9 = inlined_call_operand.vmem [shape: bf16[32,64], index: 9, kind: input, shape index: {}]
  %s10 = inlined_call_operand.vmem [shape: f32[1,64], index: 10, kind: input, shape index: {}]
  %s11 = inlined_call_operand.vmem [shape: bf16[64,32], index: 11, kind: input, shape index: {}]
  %s12 = inlined_call_operand.vmem [shape: f32[1,32], index: 12, kind: input, shape index: {}]
  %s13 = inlined_call_operand.vmem [shape: f32[1,32], index: 13, kind: input, shape index: {}]
  %s14 = inlined_call_operand.vmem [shape: f32[1,32], index: 14, kind: input, shape index: {}]
  %s15 = inlined_call_operand.vmem [shape: f32[160,32], index: 15, kind: output, shape index: {}]
  %s16 = sld [smem:[#allocation0]]
  $region93: #{salience_encoder_layer_forward.5} parent=0
    _
  %s18 = ssub.s32 1, %s16
  %s19 = scalar_select 0, %s18, %s16
  loop: start=0, step=1, limit=4
  $region2: #{salience_encoder_layer_forward.5} parent=0 // loop_pre_header
    _
  $region3: #{salience_encoder_layer_forward.5} parent=0 // loop_header
    %s21 = sphi 0, %s25
    %p22 = scmp.ge.s32.totalorder %s21, 4
    %s31 = sphi 0, %s33
    %s34 = sphi 0, %s31
    %s35 = sphi 0, %s34
    %s51 = sphi 0, %s35
    %s57 = sphi 0, %s59
    %s60 = sphi 0, %s57
    %s61 = sphi 0, %s60
    %s77 = sphi 0, %s61
    %s81 = sphi 0, %s81
    %s83 = sphi 0, %s81
    %s84 = sphi 0, %s83
    %s98 = sphi 0, %s84
    %s104 = sphi 0, %s106
    %s107 = sphi 0, %s104
    %s108 = sphi 0, %s107
    %s124 = sphi 0, %s108
    %s128 = sphi 0, %s128
    %s130 = sphi 0, %s128
    %s131 = sphi 0, %s130
    %s145 = sphi 0, %s131
    %s149 = sphi 0, %s149
    %s151 = sphi 0, %s149
    %s152 = sphi 0, %s151
    %s166 = sphi 0, %s152
    %s170 = sphi 0, %s170
    %s172 = sphi 0, %s170
    %s173 = sphi 0, %s172
    %s187 = sphi 0, %s173
    %s191 = sphi 0, %s191
    %s193 = sphi 0, %s191
    %s194 = sphi 0, %s193
    %s208 = sphi 0, %s194
    %s212 = sphi 0, %s212
    %s214 = sphi 0, %s212
    %s215 = sphi 0, %s214
    %s229 = sphi 0, %s215
    %s233 = sphi 0, %s233
    %s235 = sphi 0, %s233
    %s236 = sphi 0, %s235
    %s250 = sphi 0, %s236
    %s254 = sphi 0, %s254
    %s256 = sphi 0, %s254
    %s257 = sphi 0, %s256
    %s271 = sphi 0, %s257
    %s275 = sphi 0, %s275
    %s277 = sphi 0, %s275
    %s278 = sphi 0, %s277
    %s292 = sphi 0, %s278
    %s296 = sphi 0, %s296
    %s298 = sphi 0, %s296
    %s299 = sphi 0, %s298
    %s313 = sphi 0, %s299
    %s317 = sphi 0, %s317
    %s319 = sphi 0, %s317
    %s320 = sphi 0, %s319
    %s334 = sphi 0, %s320
    %s338 = sphi 0, %s338
    %s340 = sphi 0, %s338
    %s341 = sphi 0, %s340
    %s355 = sphi 0, %s341
    %s361 = sphi 0, %s363
    %s364 = sphi 0, %s361
    %s365 = sphi 0, %s364
    %s381 = sphi 0, %s365
  $region4: #{salience_encoder_layer_forward.5} parent=0 // loop_header_branch
    %24 = sbr.rel (%p22) target = $region8
  $region5: #{salience_encoder_layer_forward.5} parent=0 // loop_body
    %s26 = ssub.s32 %s21, 1
    %s27 = ssub.s32 %s21, 2
    %s28 = sadd.s32 %s21, 1
    %s29 = ssub.s32 %s21, %s28
    %p30 = scmp.eq.s32.totalorder %s29, 0
    %s32 = sadd.s32 %s31, 1
    %s33 = scalar_select %p30, %s31, %s32
    %p36 = pneg %p30
    %p37 = scmp.eq.s32.totalorder %s21, 1
    %p38 = por %p36, %p37
    %p39 = scmp.ne.s32.totalorder %s31, %s34
    %p40 = scmp.eq.s32.totalorder %s21, 0
    %p41 = por %p39, %p40
    %p42 = scmp.ne.s32.totalorder %s31, %s34
    %p43 = scmp.eq.s32.totalorder %s26, 1
    %p44 = por %p42, %p43
    %p45 = scmp.ne.s32.totalorder %s34, %s35
    %p46 = scmp.eq.s32.totalorder %s26, 0
    %p47 = por %p45, %p46
    %p48 = scmp.ne.s32.totalorder %s34, %s35
    %p49 = scmp.eq.s32.totalorder %s27, 1
    %p50 = por %p48, %p49
    %p52 = scmp.ne.s32.totalorder %s35, %s51
    %p53 = scmp.eq.s32.totalorder %s27, 0
    %p54 = por %p52, %p53
    %s55 = ssub.s32 %s21, %s28
    %p56 = scmp.eq.s32.totalorder %s55, 0
    %s58 = sadd.s32 %s57, 1
    %s59 = scalar_select %p56, %s57, %s58
    %p62 = pneg %p56
    %p63 = scmp.eq.s32.totalorder %s21, 1
    %p64 = por %p62, %p63
    %p65 = scmp.ne.s32.totalorder %s57, %s60
    %p66 = scmp.eq.s32.totalorder %s21, 0
    %p67 = por %p65, %p66
    %p68 = scmp.ne.s32.totalorder %s57, %s60
    %p69 = scmp.eq.s32.totalorder %s26, 1
    %p70 = por %p68, %p69
    %p71 = scmp.ne.s32.totalorder %s60, %s61
    %p72 = scmp.eq.s32.totalorder %s26, 0
    %p73 = por %p71, %p72
    %p74 = scmp.ne.s32.totalorder %s60, %s61
    %p75 = scmp.eq.s32.totalorder %s27, 1
    %p76 = por %p74, %p75
    %p78 = scmp.ne.s32.totalorder %s61, %s77
    %p79 = scmp.eq.s32.totalorder %s27, 0
    %p80 = por %p78, %p79
    %s82 = sadd.s32 %s81, 1
    %p85 = scmp.eq.s32.totalorder %s21, 1
    %p86 = scmp.ne.s32.totalorder %s81, %s83
    %p87 = scmp.eq.s32.totalorder %s21, 0
    %p88 = por %p86, %p87
    %p89 = scmp.ne.s32.totalorder %s81, %s83
    %p90 = scmp.eq.s32.totalorder %s26, 1
    %p91 = por %p89, %p90
    %p92 = scmp.ne.s32.totalorder %s83, %s84
    %p93 = scmp.eq.s32.totalorder %s26, 0
    %p94 = por %p92, %p93
    %p95 = scmp.ne.s32.totalorder %s83, %s84
    %p96 = scmp.eq.s32.totalorder %s27, 1
    %p97 = por %p95, %p96
    %p99 = scmp.ne.s32.totalorder %s84, %s98
    %p100 = scmp.eq.s32.totalorder %s27, 0
    %p101 = por %p99, %p100
    %s102 = ssub.s32 %s21, %s28
    %p103 = scmp.eq.s32.totalorder %s102, 0
    %s105 = sadd.s32 %s104, 1
    %s106 = scalar_select %p103, %s104, %s105
    %p109 = pneg %p103
    %p110 = scmp.eq.s32.totalorder %s21, 1
    %p111 = por %p109, %p110
    %p112 = scmp.ne.s32.totalorder %s104, %s107
    %p113 = scmp.eq.s32.totalorder %s21, 0
    %p114 = por %p112, %p113
    %p115 = scmp.ne.s32.totalorder %s104, %s107
    %p116 = scmp.eq.s32.totalorder %s26, 1
    %p117 = por %p115, %p116
    %p118 = scmp.ne.s32.totalorder %s107, %s108
    %p119 = scmp.eq.s32.totalorder %s26, 0
    %p120 = por %p118, %p119
    %p121 = scmp.ne.s32.totalorder %s107, %s108
    %p122 = scmp.eq.s32.totalorder %s27, 1
    %p123 = por %p121, %p122
    %p125 = scmp.ne.s32.totalorder %s108, %s124
    %p126 = scmp.eq.s32.totalorder %s27, 0
    %p127 = por %p125, %p126
    %s129 = sadd.s32 %s128, 1
    %p132 = scmp.eq.s32.totalorder %s21, 1
    %p133 = scmp.ne.s32.totalorder %s128, %s130
    %p134 = scmp.eq.s32.totalorder %s21, 0
    %p135 = por %p133, %p134
    %p136 = scmp.ne.s32.totalorder %s128, %s130
    %p137 = scmp.eq.s32.totalorder %s26, 1
    %p138 = por %p136, %p137
    %p139 = scmp.ne.s32.totalorder %s130, %s131
    %p140 = scmp.eq.s32.totalorder %s26, 0
    %p141 = por %p139, %p140
    %p142 = scmp.ne.s32.totalorder %s130, %s131
    %p143 = scmp.eq.s32.totalorder %s27, 1
    %p144 = por %p142, %p143
    %p146 = scmp.ne.s32.totalorder %s131, %s145
    %p147 = scmp.eq.s32.totalorder %s27, 0
    %p148 = por %p146, %p147
    %s150 = sadd.s32 %s149, 1
    %p153 = scmp.eq.s32.totalorder %s21, 1
    %p154 = scmp.ne.s32.totalorder %s149, %s151
    %p155 = scmp.eq.s32.totalorder %s21, 0
    %p156 = por %p154, %p155
    %p157 = scmp.ne.s32.totalorder %s149, %s151
    %p158 = scmp.eq.s32.totalorder %s26, 1
    %p159 = por %p157, %p158
    %p160 = scmp.ne.s32.totalorder %s151, %s152
    %p161 = scmp.eq.s32.totalorder %s26, 0
    %p162 = por %p160, %p161
    %p163 = scmp.ne.s32.totalorder %s151, %s152
    %p164 = scmp.eq.s32.totalorder %s27, 1
    %p165 = por %p163, %p164
    %p167 = scmp.ne.s32.totalorder %s152, %s166
    %p168 = scmp.eq.s32.totalorder %s27, 0
    %p169 = por %p167, %p168
    %s171 = sadd.s32 %s170, 1
    %p174 = scmp.eq.s32.totalorder %s21, 1
    %p175 = scmp.ne.s32.totalorder %s170, %s172
    %p176 = scmp.eq.s32.totalorder %s21, 0
    %p177 = por %p175, %p176
    %p178 = scmp.ne.s32.totalorder %s170, %s172
    %p179 = scmp.eq.s32.totalorder %s26, 1
    %p180 = por %p178, %p179
    %p181 = scmp.ne.s32.totalorder %s172, %s173
    %p182 = scmp.eq.s32.totalorder %s26, 0
    %p183 = por %p181, %p182
    %p184 = scmp.ne.s32.totalorder %s172, %s173
    %p185 = scmp.eq.s32.totalorder %s27, 1
    %p186 = por %p184, %p185
    %p188 = scmp.ne.s32.totalorder %s173, %s187
    %p189 = scmp.eq.s32.totalorder %s27, 0
    %p190 = por %p188, %p189
    %s192 = sadd.s32 %s191, 1
    %p195 = scmp.eq.s32.totalorder %s21, 1
    %p196 = scmp.ne.s32.totalorder %s191, %s193
    %p197 = scmp.eq.s32.totalorder %s21, 0
    %p198 = por %p196, %p197
    %p199 = scmp.ne.s32.totalorder %s191, %s193
    %p200 = scmp.eq.s32.totalorder %s26, 1
    %p201 = por %p199, %p200
    %p202 = scmp.ne.s32.totalorder %s193, %s194
    %p203 = scmp.eq.s32.totalorder %s26, 0
    %p204 = por %p202, %p203
    %p205 = scmp.ne.s32.totalorder %s193, %s194
    %p206 = scmp.eq.s32.totalorder %s27, 1
    %p207 = por %p205, %p206
    %p209 = scmp.ne.s32.totalorder %s194, %s208
    %p210 = scmp.eq.s32.totalorder %s27, 0
    %p211 = por %p209, %p210
    %s213 = sadd.s32 %s212, 1
    %p216 = scmp.eq.s32.totalorder %s21, 1
    %p217 = scmp.ne.s32.totalorder %s212, %s214
    %p218 = scmp.eq.s32.totalorder %s21, 0
    %p219 = por %p217, %p218
    %p220 = scmp.ne.s32.totalorder %s212, %s214
    %p221 = scmp.eq.s32.totalorder %s26, 1
    %p222 = por %p220, %p221
    %p223 = scmp.ne.s32.totalorder %s214, %s215
    %p224 = scmp.eq.s32.totalorder %s26, 0
    %p225 = por %p223, %p224
    %p226 = scmp.ne.s32.totalorder %s214, %s215
    %p227 = scmp.eq.s32.totalorder %s27, 1
    %p228 = por %p226, %p227
    %p230 = scmp.ne.s32.totalorder %s215, %s229
    %p231 = scmp.eq.s32.totalorder %s27, 0
    %p232 = por %p230, %p231
    %s234 = sadd.s32 %s233, 1
    %p237 = scmp.eq.s32.totalorder %s21, 1
    %p238 = scmp.ne.s32.totalorder %s233, %s235
    %p239 = scmp.eq.s32.totalorder %s21, 0
    %p240 = por %p238, %p239
    %p241 = scmp.ne.s32.totalorder %s233, %s235
    %p242 = scmp.eq.s32.totalorder %s26, 1
    %p243 = por %p241, %p242
    %p244 = scmp.ne.s32.totalorder %s235, %s236
    %p245 = scmp.eq.s32.totalorder %s26, 0
    %p246 = por %p244, %p245
    %p247 = scmp.ne.s32.totalorder %s235, %s236
    %p248 = scmp.eq.s32.totalorder %s27, 1
    %p249 = por %p247, %p248
    %p251 = scmp.ne.s32.totalorder %s236, %s250
    %p252 = scmp.eq.s32.totalorder %s27, 0
    %p253 = por %p251, %p252
    %s255 = sadd.s32 %s254, 1
    %p258 = scmp.eq.s32.totalorder %s21, 1
    %p259 = scmp.ne.s32.totalorder %s254, %s256
    %p260 = scmp.eq.s32.totalorder %s21, 0
    %p261 = por %p259, %p260
    %p262 = scmp.ne.s32.totalorder %s254, %s256
    %p263 = scmp.eq.s32.totalorder %s26, 1
    %p264 = por %p262, %p263
    %p265 = scmp.ne.s32.totalorder %s256, %s257
    %p266 = scmp.eq.s32.totalorder %s26, 0
    %p267 = por %p265, %p266
    %p268 = scmp.ne.s32.totalorder %s256, %s257
    %p269 = scmp.eq.s32.totalorder %s27, 1
    %p270 = por %p268, %p269
    %p272 = scmp.ne.s32.totalorder %s257, %s271
    %p273 = scmp.eq.s32.totalorder %s27, 0
    %p274 = por %p272, %p273
    %s276 = sadd.s32 %s275, 1
    %p279 = scmp.eq.s32.totalorder %s21, 1
    %p280 = scmp.ne.s32.totalorder %s275, %s277
    %p281 = scmp.eq.s32.totalorder %s21, 0
    %p282 = por %p280, %p281
    %p283 = scmp.ne.s32.totalorder %s275, %s277
    %p284 = scmp.eq.s32.totalorder %s26, 1
    %p285 = por %p283, %p284
    %p286 = scmp.ne.s32.totalorder %s277, %s278
    %p287 = scmp.eq.s32.totalorder %s26, 0
    %p288 = por %p286, %p287
    %p289 = scmp.ne.s32.totalorder %s277, %s278
    %p290 = scmp.eq.s32.totalorder %s27, 1
    %p291 = por %p289, %p290
    %p293 = scmp.ne.s32.totalorder %s278, %s292
    %p294 = scmp.eq.s32.totalorder %s27, 0
    %p295 = por %p293, %p294
    %s297 = sadd.s32 %s296, 1
    %p300 = scmp.eq.s32.totalorder %s21, 1
    %p301 = scmp.ne.s32.totalorder %s296, %s298
    %p302 = scmp.eq.s32.totalorder %s21, 0
    %p303 = por %p301, %p302
    %p304 = scmp.ne.s32.totalorder %s296, %s298
    %p305 = scmp.eq.s32.totalorder %s26, 1
    %p306 = por %p304, %p305
    %p307 = scmp.ne.s32.totalorder %s298, %s299
    %p308 = scmp.eq.s32.totalorder %s26, 0
    %p309 = por %p307, %p308
    %p310 = scmp.ne.s32.totalorder %s298, %s299
    %p311 = scmp.eq.s32.totalorder %s27, 1
    %p312 = por %p310, %p311
    %p314 = scmp.ne.s32.totalorder %s299, %s313
    %p315 = scmp.eq.s32.totalorder %s27, 0
    %p316 = por %p314, %p315
    %s318 = sadd.s32 %s317, 1
    %p321 = scmp.eq.s32.totalorder %s21, 1
    %p322 = scmp.ne.s32.totalorder %s317, %s319
    %p323 = scmp.eq.s32.totalorder %s21, 0
    %p324 = por %p322, %p323
    %p325 = scmp.ne.s32.totalorder %s317, %s319
    %p326 = scmp.eq.s32.totalorder %s26, 1
    %p327 = por %p325, %p326
    %p328 = scmp.ne.s32.totalorder %s319, %s320
    %p329 = scmp.eq.s32.totalorder %s26, 0
    %p330 = por %p328, %p329
    %p331 = scmp.ne.s32.totalorder %s319, %s320
    %p332 = scmp.eq.s32.totalorder %s27, 1
    %p333 = por %p331, %p332
    %p335 = scmp.ne.s32.totalorder %s320, %s334
    %p336 = scmp.eq.s32.totalorder %s27, 0
    %p337 = por %p335, %p336
    %s339 = sadd.s32 %s338, 1
    %p342 = scmp.eq.s32.totalorder %s21, 1
    %p343 = scmp.ne.s32.totalorder %s338, %s340
    %p344 = scmp.eq.s32.totalorder %s21, 0
    %p345 = por %p343, %p344
    %p346 = scmp.ne.s32.totalorder %s338, %s340
    %p347 = scmp.eq.s32.totalorder %s26, 1
    %p348 = por %p346, %p347
    %p349 = scmp.ne.s32.totalorder %s340, %s341
    %p350 = scmp.eq.s32.totalorder %s26, 0
    %p351 = por %p349, %p350
    %p352 = scmp.ne.s32.totalorder %s340, %s341
    %p353 = scmp.eq.s32.totalorder %s27, 1
    %p354 = por %p352, %p353
    %p356 = scmp.ne.s32.totalorder %s341, %s355
    %p357 = scmp.eq.s32.totalorder %s27, 0
    %p358 = por %p356, %p357
    %s359 = ssub.s32 %s21, %s28
    %p360 = scmp.eq.s32.totalorder %s359, 0
    %s362 = sadd.s32 %s361, 1
    %s363 = scalar_select %p360, %s361, %s362
    %p366 = pneg %p360
    %p367 = scmp.eq.s32.totalorder %s21, 1
    %p368 = por %p366, %p367
    %p369 = scmp.ne.s32.totalorder %s361, %s364
    %p370 = scmp.eq.s32.totalorder %s21, 0
    %p371 = por %p369, %p370
    %p372 = scmp.ne.s32.totalorder %s361, %s364
    %p373 = scmp.eq.s32.totalorder %s26, 1
    %p374 = por %p372, %p373
    %p375 = scmp.ne.s32.totalorder %s364, %s365
    %p376 = scmp.eq.s32.totalorder %s26, 0
    %p377 = por %p375, %p376
    %p378 = scmp.ne.s32.totalorder %s364, %s365
    %p379 = scmp.eq.s32.totalorder %s27, 1
    %p380 = por %p378, %p379
    %p382 = scmp.ne.s32.totalorder %s365, %s381
    %p383 = scmp.eq.s32.totalorder %s27, 0
    %p384 = por %p382, %p383
    %p385 = scmp.le.s32.totalorder 1, %s21
    %p386 = scmp.lt.s32.totalorder %s21, 3
    %p387 = pnand %p385, %p386
    %p388 = pneg %p387
    // Predicated region
    $region9: #{salience_encoder_layer_forward.5} parent=5 // pred_check
      _
    $region10: #{salience_encoder_layer_forward.5} parent=5 // pred_check_branch
      %390 = sbr.rel (%p387) target = $region12
    $region11: #{salience_encoder_layer_forward.5} parent=5 // pred_region
      %s391 = ssub.s32 %s21, 1
      // Predicated region
      $region13: #{salience_encoder_layer_forward.5} parent=11 // pred_check
        %p392 = pneg %p94
      $region14: #{salience_encoder_layer_forward.5} parent=11 // pred_check_branch
        %394 = sbr.rel (%p392) target = $region16
      $region15: #{salience_encoder_layer_forward.5} parent=11 // pred_region
        _
      $region16: #{salience_encoder_layer_forward.5} parent=11 // pred_fallthru
        _
      // Predicated region
      $region17: #{salience_encoder_layer_forward.5} parent=11 // pred_check
        %p395 = pneg %p141
      $region18: #{salience_encoder_layer_forward.5} parent=11 // pred_check_branch
        %397 = sbr.rel (%p395) target = $region20
      $region19: #{salience_encoder_layer_forward.5} parent=11 // pred_region
        _
      $region20: #{salience_encoder_layer_forward.5} parent=11 // pred_fallthru
        _
      // Predicated region
      $region21: #{salience_encoder_layer_forward.5} parent=11 // pred_check
        %p398 = pneg %p162
      $region22: #{salience_encoder_layer_forward.5} parent=11 // pred_check_branch
        %400 = sbr.rel (%p398) target = $region24
      $region23: #{salience_encoder_layer_forward.5} parent=11 // pred_region
        _
      $region24: #{salience_encoder_layer_forward.5} parent=11 // pred_fallthru
        _
      // Predicated region
      $region25: #{salience_encoder_layer_forward.5} parent=11 // pred_check
        %p401 = pneg %p183
      $region26: #{salience_encoder_layer_forward.5} parent=11 // pred_check_branch
        %403 = sbr.rel (%p401) target = $region28
      $region27: #{salience_encoder_layer_forward.5} parent=11 // pred_region
        _
      $region28: #{salience_encoder_layer_forward.5} parent=11 // pred_fallthru
        _
      // Predicated region
      $region29: #{salience_encoder_layer_forward.5} parent=11 // pred_check
        %p404 = pneg %p204
      $region30: #{salience_encoder_layer_forward.5} parent=11 // pred_check_branch
        %406 = sbr.rel (%p404) target = $region32
      $region31: #{salience_encoder_layer_forward.5} parent=11 // pred_region
        _
      $region32: #{salience_encoder_layer_forward.5} parent=11 // pred_fallthru
        _
      // Predicated region
      $region33: #{salience_encoder_layer_forward.5} parent=11 // pred_check
        %p407 = pneg %p225
      $region34: #{salience_encoder_layer_forward.5} parent=11 // pred_check_branch
        %409 = sbr.rel (%p407) target = $region36
      $region35: #{salience_encoder_layer_forward.5} parent=11 // pred_region
        _
      $region36: #{salience_encoder_layer_forward.5} parent=11 // pred_fallthru
        _
      // Predicated region
      $region37: #{salience_encoder_layer_forward.5} parent=11 // pred_check
        %p410 = pneg %p246
      $region38: #{salience_encoder_layer_forward.5} parent=11 // pred_check_branch
        %412 = sbr.rel (%p410) target = $region40
      $region39: #{salience_encoder_layer_forward.5} parent=11 // pred_region
        _
      $region40: #{salience_encoder_layer_forward.5} parent=11 // pred_fallthru
        _
      // Predicated region
      $region41: #{salience_encoder_layer_forward.5} parent=11 // pred_check
        %p413 = pneg %p267
      $region42: #{salience_encoder_layer_forward.5} parent=11 // pred_check_branch
        %415 = sbr.rel (%p413) target = $region44
      $region43: #{salience_encoder_layer_forward.5} parent=11 // pred_region
        _
      $region44: #{salience_encoder_layer_forward.5} parent=11 // pred_fallthru
        _
      // Predicated region
      $region45: #{salience_encoder_layer_forward.5} parent=11 // pred_check
        %p416 = pneg %p288
      $region46: #{salience_encoder_layer_forward.5} parent=11 // pred_check_branch
        %418 = sbr.rel (%p416) target = $region48
      $region47: #{salience_encoder_layer_forward.5} parent=11 // pred_region
        _
      $region48: #{salience_encoder_layer_forward.5} parent=11 // pred_fallthru
        _
      // Predicated region
      $region49: #{salience_encoder_layer_forward.5} parent=11 // pred_check
        %p419 = pneg %p309
      $region50: #{salience_encoder_layer_forward.5} parent=11 // pred_check_branch
        %421 = sbr.rel (%p419) target = $region52
      $region51: #{salience_encoder_layer_forward.5} parent=11 // pred_region
        _
      $region52: #{salience_encoder_layer_forward.5} parent=11 // pred_fallthru
        _
      // Predicated region
      $region53: #{salience_encoder_layer_forward.5} parent=11 // pred_check
        %p422 = pneg %p330
      $region54: #{salience_encoder_layer_forward.5} parent=11 // pred_check_branch
        %424 = sbr.rel (%p422) target = $region56
      $region55: #{salience_encoder_layer_forward.5} parent=11 // pred_region
        _
      $region56: #{salience_encoder_layer_forward.5} parent=11 // pred_fallthru
        _
      // Predicated region
      $region57: #{salience_encoder_layer_forward.5} parent=11 // pred_check
        %p425 = pneg %p351
      $region58: #{salience_encoder_layer_forward.5} parent=11 // pred_check_branch
        %427 = sbr.rel (%p425) target = $region60
      $region59: #{salience_encoder_layer_forward.5} parent=11 // pred_region
        _
      $region60: #{salience_encoder_layer_forward.5} parent=11 // pred_fallthru
        _
    $region12: #{salience_encoder_layer_forward.5} parent=5 // pred_fallthru
      _
    %p428 = scmp.lt.s32.totalorder %s21, 2
    // Predicated region
    $region61: #{salience_encoder_layer_forward.5} parent=5 // pred_check
      %p429 = pneg %p428
    $region62: #{salience_encoder_layer_forward.5} parent=5 // pred_check_branch
      %431 = sbr.rel (%p429) target = $region64
    $region63: #{salience_encoder_layer_forward.5} parent=5 // pred_region
      // Predicated region
      $region65: #{salience_encoder_layer_forward.5} parent=63 // pred_check
        %p432 = pneg %p41
      $region66: #{salience_encoder_layer_forward.5} parent=63 // pred_check_branch
        %434 = sbr.rel (%p432) target = $region68
      $region67: #{salience_encoder_layer_forward.5} parent=63 // pred_region
        %s435 = smul.u32 10, %s21
        %p436 = scmp.lt.s32.totalorder %s435, 19
        %s437 = scalar_select %p436, %s435, 19
        %s438 = smul.addr %s437, 8
        %s439 = scalar_lea.vmem %s0, %s438
        %s440 = smul.u32 10, %s21
      $region68: #{salience_encoder_layer_forward.5} parent=63 // pred_fallthru
        _
      // Predicated region
      $region69: #{salience_encoder_layer_forward.5} parent=63 // pred_check
        %p441 = pneg %p67
      $region70: #{salience_encoder_layer_forward.5} parent=63 // pred_check_branch
        %443 = sbr.rel (%p441) target = $region72
      $region71: #{salience_encoder_layer_forward.5} parent=63 // pred_region
        %s444 = smul.u32 10, %s21
        %p445 = scmp.lt.s32.totalorder %s444, 19
        %s446 = scalar_select %p445, %s444, 19
        %s447 = smul.addr %s446, 4
        %s448 = smul.addr %s447, 4
        %s449 = scalar_lea.vmem %s1, %s448
        %s450 = smul.u32 10, %s21
      $region72: #{salience_encoder_layer_forward.5} parent=63 // pred_fallthru
        _
      // Predicated region
      $region73: #{salience_encoder_layer_forward.5} parent=63 // pred_check
        %p451 = pneg %p114
      $region74: #{salience_encoder_layer_forward.5} parent=63 // pred_check_branch
        %453 = sbr.rel (%p451) target = $region76
      $region75: #{salience_encoder_layer_forward.5} parent=63 // pred_region
        %s454 = smul.u32 10, %s21
        %p455 = scmp.lt.s32.totalorder %s454, 19
        %s456 = scalar_select %p455, %s454, 19
        %s457 = smul.addr %s456, 4
        %s458 = scalar_lea.vmem %s3, %s457
        %s459 = smul.u32 10, %s21
      $region76: #{salience_encoder_layer_forward.5} parent=63 // pred_fallthru
        _
    $region64: #{salience_encoder_layer_forward.5} parent=5 // pred_fallthru
      _
    %p460 = scmp.le.s32.totalorder 1, %s21
    %p461 = scmp.lt.s32.totalorder %s21, 3
    %p462 = pnand %p460, %p461
    %p463 = pneg %p462
    // Predicated region
    $region77: #{salience_encoder_layer_forward.5} parent=5 // pred_check
      _
    $region78: #{salience_encoder_layer_forward.5} parent=5 // pred_check_branch
      %465 = sbr.rel (%p462) target = $region80
    $region79: #{salience_encoder_layer_forward.5} parent=5 // pred_region
      %s466 = ssub.s32 %s21, 1
      %s467 = smul.u32 10, %s26
      %p468 = scmp.lt.s32.totalorder %s467, 19
      %s469 = scalar_select %p468, %s467, 19
      %s470 = smul.addr %s469, 8
      %s471 = scalar_lea.vmem %s0, %s470
      %p472 = pneg %p47
      %p473 = pneg %p44
      %s474 = smul.u32 10, %s26
      %p475 = scmp.lt.s32.totalorder %s474, 19
      %s476 = scalar_select %p475, %s474, 19
      %s477 = smul.addr %s476, 4
      %s478 = smul.addr %s477, 4
      %s479 = scalar_lea.vmem %s1, %s478
      %p480 = pneg %p73
      %p481 = pneg %p70
      %p482 = pneg %p94
      %p483 = pneg %p91
      %s484 = smul.u32 10, %s26
      %p485 = scmp.lt.s32.totalorder %s484, 19
      %s486 = scalar_select %p485, %s484, 19
      %s487 = smul.addr %s486, 4
      %s488 = scalar_lea.vmem %s3, %s487
      %p489 = pneg %p120
      %p490 = pneg %p117
      %p491 = pneg %p141
      %p492 = pneg %p138
      %p493 = pneg %p162
      %p494 = pneg %p159
      %p495 = pneg %p183
      %p496 = pneg %p180
      %p497 = pneg %p204
      %p498 = pneg %p201
      %p499 = pneg %p225
      %p500 = pneg %p222
      %p501 = pneg %p246
      %p502 = pneg %p243
      %p503 = pneg %p267
      %p504 = pneg %p264
      %p505 = pneg %p288
      %p506 = pneg %p285
      %p507 = pneg %p309
      %p508 = pneg %p306
      %p509 = pneg %p330
      %p510 = pneg %p327
      %p511 = pneg %p351
      %p512 = pneg %p348
      %p513 = pneg %p377
      %p514 = pneg %p374
      %s515 = smul.u32 10, %s26
      %p516 = scmp.lt.s32.totalorder %s515, 19
      %s517 = scalar_select %p516, %s515, 19
      %s518 = smul.addr %s517, 8
      %s519 = scalar_lea.vmem %s15, %s518
      %s520 = smul.u32 10, %s26
      %p521 = scmp.lt.s32.totalorder %s520, 19
      %s522 = scalar_select %p521, %s520, 19
      %s523 = smul.addr %s522, 8
      %s524 = scalar_lea.vmem %s0, %s523
      %s525 = smul.u32 10, %s26
      %s526 = smul.u32 10, %s26
      %p527 = scmp.lt.s32.totalorder %s526, 19
      %s528 = scalar_select %p527, %s526, 19
      %s529 = smul.addr %s528, 4
      %s530 = smul.addr %s529, 4
      %s531 = scalar_lea.vmem %s1, %s530
      %s532 = smul.u32 10, %s26
      %s533 = smul.u32 10, %s26
      %p534 = scmp.lt.s32.totalorder %s533, 19
      %s535 = scalar_select %p534, %s533, 19
      %s536 = smul.addr %s535, 4
      %s537 = scalar_lea.vmem %s3, %s536
      %s538 = smul.u32 10, %s26
      %s539 = smul.u32 10, %s26
      %p540 = scmp.lt.s32.totalorder %s539, 19
      %s541 = scalar_select %p540, %s539, 19
      %s542 = smul.addr %s541, 8
      %s543 = scalar_lea.vmem %s15, %s542
      %s544 = smul.u32 10, %s26
      %v546 = vld [vmem:[%s524] sm:$0xff]
      %v547 = vld [vmem:[%s524 + $0x8] sm:$0xff]
      %v548 = vld [vmem:[%s524 + $0x10] sm:$0xff]
      %v549 = vld [vmem:[%s524 + $0x18] sm:$0xff]
      %v550 = vld [vmem:[%s524 + $0x20] sm:$0xff]
      %v551 = vld [vmem:[%s524 + $0x28] sm:$0xff]
      %v552 = vld [vmem:[%s524 + $0x30] sm:$0xff]
      %v553 = vld [vmem:[%s524 + $0x38] sm:$0xff]
      %v554 = vld [vmem:[%s524 + $0x40] sm:$0xff]
      %v555 = vld [vmem:[%s524 + $0x48] sm:$0xff]
      %v556 = vld [vmem:[%s531] sm:$0xff]
      %v557 = vld [vmem:[%s531 + $0x8] sm:$0xff]
      %v558 = vld [vmem:[%s531 + $0x10] sm:$0xff]
      %v559 = vld [vmem:[%s531 + $0x18] sm:$0xff]
      %v560 = vld [vmem:[%s531 + $0x20] sm:$0xff]
      %v561 = vld [vmem:[%s531 + $0x28] sm:$0xff]
      %v562 = vld [vmem:[%s531 + $0x30] sm:$0xff]
      %v563 = vld [vmem:[%s531 + $0x38] sm:$0xff]
      %v564 = vld [vmem:[%s531 + $0x40] sm:$0xff]
      %v565 = vld [vmem:[%s531 + $0x48] sm:$0xff]
      %v566 = vld [vmem:[%s531 + $0x50] sm:$0xff]
      %v567 = vld [vmem:[%s531 + $0x58] sm:$0xff]
      %v568 = vld [vmem:[%s531 + $0x60] sm:$0xff]
      %v569 = vld [vmem:[%s531 + $0x68] sm:$0xff]
      %v570 = vld [vmem:[%s531 + $0x70] sm:$0xff]
      %v571 = vld [vmem:[%s531 + $0x78] sm:$0xff]
      %v572 = vld [vmem:[%s531 + $0x80] sm:$0xff]
      %v573 = vld [vmem:[%s531 + $0x88] sm:$0xff]
      %v574 = vld [vmem:[%s531 + $0x90] sm:$0xff]
      %v575 = vld [vmem:[%s531 + $0x98] sm:$0xff]
      %v576 = vld [vmem:[%s2] sm:$0xf]
      %v577 = vld [vmem:[%s2 + $0x4] sm:$0xf]
      %v578 = vld [vmem:[%s2 + $0x8] sm:$0xf]
      %v579 = vld [vmem:[%s2 + $0xc] sm:$0xf]
      %v580 = vld [vmem:[%s2 + $0x10] sm:$0xf]
      %v581 = vld [vmem:[%s2 + $0x14] sm:$0xf]
      %v582 = vld [vmem:[%s2 + $0x18] sm:$0xf]
      %v583 = vld [vmem:[%s2 + $0x1c] sm:$0xf]
      %v584 = vld [vmem:[%s2 + $0x20] sm:$0xf]
      %v585 = vld [vmem:[%s2 + $0x24] sm:$0xf]
      %v586 = vld [vmem:[%s2 + $0x28] sm:$0xf]
      %v587 = vld [vmem:[%s2 + $0x2c] sm:$0xf]
      %v588 = vld [vmem:[%s2 + $0x30] sm:$0xf]
      %v589 = vld [vmem:[%s2 + $0x34] sm:$0xf]
      %v590 = vld [vmem:[%s2 + $0x38] sm:$0xf]
      %v591 = vld [vmem:[%s2 + $0x3c] sm:$0xf]
      %v592 = vld [vmem:[%s2 + $0x40] sm:$0xf]
      %v593 = vld [vmem:[%s2 + $0x44] sm:$0xf]
      %v594 = vld [vmem:[%s2 + $0x48] sm:$0xf]
      %v595 = vld [vmem:[%s2 + $0x4c] sm:$0xf]
      %v596 = vld [vmem:[%s2 + $0x50] sm:$0xf]
      %v597 = vld [vmem:[%s2 + $0x54] sm:$0xf]
      %v598 = vld [vmem:[%s2 + $0x58] sm:$0xf]
      %v599 = vld [vmem:[%s2 + $0x5c] sm:$0xf]
      %v600 = vld [vmem:[%s2 + $0x60] sm:$0xf]
      %v601 = vld [vmem:[%s2 + $0x64] sm:$0xf]
      %v602 = vld [vmem:[%s2 + $0x68] sm:$0xf]
      %v603 = vld [vmem:[%s2 + $0x6c] sm:$0xf]
      %v604 = vld [vmem:[%s2 + $0x70] sm:$0xf]
      %v605 = vld [vmem:[%s2 + $0x74] sm:$0xf]
      %v606 = vld [vmem:[%s2 + $0x78] sm:$0xf]
      %v607 = vld [vmem:[%s2 + $0x7c] sm:$0xf]
      %v608 = vld [vmem:[%s2 + $0x80] sm:$0xf]
      %v609 = vld [vmem:[%s2 + $0x84] sm:$0xf]
      %v610 = vld [vmem:[%s2 + $0x88] sm:$0xf]
      %v611 = vld [vmem:[%s2 + $0x8c] sm:$0xf]
      %v612 = vld [vmem:[%s2 + $0x90] sm:$0xf]
      %v613 = vld [vmem:[%s2 + $0x94] sm:$0xf]
      %v614 = vld [vmem:[%s2 + $0x98] sm:$0xf]
      %v615 = vld [vmem:[%s2 + $0x9c] sm:$0xf]
      %v616 = vld [vmem:[%s2 + $0xa0] sm:$0xf]
      %v617 = vld [vmem:[%s2 + $0xa4] sm:$0xf]
      %v618 = vld [vmem:[%s2 + $0xa8] sm:$0xf]
      %v619 = vld [vmem:[%s2 + $0xac] sm:$0xf]
      %v620 = vld [vmem:[%s2 + $0xb0] sm:$0xf]
      %v621 = vld [vmem:[%s2 + $0xb4] sm:$0xf]
      %v622 = vld [vmem:[%s2 + $0xb8] sm:$0xf]
      %v623 = vld [vmem:[%s2 + $0xbc] sm:$0xf]
      %v624 = vld [vmem:[%s2 + $0xc0] sm:$0xf]
      %v625 = vld [vmem:[%s2 + $0xc4] sm:$0xf]
      %v626 = vld [vmem:[%s2 + $0xc8] sm:$0xf]
      %v627 = vld [vmem:[%s2 + $0xcc] sm:$0xf]
      %v628 = vld [vmem:[%s2 + $0xd0] sm:$0xf]
      %v629 = vld [vmem:[%s2 + $0xd4] sm:$0xf]
      %v630 = vld [vmem:[%s2 + $0xd8] sm:$0xf]
      %v631 = vld [vmem:[%s2 + $0xdc] sm:$0xf]
      %v632 = vld [vmem:[%s2 + $0xe0] sm:$0xf]
      %v633 = vld [vmem:[%s2 + $0xe4] sm:$0xf]
      %v634 = vld [vmem:[%s2 + $0xe8] sm:$0xf]
      %v635 = vld [vmem:[%s2 + $0xec] sm:$0xf]
      %v636 = vld [vmem:[%s2 + $0xf0] sm:$0xf]
      %v637 = vld [vmem:[%s2 + $0xf4] sm:$0xf]
      %v638 = vld [vmem:[%s2 + $0xf8] sm:$0xf]
      %v639 = vld [vmem:[%s2 + $0xfc] sm:$0xf]
      %v640 = vld [vmem:[%s537] sm:$0xf]
      %v641 = vld [vmem:[%s537 + $0x4] sm:$0xf]
      %v642 = vld [vmem:[%s537 + $0x8] sm:$0xf]
      %v643 = vld [vmem:[%s537 + $0xc] sm:$0xf]
      %v644 = vld [vmem:[%s537 + $0x10] sm:$0xf]
      %v645 = vld [vmem:[%s537 + $0x14] sm:$0xf]
      %v646 = vld [vmem:[%s537 + $0x18] sm:$0xf]
      %v647 = vld [vmem:[%s537 + $0x1c] sm:$0xf]
      %v648 = vld [vmem:[%s537 + $0x20] sm:$0xf]
      %v649 = vld [vmem:[%s537 + $0x24] sm:$0xf]
      %v650 = vld [vmem:[%s4] sm:$0xf]
      %v651 = vld [vmem:[%s4 + $0x4] sm:$0xf]
      %v652 = vld [vmem:[%s4 + $0x8] sm:$0xf]
      %v653 = vld [vmem:[%s4 + $0xc] sm:$0xf]
      %v654 = vld [vmem:[%s4 + $0x10] sm:$0xf]
      %v655 = vld [vmem:[%s4 + $0x14] sm:$0xf]
      %v656 = vld [vmem:[%s4 + $0x18] sm:$0xf]
      %v657 = vld [vmem:[%s4 + $0x1c] sm:$0xf]
      %v658 = vld [vmem:[%s4 + $0x20] sm:$0xf]
      %v659 = vld [vmem:[%s4 + $0x24] sm:$0xf]
      %v660 = vld [vmem:[%s4 + $0x28] sm:$0xf]
      %v661 = vld [vmem:[%s4 + $0x2c] sm:$0xf]
      %v662 = vld [vmem:[%s4 + $0x30] sm:$0xf]
      %v663 = vld [vmem:[%s4 + $0x34] sm:$0xf]
      %v664 = vld [vmem:[%s4 + $0x38] sm:$0xf]
      %v665 = vld [vmem:[%s4 + $0x3c] sm:$0xf]
      %v676 = vunpack.c.l.b16 %v640
      %v677 = vunpack.c.l.b16 %v641
      %v678 = vunpack.c.l.b16 %v642
      %v679 = vunpack.c.l.b16 %v643
      %v680 = vunpack.c.l.b16 %v644
      %v681 = vunpack.c.l.b16 %v645
      %v682 = vunpack.c.l.b16 %v646
      %v683 = vunpack.c.l.b16 %v647
      %v684 = vunpack.c.l.b16 %v648
      %v685 = vunpack.c.l.b16 %v649
      %v686 = vpack.c.b16 %v677, %v676
      %v687 = vpack.c.b16 %v679, %v678
      %v688 = vpack.c.b16 %v681, %v680
      %v689 = vpack.c.b16 %v683, %v682
      %v690 = vpack.c.b16 %v685, %v684
      %v712 = vunpack.c.l.b16 %v650
      %v713 = vunpack.c.l.b16 %v651
      %v714 = vunpack.c.l.b16 %v652
      %v715 = vunpack.c.l.b16 %v653
      %v716 = vunpack.c.l.b16 %v654
      %v717 = vunpack.c.l.b16 %v655
      %v718 = vunpack.c.l.b16 %v656
      %v719 = vunpack.c.l.b16 %v657
      %v720 = vunpack.c.l.b16 %v658
      %v721 = vunpack.c.l.b16 %v659
      %v722 = vunpack.c.l.b16 %v660
      %v723 = vunpack.c.l.b16 %v661
      %v724 = vunpack.c.l.b16 %v662
      %v725 = vunpack.c.l.b16 %v663
      %v726 = vunpack.c.l.b16 %v664
      %v727 = vunpack.c.l.b16 %v665
      %v728 = vpack.c.b16 %v713, %v712
      %v729 = vpack.c.b16 %v715, %v714
      %v730 = vpack.c.b16 %v717, %v716
      %v731 = vpack.c.b16 %v719, %v718
      %v732 = vpack.c.b16 %v721, %v720
      %v733 = vpack.c.b16 %v723, %v722
      %v734 = vpack.c.b16 %v725, %v724
      %v735 = vpack.c.b16 %v727, %v726
      %744 = vmatprep.subr.bf16.mxu0 0
      %745 = vmatpush1.bf16.msra.mxu0 %v728
      %746 = vmatprep.subr.bf16.mxu0 0
      %747 = vmatpush1.bf16.msra.mxu0 %v729
      %748 = vmatprep.subr.bf16.mxu0 0
      %749 = vmatpush1.bf16.msra.mxu0 %v730
      %750 = vmatprep.subr.bf16.mxu0 0
      %751 = vmatpush1.bf16.msra.mxu0 %v731
      %752 = vmatprep.subr.bf16.mxu0 0
      %753 = vmatpush1.bf16.msra.mxu0 %v732
      %754 = vmatprep.subr.bf16.mxu0 0
      %755 = vmatpush1.bf16.msra.mxu0 %v733
      %756 = vmatprep.subr.bf16.mxu0 0
      %757 = vmatpush1.bf16.msra.mxu0 %v734
      %758 = vmatprep.subr.bf16.mxu0 0
      %759 = vmatpush1.bf16.msra.mxu0 %v735
      %760 = vmatprep.subr.bf16.mxu0 0
      %761 = vmatpush1.bf16.msra.mxu0 0
      %762 = vmatprep.subr.bf16.mxu0 0
      %763 = vmatpush1.bf16.msra.mxu0 0
      %764 = vmatprep.subr.bf16.mxu0 0
      %765 = vmatpush1.bf16.msra.mxu0 0
      %766 = vmatprep.subr.bf16.mxu0 0
      %767 = vmatpush1.bf16.msra.mxu0 0
      %768 = vmatprep.subr.bf16.mxu0 0
      %769 = vmatpush1.bf16.msra.mxu0 0
      %770 = vmatprep.subr.bf16.mxu0 0
      %771 = vmatpush1.bf16.msra.mxu0 0
      %772 = vmatprep.subr.bf16.mxu0 0
      %773 = vmatpush1.bf16.msra.mxu0 0
      %774 = vmatprep.subr.bf16.mxu0 0
      %775 = vmatpush1.bf16.msra.mxu0 0
      %776 = vmatprep.mubr.bf16.mxu0 0
      %777 = vmatmul.mubr.bf16.gmra.mrb[0].mxu0 %v686
      %v778 = vpop.f32.mrb[0].mxu0
      %v779 = vadd.f32 0.0, %v778
      %v780 = vpop.f32.mrb[0].mxu0
      %v781 = vpop.f32.mrb[0].mxu0
      %v782 = vadd.f32 0.0, %v781
      %v783 = vpop.f32.mrb[0].mxu0
      %784 = vmatprep.mubr.bf16.mxu0 0
      %785 = vmatmul.mubr.bf16.gmra.mrb[0].mxu0 %v687
      %v786 = vpop.f32.mrb[0].mxu0
      %v787 = vadd.f32 0.0, %v786
      %v788 = vpop.f32.mrb[0].mxu0
      %v789 = vpop.f32.mrb[0].mxu0
      %v790 = vadd.f32 0.0, %v789
      %v791 = vpop.f32.mrb[0].mxu0
      %792 = vmatprep.mubr.bf16.mxu0 0
      %793 = vmatmul.mubr.bf16.gmra.mrb[0].mxu0 %v688
      %v794 = vpop.f32.mrb[0].mxu0
      %v795 = vadd.f32 0.0, %v794
      %v796 = vpop.f32.mrb[0].mxu0
      %v797 = vpop.f32.mrb[0].mxu0
      %v798 = vadd.f32 0.0, %v797
      %v799 = vpop.f32.mrb[0].mxu0
      %800 = vmatprep.mubr.bf16.mxu0 0
      %801 = vmatmul.mubr.bf16.gmra.mrb[0].mxu0 %v689
      %v802 = vpop.f32.mrb[0].mxu0
      %v803 = vadd.f32 0.0, %v802
      %v804 = vpop.f32.mrb[0].mxu0
      %v805 = vpop.f32.mrb[0].mxu0
      %v806 = vadd.f32 0.0, %v805
      %v807 = vpop.f32.mrb[0].mxu0
      %808 = vmatprep.mubr.bf16.mxu0 0
      %809 = vmatmul.mubr.bf16.gmra.mrb[0].mxu0 %v690
      %v810 = vpop.f32.mrb[0].mxu0
      %v811 = vadd.f32 0.0, %v810
      %v812 = vpop.f32.mrb[0].mxu0
      %v813 = vpop.f32.mrb[0].mxu0
      %v814 = vadd.f32 0.0, %v813
      %v815 = vpop.f32.mrb[0].mxu0
      %816 = vdwg.mxu0
      %v837 = vunpack.c.l.b16 %v556
      %v838 = vunpack.c.h.b16 %v556
      %v839 = vunpack.c.l.b16 %v557
      %v840 = vunpack.c.h.b16 %v557
      %v841 = vunpack.c.l.b16 %v558
      %v842 = vunpack.c.h.b16 %v558
      %v843 = vunpack.c.l.b16 %v559
      %v844 = vunpack.c.h.b16 %v559
      %v845 = vunpack.c.l.b16 %v560
      %v846 = vunpack.c.h.b16 %v560
      %v847 = vunpack.c.l.b16 %v561
      %v848 = vunpack.c.h.b16 %v561
      %v849 = vunpack.c.l.b16 %v562
      %v850 = vunpack.c.h.b16 %v562
      %v851 = vunpack.c.l.b16 %v563
      %v852 = vunpack.c.h.b16 %v563
      %v853 = vunpack.c.l.b16 %v564
      %v854 = vunpack.c.h.b16 %v564
      %v855 = vunpack.c.l.b16 %v565
      %v856 = vunpack.c.h.b16 %v565
      %v857 = vunpack.c.l.b16 %v566
      %v858 = vunpack.c.h.b16 %v566
      %v859 = vunpack.c.l.b16 %v567
      %v860 = vunpack.c.h.b16 %v567
      %v861 = vunpack.c.l.b16 %v568
      %v862 = vunpack.c.h.b16 %v568
      %v863 = vunpack.c.l.b16 %v569
      %v864 = vunpack.c.h.b16 %v569
      %v865 = vunpack.c.l.b16 %v570
      %v866 = vunpack.c.h.b16 %v570
      %v867 = vunpack.c.l.b16 %v571
      %v868 = vunpack.c.h.b16 %v571
      %v869 = vunpack.c.l.b16 %v572
      %v870 = vunpack.c.h.b16 %v572
      %v871 = vunpack.c.l.b16 %v573
      %v872 = vunpack.c.h.b16 %v573
      %v873 = vunpack.c.l.b16 %v574
      %v874 = vunpack.c.h.b16 %v574
      %v875 = vunpack.c.l.b16 %v575
      %v876 = vunpack.c.h.b16 %v575
      %v877 = vpack.c.b16 %v841, %v837
      %v878 = vpack.c.b16 %v842, %v838
      %v879 = vpack.c.b16 %v843, %v839
      %v880 = vpack.c.b16 %v844, %v840
      %v881 = vpack.c.b16 %v849, %v845
      %v882 = vpack.c.b16 %v850, %v846
      %v883 = vpack.c.b16 %v851, %v847
      %v884 = vpack.c.b16 %v852, %v848
      %v885 = vpack.c.b16 %v857, %v853
      %v886 = vpack.c.b16 %v858, %v854
      %v887 = vpack.c.b16 %v859, %v855
      %v888 = vpack.c.b16 %v860, %v856
      %v889 = vpack.c.b16 %v865, %v861
      %v890 = vpack.c.b16 %v866, %v862
      %v891 = vpack.c.b16 %v867, %v863
      %v892 = vpack.c.b16 %v868, %v864
      %v893 = vpack.c.b16 %v873, %v869
      %v894 = vpack.c.b16 %v874, %v870
      %v895 = vpack.c.b16 %v875, %v871
      %v896 = vpack.c.b16 %v876, %v872
      %v981 = vunpack.c.l.b16 %v576
      %v982 = vunpack.c.l.b16 %v577
      %v983 = vunpack.c.l.b16 %v578
      %v984 = vunpack.c.l.b16 %v579
      %v985 = vunpack.c.l.b16 %v580
      %v986 = vunpack.c.l.b16 %v581
      %v987 = vunpack.c.l.b16 %v582
      %v988 = vunpack.c.l.b16 %v583
      %v989 = vunpack.c.l.b16 %v584
      %v990 = vunpack.c.l.b16 %v585
      %v991 = vunpack.c.l.b16 %v586
      %v992 = vunpack.c.l.b16 %v587
      %v993 = vunpack.c.l.b16 %v588
      %v994 = vunpack.c.l.b16 %v589
      %v995 = vunpack.c.l.b16 %v590
      %v996 = vunpack.c.l.b16 %v591
      %v997 = vunpack.c.l.b16 %v592
      %v998 = vunpack.c.l.b16 %v593
      %v999 = vunpack.c.l.b16 %v594
      %v1000 = vunpack.c.l.b16 %v595
      %v1001 = vunpack.c.l.b16 %v596
      %v1002 = vunpack.c.l.b16 %v597
      %v1003 = vunpack.c.l.b16 %v598
      %v1004 = vunpack.c.l.b16 %v599
      %v1005 = vunpack.c.l.b16 %v600
      %v1006 = vunpack.c.l.b16 %v601
      %v1007 = vunpack.c.l.b16 %v602
      %v1008 = vunpack.c.l.b16 %v603
      %v1009 = vunpack.c.l.b16 %v604
      %v1010 = vunpack.c.l.b16 %v605
      %v1011 = vunpack.c.l.b16 %v606
      %v1012 = vunpack.c.l.b16 %v607
      %v1013 = vunpack.c.l.b16 %v608
      %v1014 = vunpack.c.l.b16 %v609
      %v1015 = vunpack.c.l.b16 %v610
      %v1016 = vunpack.c.l.b16 %v611
      %v1017 = vunpack.c.l.b16 %v612
      %v1018 = vunpack.c.l.b16 %v613
      %v1019 = vunpack.c.l.b16 %v614
      %v1020 = vunpack.c.l.b16 %v615
      %v1021 = vunpack.c.l.b16 %v616
      %v1022 = vunpack.c.l.b16 %v617
      %v1023 = vunpack.c.l.b16 %v618
      %v1024 = vunpack.c.l.b16 %v619
      %v1025 = vunpack.c.l.b16 %v620
      %v1026 = vunpack.c.l.b16 %v621
      %v1027 = vunpack.c.l.b16 %v622
      %v1028 = vunpack.c.l.b16 %v623
      %v1029 = vunpack.c.l.b16 %v624
      %v1030 = vunpack.c.l.b16 %v625
      %v1031 = vunpack.c.l.b16 %v626
      %v1032 = vunpack.c.l.b16 %v627
      %v1033 = vunpack.c.l.b16 %v628
      %v1034 = vunpack.c.l.b16 %v629
      %v1035 = vunpack.c.l.b16 %v630
      %v1036 = vunpack.c.l.b16 %v631
      %v1037 = vunpack.c.l.b16 %v632
      %v1038 = vunpack.c.l.b16 %v633
      %v1039 = vunpack.c.l.b16 %v634
      %v1040 = vunpack.c.l.b16 %v635
      %v1041 = vunpack.c.l.b16 %v636
      %v1042 = vunpack.c.l.b16 %v637
      %v1043 = vunpack.c.l.b16 %v638
      %v1044 = vunpack.c.l.b16 %v639
      %v1045 = vpack.c.b16 %v982, %v981
      %v1046 = vpack.c.b16 %v984, %v983
      %v1047 = vpack.c.b16 %v986, %v985
      %v1048 = vpack.c.b16 %v988, %v987
      %v1049 = vpack.c.b16 %v990, %v989
      %v1050 = vpack.c.b16 %v992, %v991
      %v1051 = vpack.c.b16 %v994, %v993
      %v1052 = vpack.c.b16 %v996, %v995
      %v1053 = vpack.c.b16 %v998, %v997
      %v1054 = vpack.c.b16 %v1000, %v999
      %v1055 = vpack.c.b16 %v1002, %v1001
      %v1056 = vpack.c.b16 %v1004, %v1003
      %v1057 = vpack.c.b16 %v1006, %v1005
      %v1058 = vpack.c.b16 %v1008, %v1007
      %v1059 = vpack.c.b16 %v1010, %v1009
      %v1060 = vpack.c.b16 %v1012, %v1011
      %v1061 = vpack.c.b16 %v1014, %v1013
      %v1062 = vpack.c.b16 %v1016, %v1015
      %v1063 = vpack.c.b16 %v1018, %v1017
      %v1064 = vpack.c.b16 %v1020, %v1019
      %v1065 = vpack.c.b16 %v1022, %v1021
      %v1066 = vpack.c.b16 %v1024, %v1023
      %v1067 = vpack.c.b16 %v1026, %v1025
      %v1068 = vpack.c.b16 %v1028, %v1027
      %v1069 = vpack.c.b16 %v1030, %v1029
      %v1070 = vpack.c.b16 %v1032, %v1031
      %v1071 = vpack.c.b16 %v1034, %v1033
      %v1072 = vpack.c.b16 %v1036, %v1035
      %v1073 = vpack.c.b16 %v1038, %v1037
      %v1074 = vpack.c.b16 %v1040, %v1039
      %v1075 = vpack.c.b16 %v1042, %v1041
      %v1076 = vpack.c.b16 %v1044, %v1043
      %1109 = vmatprep.subr.bf16.mxu0 0
      %1110 = vmatpush1.bf16.msra.mxu0 %v1045
      %1111 = vmatprep.subr.bf16.mxu0 0
      %1112 = vmatpush1.bf16.msra.mxu0 %v1046
      %1113 = vmatprep.subr.bf16.mxu0 0
      %1114 = vmatpush1.bf16.msra.mxu0 %v1047
      %1115 = vmatprep.subr.bf16.mxu0 0
      %1116 = vmatpush1.bf16.msra.mxu0 %v1048
      %1117 = vmatprep.subr.bf16.mxu0 0
      %1118 = vmatpush1.bf16.msra.mxu0 %v1049
      %1119 = vmatprep.subr.bf16.mxu0 0
      %1120 = vmatpush1.bf16.msra.mxu0 %v1050
      %1121 = vmatprep.subr.bf16.mxu0 0
      %1122 = vmatpush1.bf16.msra.mxu0 %v1051
      %1123 = vmatprep.subr.bf16.mxu0 0
      %1124 = vmatpush1.bf16.msra.mxu0 %v1052
      %1125 = vmatprep.subr.bf16.mxu0 0
      %1126 = vmatpush1.bf16.msra.mxu0 %v1053
      %1127 = vmatprep.subr.bf16.mxu0 0
      %1128 = vmatpush1.bf16.msra.mxu0 %v1054
      %1129 = vmatprep.subr.bf16.mxu0 0
      %1130 = vmatpush1.bf16.msra.mxu0 %v1055
      %1131 = vmatprep.subr.bf16.mxu0 0
      %1132 = vmatpush1.bf16.msra.mxu0 %v1056
      %1133 = vmatprep.subr.bf16.mxu0 0
      %1134 = vmatpush1.bf16.msra.mxu0 %v1057
      %1135 = vmatprep.subr.bf16.mxu0 0
      %1136 = vmatpush1.bf16.msra.mxu0 %v1058
      %1137 = vmatprep.subr.bf16.mxu0 0
      %1138 = vmatpush1.bf16.msra.mxu0 %v1059
      %1139 = vmatprep.subr.bf16.mxu0 0
      %1140 = vmatpush1.bf16.msra.mxu0 %v1060
      %1141 = vmatprep.mubr.bf16.mxu0 %v878
      %1142 = vmatmul.mubr.bf16.gmra.mrb[0].mxu0 %v877
      %v1143 = vpop.f32.mrb[0].mxu0
      %v1144 = vadd.f32 %v779, %v1143
      %v1145 = vpop.f32.mrb[0].mxu0
      %v1146 = vpop.f32.mrb[0].mxu0
      %v1147 = vadd.f32 %v782, %v1146
      %v1148 = vpop.f32.mrb[0].mxu0
      %1149 = vmatprep.mubr.bf16.mxu0 %v882
      %1150 = vmatmul.mubr.bf16.gmra.mrb[0].mxu0 %v881
      %v1151 = vpop.f32.mrb[0].mxu0
      %v1152 = vadd.f32 %v787, %v1151
      %v1153 = vpop.f32.mrb[0].mxu0
      %v1154 = vpop.f32.mrb[0].mxu0
      %v1155 = vadd.f32 %v790, %v1154
      %v1156 = vpop.f32.mrb[0].mxu0
      %1157 = vmatprep.mubr.bf16.mxu0 %v886
      %1158 = vmatmul.mubr.bf16.gmra.mrb[0].mxu0 %v885
      %v1159 = vpop.f32.mrb[0].mxu0
      %v1160 = vadd.f32 %v795, %v1159
      %v1161 = vpop.f32.mrb[0].mxu0
      %v1162 = vpop.f32.mrb[0].mxu0
      %v1163 = vadd.f32 %v798, %v1162
      %v1164 = vpop.f32.mrb[0].mxu0
      %1165 = vmatprep.mubr.bf16.mxu0 %v890
      %1166 = vmatmul.mubr.bf16.gmra.mrb[0].mxu0 %v889
      %v1167 = vpop.f32.mrb[0].mxu0
      %v1168 = vadd.f32 %v803, %v1167
      %v1169 = vpop.f32.mrb[0].mxu0
      %v1170 = vpop.f32.mrb[0].mxu0
      %v1171 = vadd.f32 %v806, %v1170
      %v1172 = vpop.f32.mrb[0].mxu0
      %1173 = vmatprep.mubr.bf16.mxu0 %v894
      %1174 = vmatmul.mubr.bf16.gmra.mrb[0].mxu0 %v893
      %v1175 = vpop.f32.mrb[0].mxu0
      %v1176 = vadd.f32 %v811, %v1175
      %v1177 = vpop.f32.mrb[0].mxu0
      %v1178 = vpop.f32.mrb[0].mxu0
      %v1179 = vadd.f32 %v814, %v1178
      %v1180 = vpop.f32.mrb[0].mxu0
      %1181 = vdwg.mxu0
      %1182 = vmatprep.subr.bf16.mxu0 0
      %1183 = vmatpush1.bf16.msra.mxu0 %v1061
      %1184 = vmatprep.subr.bf16.mxu0 0
      %1185 = vmatpush1.bf16.msra.mxu0 %v1062
      %1186 = vmatprep.subr.bf16.mxu0 0
      %1187 = vmatpush1.bf16.msra.mxu0 %v1063
      %1188 = vmatprep.subr.bf16.mxu0 0
      %1189 = vmatpush1.bf16.msra.mxu0 %v1064
      %1190 = vmatprep.subr.bf16.mxu0 0
      %1191 = vmatpush1.bf16.msra.mxu0 %v1065
      %1192 = vmatprep.subr.bf16.mxu0 0
      %1193 = vmatpush1.bf16.msra.mxu0 %v1066
      %1194 = vmatprep.subr.bf16.mxu0 0
      %1195 = vmatpush1.bf16.msra.mxu0 %v1067
      %1196 = vmatprep.subr.bf16.mxu0 0
      %1197 = vmatpush1.bf16.msra.mxu0 %v1068
      %1198 = vmatprep.subr.bf16.mxu0 0
      %1199 = vmatpush1.bf16.msra.mxu0 %v1069
      %1200 = vmatprep.subr.bf16.mxu0 0
      %1201 = vmatpush1.bf16.msra.mxu0 %v1070
      %1202 = vmatprep.subr.bf16.mxu0 0
      %1203 = vmatpush1.bf16.msra.mxu0 %v1071
      %1204 = vmatprep.subr.bf16.mxu0 0
      %1205 = vmatpush1.bf16.msra.mxu0 %v1072
      %1206 = vmatprep.subr.bf16.mxu0 0
      %1207 = vmatpush1.bf16.msra.mxu0 %v1073
      %1208 = vmatprep.subr.bf16.mxu0 0
      %1209 = vmatpush1.bf16.msra.mxu0 %v1074
      %1210 = vmatprep.subr.bf16.mxu0 0
      %1211 = vmatpush1.bf16.msra.mxu0 %v1075
      %1212 = vmatprep.subr.bf16.mxu0 0
      %1213 = vmatpush1.bf16.msra.mxu0 %v1076
      %1214 = vmatprep.mubr.bf16.mxu0 %v880
      %1215 = vmatmul.mubr.bf16.gmra.mrb[0].mxu0 %v879
      %v1216 = vpop.f32.mrb[0].mxu0
      %v1217 = vadd.f32 %v1144, %v1216
      %v1218 = vpop.f32.mrb[0].mxu0
      %v1219 = vpop.f32.mrb[0].mxu0
      %v1220 = vadd.f32 %v1147, %v1219
      %v1221 = vpop.f32.mrb[0].mxu0
      %1222 = vmatprep.mubr.bf16.mxu0 %v884
      %1223 = vmatmul.mubr.bf16.gmra.mrb[0].mxu0 %v883
      %v1224 = vpop.f32.mrb[0].mxu0
      %v1225 = vadd.f32 %v1152, %v1224
      %v1226 = vpop.f32.mrb[0].mxu0
      %v1227 = vpop.f32.mrb[0].mxu0
      %v1228 = vadd.f32 %v1155, %v1227
      %v1229 = vpop.f32.mrb[0].mxu0
      %1230 = vmatprep.mubr.bf16.mxu0 %v888
      %1231 = vmatmul.mubr.bf16.gmra.mrb[0].mxu0 %v887
      %v1232 = vpop.f32.mrb[0].mxu0
      %v1233 = vadd.f32 %v1160, %v1232
      %v1234 = vpop.f32.mrb[0].mxu0
      %v1235 = vpop.f32.mrb[0].mxu0
      %v1236 = vadd.f32 %v1163, %v1235
      %v1237 = vpop.f32.mrb[0].mxu0
      %1238 = vmatprep.mubr.bf16.mxu0 %v892
      %1239 = vmatmul.mubr.bf16.gmra.mrb[0].mxu0 %v891
      %v1240 = vpop.f32.mrb[0].mxu0
      %v1241 = vadd.f32 %v1168, %v1240
      %v1242 = vpop.f32.mrb[0].mxu0
      %v1243 = vpop.f32.mrb[0].mxu0
      %v1244 = vadd.f32 %v1171, %v1243
      %v1245 = vpop.f32.mrb[0].mxu0
      %1246 = vmatprep.mubr.bf16.mxu0 %v896
      %1247 = vmatmul.mubr.bf16.gmra.mrb[0].mxu0 %v895
      %v1248 = vpop.f32.mrb[0].mxu0
      %v1249 = vadd.f32 %v1176, %v1248
      %v1250 = vpop.f32.mrb[0].mxu0
      %v1251 = vpop.f32.mrb[0].mxu0
      %v1252 = vadd.f32 %v1179, %v1251
      %v1253 = vpop.f32.mrb[0].mxu0
      %1254 = vdwg.mxu0
      %v1255 = vpack.c.bf16 %v1220, %v1217
      %v1256 = vpack.c.bf16 %v1228, %v1225
      %v1257 = vpack.c.bf16 %v1236, %v1233
      %v1258 = vpack.c.bf16 %v1244, %v1241
      %v1259 = vpack.c.bf16 %v1252, %v1249
      %v1260 = vld [vmem:[%s5] sm:$0xf]
      %v1261 = vld [vmem:[%s5 + $0x4] sm:$0xf]
      %v1262 = vld [vmem:[%s5 + $0x8] sm:$0xf]
      %v1263 = vld [vmem:[%s5 + $0xc] sm:$0xf]
      %v1264 = vld [vmem:[%s6] sm:$0x1]
      %v1266 = vlaneseq
      %v1267 = vshrl.u32 %v1266, 7
      %v1268 = vsub.s32 0, %v1267
      %v1269 = vrot.slane %v1264, %v1268
      %v1275 = vunpack.c.l.b16 %v1260
      %v1276 = vunpack.c.l.b16 %v1261
      %v1277 = vunpack.c.l.b16 %v1262
      %v1278 = vunpack.c.l.b16 %v1263
      %v1279 = vpack.c.b16 %v1276, %v1275
      %v1280 = vpack.c.b16 %v1278, %v1277
      %vm1283 = vcmask 261120
      %v1285 = vsel %vm1283, %v1255, 0
      %v1288 = vsel %vm1283, %v1256, 0
      %v1291 = vsel %vm1283, %v1257, 0
      %v1294 = vsel %vm1283, %v1258, 0
      %v1297 = vsel %vm1283, %v1259, 0
      %1299 = vmatprep.subr.bf16.mxu0 0
      %1300 = vmatpush1.bf16.msra.mxu0 %v1279
      %1301 = vmatprep.subr.bf16.mxu0 0
      %1302 = vmatpush1.bf16.msra.mxu0 %v1280
      %1303 = vmatprep.subr.bf16.mxu0 0
      %1304 = vmatpush1.bf16.msra.mxu0 0
      %1305 = vmatprep.subr.bf16.mxu0 0
      %1306 = vmatpush1.bf16.msra.mxu0 0
      %1307 = vmatprep.subr.bf16.mxu0 0
      %1308 = vmatpush1.bf16.msra.mxu0 0
      %1309 = vmatprep.subr.bf16.mxu0 0
      %1310 = vmatpush1.bf16.msra.mxu0 0
      %1311 = vmatprep.subr.bf16.mxu0 0
      %1312 = vmatpush1.bf16.msra.mxu0 0
      %1313 = vmatprep.subr.bf16.mxu0 0
      %1314 = vmatpush1.bf16.msra.mxu0 0
      %1315 = vmatprep.subr.bf16.mxu0 0
      %1316 = vmatpush1.bf16.msra.mxu0 0
      %1317 = vmatprep.subr.bf16.mxu0 0
      %1318 = vmatpush1.bf16.msra.mxu0 0
      %1319 = vmatprep.subr.bf16.mxu0 0
      %1320 = vmatpush1.bf16.msra.mxu0 0
      %1321 = vmatprep.subr.bf16.mxu0 0
      %1322 = vmatpush1.bf16.msra.mxu0 0
      %1323 = vmatprep.subr.bf16.mxu0 0
      %1324 = vmatpush1.bf16.msra.mxu0 0
      %1325 = vmatprep.subr.bf16.mxu0 0
      %1326 = vmatpush1.bf16.msra.mxu0 0
      %1327 = vmatprep.subr.bf16.mxu0 0
      %1328 = vmatpush1.bf16.msra.mxu0 0
      %1329 = vmatprep.subr.bf16.mxu0 0
      %1330 = vmatpush1.bf16.msra.mxu0 0
      %1331 = vmatprep.mubr.bf16.mxu0 0
      %1332 = vmatmul.mubr.bf16.gmra.mrb[0].mxu0 %v1285
      %v1333 = vpop.f32.mrb[0].mxu0
      %v1334 = vadd.f32 %v1269, %v1333
      %v1335 = vpop.f32.mrb[0].mxu0
      %v1336 = vpop.f32.mrb[0].mxu0
      %v1337 = vadd.f32 %v1269, %v1336
      %v1338 = vpop.f32.mrb[0].mxu0
      %1339 = vmatprep.mubr.bf16.mxu0 0
      %1340 = vmatmul.mubr.bf16.gmra.mrb[0].mxu0 %v1288
      %v1341 = vpop.f32.mrb[0].mxu0
      %v1342 = vadd.f32 %v1269, %v1341
      %v1343 = vpop.f32.mrb[0].mxu0
      %v1344 = vpop.f32.mrb[0].mxu0
      %v1345 = vadd.f32 %v1269, %v1344
      %v1346 = vpop.f32.mrb[0].mxu0
      %1347 = vmatprep.mubr.bf16.mxu0 0
      %1348 = vmatmul.mubr.bf16.gmra.mrb[0].mxu0 %v1291
      %v1349 = vpop.f32.mrb[0].mxu0
      %v1350 = vadd.f32 %v1269, %v1349
      %v1351 = vpop.f32.mrb[0].mxu0
      %v1352 = vpop.f32.mrb[0].mxu0
      %v1353 = vadd.f32 %v1269, %v1352
      %v1354 = vpop.f32.mrb[0].mxu0
      %1355 = vmatprep.mubr.bf16.mxu0 0
      %1356 = vmatmul.mubr.bf16.gmra.mrb[0].mxu0 %v1294
      %v1357 = vpop.f32.mrb[0].mxu0
      %v1358 = vadd.f32 %v1269, %v1357
      %v1359 = vpop.f32.mrb[0].mxu0
      %v1360 = vpop.f32.mrb[0].mxu0
      %v1361 = vadd.f32 %v1269, %v1360
      %v1362 = vpop.f32.mrb[0].mxu0
      %1363 = vmatprep.mubr.bf16.mxu0 0
      %1364 = vmatmul.mubr.bf16.gmra.mrb[0].mxu0 %v1297
      %v1365 = vpop.f32.mrb[0].mxu0
      %v1366 = vadd.f32 %v1269, %v1365
      %v1367 = vpop.f32.mrb[0].mxu0
      %v1368 = vpop.f32.mrb[0].mxu0
      %v1369 = vadd.f32 %v1269, %v1368
      %v1370 = vpop.f32.mrb[0].mxu0
      %1371 = vdwg.mxu0
      %v1372 = vadd.f32 %v546, %v1334
      %v1373 = vadd.f32 %v547, %v1337
      %v1374 = vadd.f32 %v548, %v1342
      %v1375 = vadd.f32 %v549, %v1345
      %v1376 = vadd.f32 %v550, %v1350
      %v1377 = vadd.f32 %v551, %v1353
      %v1378 = vadd.f32 %v552, %v1358
      %v1379 = vadd.f32 %v553, %v1361
      %v1380 = vadd.f32 %v554, %v1366
      %v1381 = vadd.f32 %v555, %v1369
      %v1382 = vld [vmem:[%s7] sm:$0x1]
      %v1383 = vld [vmem:[%s8] sm:$0x1]
      %v1384 = vsel %vm1283, %v1372, 0.0
      %1385 = vadd.xlane.f32.xlu0 %v1384
      %v1386 = vpop.xlane.xlu0 %1385
      %v1387 = vsel %vm1283, %v1373, 0.0
      %1388 = vadd.xlane.f32.xlu0 %v1387
      %v1389 = vpop.xlane.xlu0 %1388
      %v1390 = vsel %vm1283, %v1374, 0.0
      %1391 = vadd.xlane.f32.xlu0 %v1390
      %v1392 = vpop.xlane.xlu0 %1391
      %v1393 = vsel %vm1283, %v1375, 0.0
      %1394 = vadd.xlane.f32.xlu0 %v1393
      %v1395 = vpop.xlane.xlu0 %1394
      %v1396 = vsel %vm1283, %v1376, 0.0
      %1397 = vadd.xlane.f32.xlu0 %v1396
      %v1398 = vpop.xlane.xlu0 %1397
      %v1399 = vsel %vm1283, %v1377, 0.0
      %1400 = vadd.xlane.f32.xlu0 %v1399
      %v1401 = vpop.xlane.xlu0 %1400
      %v1402 = vsel %vm1283, %v1378, 0.0
      %1403 = vadd.xlane.f32.xlu0 %v1402
      %v1404 = vpop.xlane.xlu0 %1403
      %v1405 = vsel %vm1283, %v1379, 0.0
      %1406 = vadd.xlane.f32.xlu0 %v1405
      %v1407 = vpop.xlane.xlu0 %1406
      %v1408 = vsel %vm1283, %v1380, 0.0
      %1409 = vadd.xlane.f32.xlu0 %v1408
      %v1410 = vpop.xlane.xlu0 %1409
      %v1411 = vsel %vm1283, %v1381, 0.0
      %1412 = vadd.xlane.f32.xlu0 %v1411
      %v1413 = vpop.xlane.xlu0 %1412
      %v1414 = vrcp.pop 32.0
      %v1415 = vmul.f32 %v1386, %v1414
      %v1416 = vmul.f32 %v1389, %v1414
      %v1417 = vmul.f32 %v1392, %v1414
      %v1418 = vmul.f32 %v1395, %v1414
      %v1419 = vmul.f32 %v1398, %v1414
      %v1420 = vmul.f32 %v1401, %v1414
      %v1421 = vmul.f32 %v1404, %v1414
      %v1422 = vmul.f32 %v1407, %v1414
      %v1423 = vmul.f32 %v1410, %v1414
      %v1424 = vmul.f32 %v1413, %v1414
      %v1425 = vsub.f32 %v1372, %v1415
      %v1426 = vsub.f32 %v1373, %v1416
      %v1427 = vsub.f32 %v1374, %v1417
      %v1428 = vsub.f32 %v1375, %v1418
      %v1429 = vsub.f32 %v1376, %v1419
      %v1430 = vsub.f32 %v1377, %v1420
      %v1431 = vsub.f32 %v1378, %v1421
      %v1432 = vsub.f32 %v1379, %v1422
      %v1433 = vsub.f32 %v1380, %v1423
      %v1434 = vsub.f32 %v1381, %v1424
      %v1435 = vmul.f32 %v1425, %v1425
      %v1436 = vmul.f32 %v1426, %v1426
      %v1437 = vmul.f32 %v1427, %v1427
      %v1438 = vmul.f32 %v1428, %v1428
      %v1439 = vmul.f32 %v1429, %v1429
      %v1440 = vmul.f32 %v1430, %v1430
      %v1441 = vmul.f32 %v1431, %v1431
      %v1442 = vmul.f32 %v1432, %v1432
      %v1443 = vmul.f32 %v1433, %v1433
      %v1444 = vmul.f32 %v1434, %v1434
      %v1445 = vsel %vm1283, %v1435, 0.0
      %1446 = vadd.xlane.f32.xlu0 %v1445
      %v1447 = vpop.xlane.xlu0 %1446
      %v1448 = vsel %vm1283, %v1436, 0.0
      %1449 = vadd.xlane.f32.xlu0 %v1448
      %v1450 = vpop.xlane.xlu0 %1449
      %v1451 = vsel %vm1283, %v1437, 0.0
      %1452 = vadd.xlane.f32.xlu0 %v1451
      %v1453 = vpop.xlane.xlu0 %1452
      %v1454 = vsel %vm1283, %v1438, 0.0
      %1455 = vadd.xlane.f32.xlu0 %v1454
      %v1456 = vpop.xlane.xlu0 %1455
      %v1457 = vsel %vm1283, %v1439, 0.0
      %1458 = vadd.xlane.f32.xlu0 %v1457
      %v1459 = vpop.xlane.xlu0 %1458
      %v1460 = vsel %vm1283, %v1440, 0.0
      %1461 = vadd.xlane.f32.xlu0 %v1460
      %v1462 = vpop.xlane.xlu0 %1461
      %v1463 = vsel %vm1283, %v1441, 0.0
      %1464 = vadd.xlane.f32.xlu0 %v1463
      %v1465 = vpop.xlane.xlu0 %1464
      %v1466 = vsel %vm1283, %v1442, 0.0
      %1467 = vadd.xlane.f32.xlu0 %v1466
      %v1468 = vpop.xlane.xlu0 %1467
      %v1469 = vsel %vm1283, %v1443, 0.0
      %1470 = vadd.xlane.f32.xlu0 %v1469
      %v1471 = vpop.xlane.xlu0 %1470
      %v1472 = vsel %vm1283, %v1444, 0.0
      %1473 = vadd.xlane.f32.xlu0 %v1472
      %v1474 = vpop.xlane.xlu0 %1473
      %v1475 = vmul.f32 %v1447, %v1414
      %v1476 = vmul.f32 %v1450, %v1414
      %v1477 = vmul.f32 %v1453, %v1414
      %v1478 = vmul.f32 %v1456, %v1414
      %v1479 = vmul.f32 %v1459, %v1414
      %v1480 = vmul.f32 %v1462, %v1414
      %v1481 = vmul.f32 %v1465, %v1414
      %v1482 = vmul.f32 %v1468, %v1414
      %v1483 = vmul.f32 %v1471, %v1414
      %v1484 = vmul.f32 %v1474, %v1414
      %v1485 = vadd.f32 %v1475, 1e-05
      %v1486 = vadd.f32 %v1476, 1e-05
      %v1487 = vadd.f32 %v1477, 1e-05
      %v1488 = vadd.f32 %v1478, 1e-05
      %v1489 = vadd.f32 %v1479, 1e-05
      %v1490 = vadd.f32 %v1480, 1e-05
      %v1491 = vadd.f32 %v1481, 1e-05
      %v1492 = vadd.f32 %v1482, 1e-05
      %v1493 = vadd.f32 %v1483, 1e-05
      %v1494 = vadd.f32 %v1484, 1e-05
      %v1495 = vrsqrt.pop %v1485
      %v1496 = vrsqrt.pop %v1486
      %v1497 = vrsqrt.pop %v1487
      %v1498 = vrsqrt.pop %v1488
      %v1499 = vrsqrt.pop %v1489
      %v1500 = vrsqrt.pop %v1490
      %v1501 = vrsqrt.pop %v1491
      %v1502 = vrsqrt.pop %v1492
      %v1503 = vrsqrt.pop %v1493
      %v1504 = vrsqrt.pop %v1494
      %v1505 = vmul.f32 %v1425, %v1495
      %v1506 = vmul.f32 %v1426, %v1496
      %v1507 = vmul.f32 %v1427, %v1497
      %v1508 = vmul.f32 %v1428, %v1498
      %v1509 = vmul.f32 %v1429, %v1499
      %v1510 = vmul.f32 %v1430, %v1500
      %v1511 = vmul.f32 %v1431, %v1501
      %v1512 = vmul.f32 %v1432, %v1502
      %v1513 = vmul.f32 %v1433, %v1503
      %v1514 = vmul.f32 %v1434, %v1504
      %v1516 = vlaneseq
      %v1517 = vshrl.u32 %v1516, 7
      %v1518 = vsub.s32 0, %v1517
      %v1519 = vrot.slane %v1382, %v1518
      %v1521 = vmul.f32 %v1505, %v1519
      %v1522 = vmul.f32 %v1506, %v1519
      %v1523 = vmul.f32 %v1507, %v1519
      %v1524 = vmul.f32 %v1508, %v1519
      %v1525 = vmul.f32 %v1509, %v1519
      %v1526 = vmul.f32 %v1510, %v1519
      %v1527 = vmul.f32 %v1511, %v1519
      %v1528 = vmul.f32 %v1512, %v1519
      %v1529 = vmul.f32 %v1513, %v1519
      %v1530 = vmul.f32 %v1514, %v1519
      %v1532 = vlaneseq
      %v1533 = vshrl.u32 %v1532, 7
      %v1534 = vsub.s32 0, %v1533
      %v1535 = vrot.slane %v1383, %v1534
      %v1537 = vadd.f32 %v1521, %v1535
      %v1538 = vadd.f32 %v1522, %v1535
      %v1539 = vadd.f32 %v1523, %v1535
      %v1540 = vadd.f32 %v1524, %v1535
      %v1541 = vadd.f32 %v1525, %v1535
      %v1542 = vadd.f32 %v1526, %v1535
      %v1543 = vadd.f32 %v1527, %v1535
      %v1544 = vadd.f32 %v1528, %v1535
      %v1545 = vadd.f32 %v1529, %v1535
      %v1546 = vadd.f32 %v1530, %v1535
      %v1547 = vpack.c.bf16 %v1538, %v1537
      %v1548 = vpack.c.bf16 %v1540, %v1539
      %v1549 = vpack.c.bf16 %v1542, %v1541
      %v1550 = vpack.c.bf16 %v1544, %v1543
      %v1551 = vpack.c.bf16 %v1546, %v1545
      %v1552 = vld [vmem:[%s9] sm:$0xf]
      %v1553 = vld [vmem:[%s9 + $0x4] sm:$0xf]
      %v1554 = vld [vmem:[%s9 + $0x8] sm:$0xf]
      %v1555 = vld [vmem:[%s9 + $0xc] sm:$0xf]
      %v1556 = vld [vmem:[%s10] sm:$0x1]
      %v1558 = vlaneseq
      %v1559 = vshrl.u32 %v1558, 7
      %v1560 = vsub.s32 0, %v1559
      %v1561 = vrot.slane %v1556, %v1560
      %v1567 = vunpack.c.l.b16 %v1552
      %v1568 = vunpack.c.l.b16 %v1553
      %v1569 = vunpack.c.l.b16 %v1554
      %v1570 = vunpack.c.l.b16 %v1555
      %v1571 = vpack.c.b16 %v1568, %v1567
      %v1572 = vpack.c.b16 %v1570, %v1569
      %v1576 = vsel %vm1283, %v1547, 0
      %v1579 = vsel %vm1283, %v1548, 0
      %v1582 = vsel %vm1283, %v1549, 0
      %v1585 = vsel %vm1283, %v1550, 0
      %v1588 = vsel %vm1283, %v1551, 0
      %1590 = vmatprep.subr.bf16.mxu0 0
      %1591 = vmatpush1.bf16.msra.mxu0 %v1571
      %1592 = vmatprep.subr.bf16.mxu0 0
      %1593 = vmatpush1.bf16.msra.mxu0 %v1572
      %1594 = vmatprep.subr.bf16.mxu0 0
      %1595 = vmatpush1.bf16.msra.mxu0 0
      %1596 = vmatprep.subr.bf16.mxu0 0
      %1597 = vmatpush1.bf16.msra.mxu0 0
      %1598 = vmatprep.subr.bf16.mxu0 0
      %1599 = vmatpush1.bf16.msra.mxu0 0
      %1600 = vmatprep.subr.bf16.mxu0 0
      %1601 = vmatpush1.bf16.msra.mxu0 0
      %1602 = vmatprep.subr.bf16.mxu0 0
      %1603 = vmatpush1.bf16.msra.mxu0 0
      %1604 = vmatprep.subr.bf16.mxu0 0
      %1605 = vmatpush1.bf16.msra.mxu0 0
      %1606 = vmatprep.subr.bf16.mxu0 0
      %1607 = vmatpush1.bf16.msra.mxu0 0
      %1608 = vmatprep.subr.bf16.mxu0 0
      %1609 = vmatpush1.bf16.msra.mxu0 0
      %1610 = vmatprep.subr.bf16.mxu0 0
      %1611 = vmatpush1.bf16.msra.mxu0 0
      %1612 = vmatprep.subr.bf16.mxu0 0
      %1613 = vmatpush1.bf16.msra.mxu0 0
      %1614 = vmatprep.subr.bf16.mxu0 0
      %1615 = vmatpush1.bf16.msra.mxu0 0
      %1616 = vmatprep.subr.bf16.mxu0 0
      %1617 = vmatpush1.bf16.msra.mxu0 0
      %1618 = vmatprep.subr.bf16.mxu0 0
      %1619 = vmatpush1.bf16.msra.mxu0 0
      %1620 = vmatprep.subr.bf16.mxu0 0
      %1621 = vmatpush1.bf16.msra.mxu0 0
      %1622 = vmatprep.mubr.bf16.mxu0 0
      %1623 = vmatmul.mubr.bf16.gmra.mrb[0].mxu0 %v1576
      %v1624 = vpop.f32.mrb[0].mxu0
      %v1625 = vadd.f32 %v1561, %v1624
      %v1626 = vpop.f32.mrb[0].mxu0
      %v1627 = vpop.f32.mrb[0].mxu0
      %v1628 = vadd.f32 %v1561, %v1627
      %v1629 = vpop.f32.mrb[0].mxu0
      %1630 = vmatprep.mubr.bf16.mxu0 0
      %1631 = vmatmul.mubr.bf16.gmra.mrb[0].mxu0 %v1579
      %v1632 = vpop.f32.mrb[0].mxu0
      %v1633 = vadd.f32 %v1561, %v1632
      %v1634 = vpop.f32.mrb[0].mxu0
      %v1635 = vpop.f32.mrb[0].mxu0
      %v1636 = vadd.f32 %v1561, %v1635
      %v1637 = vpop.f32.mrb[0].mxu0
      %1638 = vmatprep.mubr.bf16.mxu0 0
      %1639 = vmatmul.mubr.bf16.gmra.mrb[0].mxu0 %v1582
      %v1640 = vpop.f32.mrb[0].mxu0
      %v1641 = vadd.f32 %v1561, %v1640
      %v1642 = vpop.f32.mrb[0].mxu0
      %v1643 = vpop.f32.mrb[0].mxu0
      %v1644 = vadd.f32 %v1561, %v1643
      %v1645 = vpop.f32.mrb[0].mxu0
      %1646 = vmatprep.mubr.bf16.mxu0 0
      %1647 = vmatmul.mubr.bf16.gmra.mrb[0].mxu0 %v1585
      %v1648 = vpop.f32.mrb[0].mxu0
      %v1649 = vadd.f32 %v1561, %v1648
      %v1650 = vpop.f32.mrb[0].mxu0
      %v1651 = vpop.f32.mrb[0].mxu0
      %v1652 = vadd.f32 %v1561, %v1651
      %v1653 = vpop.f32.mrb[0].mxu0
      %1654 = vmatprep.mubr.bf16.mxu0 0
      %1655 = vmatmul.mubr.bf16.gmra.mrb[0].mxu0 %v1588
      %v1656 = vpop.f32.mrb[0].mxu0
      %v1657 = vadd.f32 %v1561, %v1656
      %v1658 = vpop.f32.mrb[0].mxu0
      %v1659 = vpop.f32.mrb[0].mxu0
      %v1660 = vadd.f32 %v1561, %v1659
      %v1661 = vpop.f32.mrb[0].mxu0
      %1662 = vdwg.mxu0
      %v1663 = vmax.f32 %v1625, 0.0
      %v1664 = vmax.f32 %v1628, 0.0
      %v1665 = vmax.f32 %v1633, 0.0
      %v1666 = vmax.f32 %v1636, 0.0
      %v1667 = vmax.f32 %v1641, 0.0
      %v1668 = vmax.f32 %v1644, 0.0
      %v1669 = vmax.f32 %v1649, 0.0
      %v1670 = vmax.f32 %v1652, 0.0
      %v1671 = vmax.f32 %v1657, 0.0
      %v1672 = vmax.f32 %v1660, 0.0
      %v1673 = vpack.c.bf16 %v1664, %v1663
      %v1674 = vpack.c.bf16 %v1666, %v1665
      %v1675 = vpack.c.bf16 %v1668, %v1667
      %v1676 = vpack.c.bf16 %v1670, %v1669
      %v1677 = vpack.c.bf16 %v1672, %v1671
      %v1678 = vld [vmem:[%s11] sm:$0xf]
      %v1679 = vld [vmem:[%s11 + $0x4] sm:$0xf]
      %v1680 = vld [vmem:[%s11 + $0x8] sm:$0xf]
      %v1681 = vld [vmem:[%s11 + $0xc] sm:$0xf]
      %v1682 = vld [vmem:[%s11 + $0x10] sm:$0xf]
      %v1683 = vld [vmem:[%s11 + $0x14] sm:$0xf]
      %v1684 = vld [vmem:[%s11 + $0x18] sm:$0xf]
      %v1685 = vld [vmem:[%s11 + $0x1c] sm:$0xf]
      %v1686 = vld [vmem:[%s12] sm:$0x1]
      %v1688 = vlaneseq
      %v1689 = vshrl.u32 %v1688, 7
      %v1690 = vsub.s32 0, %v1689
      %v1691 = vrot.slane %v1686, %v1690
      %v1701 = vunpack.c.l.b16 %v1678
      %v1702 = vunpack.c.l.b16 %v1679
      %v1703 = vunpack.c.l.b16 %v1680
      %v1704 = vunpack.c.l.b16 %v1681
      %v1705 = vunpack.c.l.b16 %v1682
      %v1706 = vunpack.c.l.b16 %v1683
      %v1707 = vunpack.c.l.b16 %v1684
      %v1708 = vunpack.c.l.b16 %v1685
      %v1709 = vpack.c.b16 %v1702, %v1701
      %v1710 = vpack.c.b16 %v1704, %v1703
      %v1711 = vpack.c.b16 %v1706, %v1705
      %v1712 = vpack.c.b16 %v1708, %v1707
      %vm1717 = vcmask 523264
      %v1719 = vsel %vm1717, %v1673, 0
      %v1722 = vsel %vm1717, %v1674, 0
      %v1725 = vsel %vm1717, %v1675, 0
      %v1728 = vsel %vm1717, %v1676, 0
      %v1731 = vsel %vm1717, %v1677, 0
      %1733 = vmatprep.subr.bf16.mxu0 0
      %1734 = vmatpush1.bf16.msra.mxu0 %v1709
      %1735 = vmatprep.subr.bf16.mxu0 0
      %1736 = vmatpush1.bf16.msra.mxu0 %v1710
      %1737 = vmatprep.subr.bf16.mxu0 0
      %1738 = vmatpush1.bf16.msra.mxu0 %v1711
      %1739 = vmatprep.subr.bf16.mxu0 0
      %1740 = vmatpush1.bf16.msra.mxu0 %v1712
      %1741 = vmatprep.subr.bf16.mxu0 0
      %1742 = vmatpush1.bf16.msra.mxu0 0
      %1743 = vmatprep.subr.bf16.mxu0 0
      %1744 = vmatpush1.bf16.msra.mxu0 0
      %1745 = vmatprep.subr.bf16.mxu0 0
      %1746 = vmatpush1.bf16.msra.mxu0 0
      %1747 = vmatprep.subr.bf16.mxu0 0
      %1748 = vmatpush1.bf16.msra.mxu0 0
      %1749 = vmatprep.subr.bf16.mxu0 0
      %1750 = vmatpush1.bf16.msra.mxu0 0
      %1751 = vmatprep.subr.bf16.mxu0 0
      %1752 = vmatpush1.bf16.msra.mxu0 0
      %1753 = vmatprep.subr.bf16.mxu0 0
      %1754 = vmatpush1.bf16.msra.mxu0 0
      %1755 = vmatprep.subr.bf16.mxu0 0
      %1756 = vmatpush1.bf16.msra.mxu0 0
      %1757 = vmatprep.subr.bf16.mxu0 0
      %1758 = vmatpush1.bf16.msra.mxu0 0
      %1759 = vmatprep.subr.bf16.mxu0 0
      %1760 = vmatpush1.bf16.msra.mxu0 0
      %1761 = vmatprep.subr.bf16.mxu0 0
      %1762 = vmatpush1.bf16.msra.mxu0 0
      %1763 = vmatprep.subr.bf16.mxu0 0
      %1764 = vmatpush1.bf16.msra.mxu0 0
      %1765 = vmatprep.mubr.bf16.mxu0 0
      %1766 = vmatmul.mubr.bf16.gmra.mrb[0].mxu0 %v1719
      %v1767 = vpop.f32.mrb[0].mxu0
      %v1768 = vadd.f32 %v1691, %v1767
      %v1769 = vpop.f32.mrb[0].mxu0
      %v1770 = vpop.f32.mrb[0].mxu0
      %v1771 = vadd.f32 %v1691, %v1770
      %v1772 = vpop.f32.mrb[0].mxu0
      %1773 = vmatprep.mubr.bf16.mxu0 0
      %1774 = vmatmul.mubr.bf16.gmra.mrb[0].mxu0 %v1722
      %v1775 = vpop.f32.mrb[0].mxu0
      %v1776 = vadd.f32 %v1691, %v1775
      %v1777 = vpop.f32.mrb[0].mxu0
      %v1778 = vpop.f32.mrb[0].mxu0
      %v1779 = vadd.f32 %v1691, %v1778
      %v1780 = vpop.f32.mrb[0].mxu0
      %1781 = vmatprep.mubr.bf16.mxu0 0
      %1782 = vmatmul.mubr.bf16.gmra.mrb[0].mxu0 %v1725
      %v1783 = vpop.f32.mrb[0].mxu0
      %v1784 = vadd.f32 %v1691, %v1783
      %v1785 = vpop.f32.mrb[0].mxu0
      %v1786 = vpop.f32.mrb[0].mxu0
      %v1787 = vadd.f32 %v1691, %v1786
      %v1788 = vpop.f32.mrb[0].mxu0
      %1789 = vmatprep.mubr.bf16.mxu0 0
      %1790 = vmatmul.mubr.bf16.gmra.mrb[0].mxu0 %v1728
      %v1791 = vpop.f32.mrb[0].mxu0
      %v1792 = vadd.f32 %v1691, %v1791
      %v1793 = vpop.f32.mrb[0].mxu0
      %v1794 = vpop.f32.mrb[0].mxu0
      %v1795 = vadd.f32 %v1691, %v1794
      %v1796 = vpop.f32.mrb[0].mxu0
      %1797 = vmatprep.mubr.bf16.mxu0 0
      %1798 = vmatmul.mubr.bf16.gmra.mrb[0].mxu0 %v1731
      %v1799 = vpop.f32.mrb[0].mxu0
      %v1800 = vadd.f32 %v1691, %v1799
      %v1801 = vpop.f32.mrb[0].mxu0
      %v1802 = vpop.f32.mrb[0].mxu0
      %v1803 = vadd.f32 %v1691, %v1802
      %v1804 = vpop.f32.mrb[0].mxu0
      %1805 = vdwg.mxu0
      %v1806 = vadd.f32 %v1537, %v1768
      %v1807 = vadd.f32 %v1538, %v1771
      %v1808 = vadd.f32 %v1539, %v1776
      %v1809 = vadd.f32 %v1540, %v1779
      %v1810 = vadd.f32 %v1541, %v1784
      %v1811 = vadd.f32 %v1542, %v1787
      %v1812 = vadd.f32 %v1543, %v1792
      %v1813 = vadd.f32 %v1544, %v1795
      %v1814 = vadd.f32 %v1545, %v1800
      %v1815 = vadd.f32 %v1546, %v1803
      %v1816 = vld [vmem:[%s13] sm:$0x1]
      %v1817 = vld [vmem:[%s14] sm:$0x1]
      %v1818 = vsel %vm1283, %v1806, 0.0
      %1819 = vadd.xlane.f32.xlu0 %v1818
      %v1820 = vpop.xlane.xlu0 %1819
      %v1821 = vsel %vm1283, %v1807, 0.0
      %1822 = vadd.xlane.f32.xlu0 %v1821
      %v1823 = vpop.xlane.xlu0 %1822
      %v1824 = vsel %vm1283, %v1808, 0.0
      %1825 = vadd.xlane.f32.xlu0 %v1824
      %v1826 = vpop.xlane.xlu0 %1825
      %v1827 = vsel %vm1283, %v1809, 0.0
      %1828 = vadd.xlane.f32.xlu0 %v1827
      %v1829 = vpop.xlane.xlu0 %1828
      %v1830 = vsel %vm1283, %v1810, 0.0
      %1831 = vadd.xlane.f32.xlu0 %v1830
      %v1832 = vpop.xlane.xlu0 %1831
      %v1833 = vsel %vm1283, %v1811, 0.0
      %1834 = vadd.xlane.f32.xlu0 %v1833
      %v1835 = vpop.xlane.xlu0 %1834
      %v1836 = vsel %vm1283, %v1812, 0.0
      %1837 = vadd.xlane.f32.xlu0 %v1836
      %v1838 = vpop.xlane.xlu0 %1837
      %v1839 = vsel %vm1283, %v1813, 0.0
      %1840 = vadd.xlane.f32.xlu0 %v1839
      %v1841 = vpop.xlane.xlu0 %1840
      %v1842 = vsel %vm1283, %v1814, 0.0
      %1843 = vadd.xlane.f32.xlu0 %v1842
      %v1844 = vpop.xlane.xlu0 %1843
      %v1845 = vsel %vm1283, %v1815, 0.0
      %1846 = vadd.xlane.f32.xlu0 %v1845
      %v1847 = vpop.xlane.xlu0 %1846
      %v1848 = vmul.f32 %v1820, %v1414
      %v1849 = vmul.f32 %v1823, %v1414
      %v1850 = vmul.f32 %v1826, %v1414
      %v1851 = vmul.f32 %v1829, %v1414
      %v1852 = vmul.f32 %v1832, %v1414
      %v1853 = vmul.f32 %v1835, %v1414
      %v1854 = vmul.f32 %v1838, %v1414
      %v1855 = vmul.f32 %v1841, %v1414
      %v1856 = vmul.f32 %v1844, %v1414
      %v1857 = vmul.f32 %v1847, %v1414
      %v1858 = vsub.f32 %v1806, %v1848
      %v1859 = vsub.f32 %v1807, %v1849
      %v1860 = vsub.f32 %v1808, %v1850
      %v1861 = vsub.f32 %v1809, %v1851
      %v1862 = vsub.f32 %v1810, %v1852
      %v1863 = vsub.f32 %v1811, %v1853
      %v1864 = vsub.f32 %v1812, %v1854
      %v1865 = vsub.f32 %v1813, %v1855
      %v1866 = vsub.f32 %v1814, %v1856
      %v1867 = vsub.f32 %v1815, %v1857
      %v1868 = vmul.f32 %v1858, %v1858
      %v1869 = vmul.f32 %v1859, %v1859
      %v1870 = vmul.f32 %v1860, %v1860
      %v1871 = vmul.f32 %v1861, %v1861
      %v1872 = vmul.f32 %v1862, %v1862
      %v1873 = vmul.f32 %v1863, %v1863
      %v1874 = vmul.f32 %v1864, %v1864
      %v1875 = vmul.f32 %v1865, %v1865
      %v1876 = vmul.f32 %v1866, %v1866
      %v1877 = vmul.f32 %v1867, %v1867
      %v1878 = vsel %vm1283, %v1868, 0.0
      %1879 = vadd.xlane.f32.xlu0 %v1878
      %v1880 = vpop.xlane.xlu0 %1879
      %v1881 = vsel %vm1283, %v1869, 0.0
      %1882 = vadd.xlane.f32.xlu0 %v1881
      %v1883 = vpop.xlane.xlu0 %1882
      %v1884 = vsel %vm1283, %v1870, 0.0
      %1885 = vadd.xlane.f32.xlu0 %v1884
      %v1886 = vpop.xlane.xlu0 %1885
      %v1887 = vsel %vm1283, %v1871, 0.0
      %1888 = vadd.xlane.f32.xlu0 %v1887
      %v1889 = vpop.xlane.xlu0 %1888
      %v1890 = vsel %vm1283, %v1872, 0.0
      %1891 = vadd.xlane.f32.xlu0 %v1890
      %v1892 = vpop.xlane.xlu0 %1891
      %v1893 = vsel %vm1283, %v1873, 0.0
      %1894 = vadd.xlane.f32.xlu0 %v1893
      %v1895 = vpop.xlane.xlu0 %1894
      %v1896 = vsel %vm1283, %v1874, 0.0
      %1897 = vadd.xlane.f32.xlu0 %v1896
      %v1898 = vpop.xlane.xlu0 %1897
      %v1899 = vsel %vm1283, %v1875, 0.0
      %1900 = vadd.xlane.f32.xlu0 %v1899
      %v1901 = vpop.xlane.xlu0 %1900
      %v1902 = vsel %vm1283, %v1876, 0.0
      %1903 = vadd.xlane.f32.xlu0 %v1902
      %v1904 = vpop.xlane.xlu0 %1903
      %v1905 = vsel %vm1283, %v1877, 0.0
      %1906 = vadd.xlane.f32.xlu0 %v1905
      %v1907 = vpop.xlane.xlu0 %1906
      %v1908 = vmul.f32 %v1880, %v1414
      %v1909 = vmul.f32 %v1883, %v1414
      %v1910 = vmul.f32 %v1886, %v1414
      %v1911 = vmul.f32 %v1889, %v1414
      %v1912 = vmul.f32 %v1892, %v1414
      %v1913 = vmul.f32 %v1895, %v1414
      %v1914 = vmul.f32 %v1898, %v1414
      %v1915 = vmul.f32 %v1901, %v1414
      %v1916 = vmul.f32 %v1904, %v1414
      %v1917 = vmul.f32 %v1907, %v1414
      %v1918 = vadd.f32 %v1908, 1e-05
      %v1919 = vadd.f32 %v1909, 1e-05
      %v1920 = vadd.f32 %v1910, 1e-05
      %v1921 = vadd.f32 %v1911, 1e-05
      %v1922 = vadd.f32 %v1912, 1e-05
      %v1923 = vadd.f32 %v1913, 1e-05
      %v1924 = vadd.f32 %v1914, 1e-05
      %v1925 = vadd.f32 %v1915, 1e-05
      %v1926 = vadd.f32 %v1916, 1e-05
      %v1927 = vadd.f32 %v1917, 1e-05
      %v1928 = vrsqrt.pop %v1918
      %v1929 = vrsqrt.pop %v1919
      %v1930 = vrsqrt.pop %v1920
      %v1931 = vrsqrt.pop %v1921
      %v1932 = vrsqrt.pop %v1922
      %v1933 = vrsqrt.pop %v1923
      %v1934 = vrsqrt.pop %v1924
      %v1935 = vrsqrt.pop %v1925
      %v1936 = vrsqrt.pop %v1926
      %v1937 = vrsqrt.pop %v1927
      %v1938 = vmul.f32 %v1858, %v1928
      %v1939 = vmul.f32 %v1859, %v1929
      %v1940 = vmul.f32 %v1860, %v1930
      %v1941 = vmul.f32 %v1861, %v1931
      %v1942 = vmul.f32 %v1862, %v1932
      %v1943 = vmul.f32 %v1863, %v1933
      %v1944 = vmul.f32 %v1864, %v1934
      %v1945 = vmul.f32 %v1865, %v1935
      %v1946 = vmul.f32 %v1866, %v1936
      %v1947 = vmul.f32 %v1867, %v1937
      %v1949 = vlaneseq
      %v1950 = vshrl.u32 %v1949, 7
      %v1951 = vsub.s32 0, %v1950
      %v1952 = vrot.slane %v1816, %v1951
      %v1954 = vmul.f32 %v1938, %v1952
      %v1955 = vmul.f32 %v1939, %v1952
      %v1956 = vmul.f32 %v1940, %v1952
      %v1957 = vmul.f32 %v1941, %v1952
      %v1958 = vmul.f32 %v1942, %v1952
      %v1959 = vmul.f32 %v1943, %v1952
      %v1960 = vmul.f32 %v1944, %v1952
      %v1961 = vmul.f32 %v1945, %v1952
      %v1962 = vmul.f32 %v1946, %v1952
      %v1963 = vmul.f32 %v1947, %v1952
      %v1965 = vlaneseq
      %v1966 = vshrl.u32 %v1965, 7
      %v1967 = vsub.s32 0, %v1966
      %v1968 = vrot.slane %v1817, %v1967
      %v1970 = vadd.f32 %v1954, %v1968
      %v1971 = vadd.f32 %v1955, %v1968
      %v1972 = vadd.f32 %v1956, %v1968
      %v1973 = vadd.f32 %v1957, %v1968
      %v1974 = vadd.f32 %v1958, %v1968
      %v1975 = vadd.f32 %v1959, %v1968
      %v1976 = vadd.f32 %v1960, %v1968
      %v1977 = vadd.f32 %v1961, %v1968
      %v1978 = vadd.f32 %v1962, %v1968
      %v1979 = vadd.f32 %v1963, %v1968
      %1980 = vst.msk [vmem:[%s543] sm:$0xff] %vm1283, %v1970
      %1981 = vst.msk [vmem:[%s543 + $0x8] sm:$0xff] %vm1283, %v1971
      %1982 = vst.msk [vmem:[%s543 + $0x10] sm:$0xff] %vm1283, %v1972
      %1983 = vst.msk [vmem:[%s543 + $0x18] sm:$0xff] %vm1283, %v1973
      %1984 = vst.msk [vmem:[%s543 + $0x20] sm:$0xff] %vm1283, %v1974
      %1985 = vst.msk [vmem:[%s543 + $0x28] sm:$0xff] %vm1283, %v1975
      %1986 = vst.msk [vmem:[%s543 + $0x30] sm:$0xff] %vm1283, %v1976
      %1987 = vst.msk [vmem:[%s543 + $0x38] sm:$0xff] %vm1283, %v1977
      %1988 = vst.msk [vmem:[%s543 + $0x40] sm:$0xff] %vm1283, %v1978
      %1989 = vst.msk [vmem:[%s543 + $0x48] sm:$0xff] %vm1283, %v1979
      %s1990 = smul.u32 10, %s26
      %p1991 = scmp.lt.s32.totalorder %s1990, 19
      %s1992 = scalar_select %p1991, %s1990, 19
      %s1993 = smul.addr %s1992, 8
      %s1994 = scalar_lea.vmem %s15, %s1993
      // Predicated region
      $region81: #{salience_encoder_layer_forward.5} parent=79 // pred_check
        %p1995 = pneg %p374
      $region82: #{salience_encoder_layer_forward.5} parent=79 // pred_check_branch
        %1997 = sbr.rel (%p1995) target = $region84
      $region83: #{salience_encoder_layer_forward.5} parent=79 // pred_region
        %s1998 = smul.u32 10, %s26
      $region84: #{salience_encoder_layer_forward.5} parent=79 // pred_fallthru
        _
    $region80: #{salience_encoder_layer_forward.5} parent=5 // pred_fallthru
      _
    %p1999 = scmp.le.s32.totalorder 2, %s21
    // Predicated region
    $region85: #{salience_encoder_layer_forward.5} parent=5 // pred_check
      %p2000 = pneg %p1999
    $region86: #{salience_encoder_layer_forward.5} parent=5 // pred_check_branch
      %2002 = sbr.rel (%p2000) target = $region88
    $region87: #{salience_encoder_layer_forward.5} parent=5 // pred_region
      %s2003 = ssub.s32 %s21, 2
      // Predicated region
      $region89: #{salience_encoder_layer_forward.5} parent=87 // pred_check
        %p2004 = pneg %p380
      $region90: #{salience_encoder_layer_forward.5} parent=87 // pred_check_branch
        %2006 = sbr.rel (%p2004) target = $region92
      $region91: #{salience_encoder_layer_forward.5} parent=87 // pred_region
        %s2007 = smul.u32 10, %s27
        %p2008 = scmp.lt.s32.totalorder %s2007, 19
        %s2009 = scalar_select %p2008, %s2007, 19
        %s2010 = smul.addr %s2009, 8
        %s2011 = scalar_lea.vmem %s15, %s2010
      $region92: #{salience_encoder_layer_forward.5} parent=87 // pred_fallthru
        _
    $region88: #{salience_encoder_layer_forward.5} parent=5 // pred_fallthru
      _
  $region6: #{salience_encoder_layer_forward.5} parent=0 // loop_footer
    %s25 = sadd.s32 1, %s21
  $region7: #{salience_encoder_layer_forward.5} parent=0 // loop_footer_branch
    %20 = sbr.rel target = $region3
  $region8: #{salience_encoder_layer_forward.5} parent=0 // loop_exit
    _

</llo_original>
